<compile_context>
chip_gen: v6e
topology: v6e:2x2x1
jax: 0.10.0
libtpu: 0.0.40
codegen_flags: <defaults>
</compile_context>

<pallas_src>
import functools

import jax
import jax.numpy as jnp
from jax.experimental import pallas as pl
from jax.experimental.pallas import tpu as pltpu


# --------------------------------------------------------------------------
# Per-generation sizing (VMEM budget, tile targets).
# --------------------------------------------------------------------------
def _tpu_vmem_capacity():
    try:
        info = pltpu.get_tpu_info()
        cap = getattr(info, "vmem_capacity_bytes", None)
        if cap:
            return int(cap)
    except Exception:
        pass
    return 64 * 1024 * 1024  # conservative default (v7x-sized)


_VMEM_CAP = _tpu_vmem_capacity()
_VMEM_LIMIT = min((_VMEM_CAP * 3) // 4, 100 * 1024 * 1024)     # ~48 MiB v7x, ~96 MiB v5e/v6e
_ROW_TILE_TARGET = 1024 if _VMEM_CAP >= 96 * 1024 * 1024 else 256
_K_TARGET = 32                                                  # LSTM time-chunk target


def _row_tile(n, target):
    """Largest row-tile <= target that divides n and keeps (8,·) alignment."""
    t = min(n, target)
    if n % t == 0 and (t % 8 == 0 or t == n):
        return t
    for cand in range(t, 7, -1):
        if n % cand == 0 and cand % 8 == 0:
            return cand
    return n


def _time_chunk(t, target=_K_TARGET):
    """LSTM time-chunk K (amortizes per-grid-step overhead)."""
    k = min(t, target)
    for cand in range(k, 0, -1):
        if t % cand == 0:
            return cand
    return t


# --------------------------------------------------------------------------
# Kernel 1: row-tiled linear (+ optional ReLU).  bf16 in, bf16 out, f32 accumulate.
# --------------------------------------------------------------------------
def _linear_kernel(x_ref, w_ref, b_ref, o_ref, *, relu):
    y = jnp.dot(x_ref[...], w_ref[...], preferred_element_type=jnp.float32) + b_ref[...]
    if relu:
        y = jnp.maximum(y, 0.0)
    o_ref[...] = y.astype(o_ref.dtype)


def pallas_linear(x, w, b, relu=False):
    """x: (N, Din) bf16, w: (Din, Dout) bf16, b: (1, Dout) f32 -> (N, Dout) bf16."""
    N, Din = x.shape
    Dout = w.shape[1]
    tile = _row_tile(N, _ROW_TILE_TARGET)
    return pl.pallas_call(
        functools.partial(_linear_kernel, relu=relu),
        out_shape=jax.ShapeDtypeStruct((N, Dout), jnp.bfloat16),
        grid=(N // tile,),
        in_specs=[pl.BlockSpec((tile, Din), lambda i: (i, 0)),
                  pl.BlockSpec((Din, Dout), lambda i: (0, 0)),
                  pl.BlockSpec((1, Dout), lambda i: (0, 0))],
        out_specs=pl.BlockSpec((tile, Dout), lambda i: (i, 0)),
        compiler_params=pltpu.CompilerParams(
            dimension_semantics=("parallel",),
            vmem_limit_bytes=_VMEM_LIMIT),
    )(x, w, b)


# --------------------------------------------------------------------------
# Kernel 2: fused pair of feedforward layers (feedStart + feedEnd):
#   y_f = LayerNorm(x + W2_f relu(W1_f x + b1_f) + b2_f),  f in {start, end}
# Single grid over row tiles; BOTH stacked parameter sets are resident (constant
# index_map -> DMA'd once total) and both FFNs are computed in one body, so the
# x tile is DMA'd once and weight traffic does not scale with num_row_tiles.
# --------------------------------------------------------------------------
def _ffn_pair_kernel(x_ref, w1_ref, b1_ref, w2_ref, b2_ref, g_ref, be_ref, o_ref):
    xb = x_ref[...]                                          # (tile, D) bf16
    xf = xb.astype(jnp.float32)
    for f in range(2):                                       # static: start / end
        h = jnp.dot(xb, w1_ref[f], preferred_element_type=jnp.float32) + b1_ref[f]
        h = jnp.maximum(h, 0.0)
        y = jnp.dot(h.astype(jnp.bfloat16), w2_ref[f],
                    preferred_element_type=jnp.float32) + b2_ref[f]
        y = y + xf
        mu = jnp.mean(y, axis=-1, keepdims=True)
        var = jnp.mean((y - mu) ** 2, axis=-1, keepdims=True)
        y = (y - mu) * jax.lax.rsqrt(var + 1e-5)
        o_ref[f] = (y * g_ref[f] + be_ref[f]).astype(o_ref.dtype)


def pallas_ffn_pair(p, x2d):
    """x2d: (N, D) bf16; stacked params leading dim 2 -> (start, end) each (N, D) bf16."""
    N, D = x2d.shape
    Dh = p["w1"].shape[-1]
    tile = _row_tile(N, _ROW_TILE_TARGET)
    out = pl.pallas_call(
        _ffn_pair_kernel,
        out_shape=jax.ShapeDtypeStruct((2, N, D), jnp.bfloat16),
        grid=(N // tile,),
        in_specs=[pl.BlockSpec((tile, D), lambda i: (i, 0)),
                  pl.BlockSpec((2, D, Dh), lambda i: (0, 0, 0)),
                  pl.BlockSpec((2, 1, Dh), lambda i: (0, 0, 0)),
                  pl.BlockSpec((2, Dh, D), lambda i: (0, 0, 0)),
                  pl.BlockSpec((2, 1, D), lambda i: (0, 0, 0)),
                  pl.BlockSpec((2, 1, D), lambda i: (0, 0, 0)),
                  pl.BlockSpec((2, 1, D), lambda i: (0, 0, 0))],
        out_specs=pl.BlockSpec((2, tile, D), lambda i: (0, i, 0)),
        compiler_params=pltpu.CompilerParams(
            dimension_semantics=("parallel",),
            vmem_limit_bytes=_VMEM_LIMIT),
    )(x2d, p["w1"], p["b1"], p["w2"], p["b2"], p["gamma"], p["beta"])
    return out[0], out[1]


# --------------------------------------------------------------------------
# Kernel 3: fused bidirectional LSTM layer recurrence, chunked over time.
# Input projections (x @ [W_ih_fwd | W_ih_bwd]^T + biases) are precomputed as one
# matmul producing (T, B, 8H) bf16.  When 4H is lane-tile aligned, the kernel reads
# only the (K,B,4H) half it needs per direction (forward chunks in order, backward
# chunks reversed via index_map) -- no jnp.flip, no in-kernel 8H->4H slicing.
# PyTorch gate order: i, f, g, o.  States live in f32 VMEM scratch.
# --------------------------------------------------------------------------
def _bilstm_kernel(xpf_ref, xpb_ref, whf_ref, whb_ref, yf_ref, yb_ref,
                   hf, cf, hb, cb, *, K, H, split):
    @pl.when(pl.program_id(0) == 0)
    def _():
        hf[...] = jnp.zeros_like(hf)
        cf[...] = jnp.zeros_like(cf)
        hb[...] = jnp.zeros_like(hb)
        cb[...] = jnp.zeros_like(cb)

    whf = whf_ref[...]                      # (H, 4H) bf16
    whb = whb_ref[...]                      # (H, 4H) bf16

    # TODO(synk): with H not a multiple of 128 the gate slices / (B,H) stores are
    # partially masked; pad the hidden size in the model config for lane-dense stores.
    def cell(gates_in, h_prev, c_prev, whh):
        gates = gates_in.astype(jnp.float32) + jnp.dot(
            h_prev.astype(jnp.bfloat16), whh, preferred_element_type=jnp.float32)
        i = jax.nn.sigmoid(gates[:, 0 * H:1 * H])
        f = jax.nn.sigmoid(gates[:, 1 * H:2 * H])
        g = jnp.tanh(gates[:, 2 * H:3 * H])
        o = jax.nn.sigmoid(gates[:, 3 * H:4 * H])
        c_new = f * c_prev + i * g
        h_new = o * jnp.tanh(c_new)
        return h_new, c_new

    def step(j, carry):
        # forward stream: local row j of the forward-ordered chunk.
        row_f = xpf_ref[j]                                   # (B, 4H) or (B, 8H)
        # backward stream: mirrored local row of the reverse-ordered chunk.
        jb = K - 1 - j
        row_b = xpb_ref[jb]
        if not split:                                        # fallback: slice 8H block
            row_f = row_f[:, :4 * H]
            row_b = row_b[:, 4 * H:]

        h_f, c_f = cell(row_f, hf[...], cf[...], whf)
        hf[...] = h_f
        cf[...] = c_f
        yf_ref[j] = h_f.astype(yf_ref.dtype)

        h_b, c_b = cell(row_b, hb[...], cb[...], whb)
        hb[...] = h_b
        cb[...] = c_b
        yb_ref[jb] = h_b.astype(yb_ref.dtype)
        return carry

    jax.lax.fori_loop(0, K, step, 0, unroll=min(K, 8))


def pallas_bilstm_layer(xp, w_hh_f, w_hh_b):
    """xp: (T, B, 8H) bf16 fused fwd/bwd projections -> (y_fwd, y_bwd) each (T, B, H) bf16."""
    T, B, G8 = xp.shape
    H = G8 // 8
    K = _time_chunk(T)
    nC = T // K
    split = (4 * H) % 128 == 0              # per-direction 4H block is lane-tile aligned
    if split:
        in_block = (K, B, 4 * H)
        fwd_map = lambda c: (c, 0, 0)
        bwd_map = lambda c: (nC - 1 - c, 0, 1)
    else:
        in_block = (K, B, G8)
        fwd_map = lambda c: (c, 0, 0)
        bwd_map = lambda c: (nC - 1 - c, 0, 0)
    # TODO(synk): on v7x the two directions could be split across the 2 TensorCores
    # (leading "parallel" grid axis of size 2); kept fused here for v5e/v6e simplicity.
    return pl.pallas_call(
        functools.partial(_bilstm_kernel, K=K, H=H, split=split),
        out_shape=(jax.ShapeDtypeStruct((T, B, H), jnp.bfloat16),
                   jax.ShapeDtypeStruct((T, B, H), jnp.bfloat16)),
        grid=(nC,),
        in_specs=[pl.BlockSpec(in_block, fwd_map),
                  pl.BlockSpec(in_block, bwd_map),
                  pl.BlockSpec((H, 4 * H), lambda c: (0, 0)),
                  pl.BlockSpec((H, 4 * H), lambda c: (0, 0))],
        out_specs=(pl.BlockSpec((K, B, H), lambda c: (c, 0, 0)),
                   pl.BlockSpec((K, B, H), lambda c: (nC - 1 - c, 0, 0))),
        scratch_shapes=[pltpu.VMEM((B, H), jnp.float32),
                        pltpu.VMEM((B, H), jnp.float32),
                        pltpu.VMEM((B, H), jnp.float32),
                        pltpu.VMEM((B, H), jnp.float32)],
        compiler_params=pltpu.CompilerParams(
            dimension_semantics=("arbitrary",),
            vmem_limit_bytes=_VMEM_LIMIT),
    )(xp, xp, w_hh_f, w_hh_b)


# --------------------------------------------------------------------------
# Kernel 4: biaffine scorer, grid = (B,), all classes per step.
# Decomposed (no [x;1] augmentation, contraction stays at D):
#   score[b,c,i,j] = s_i W_c e_j^T + s_i u_c + v_c e_j^T + b_c
# First stage is ONE fused (L,D)x(D,C*D) matmul (W stored pre-flattened).
# --------------------------------------------------------------------------
def _biaffine_kernel(s_ref, e_ref, wflat_ref, u_ref, vt_ref, b0_ref, o_ref, *, C, D):
    s = s_ref[0]                            # (L, D) bf16
    e = e_ref[0]                            # (L, D) bf16
    # rank-1 bias terms of the decomposition
    su = jnp.dot(s, u_ref[...], preferred_element_type=jnp.float32) + b0_ref[...]   # (L, C)
    ev = jax.lax.dot_general(vt_ref[...], e, (((1,), (1,)), ((), ())),
                             preferred_element_type=jnp.float32)                    # (C, L)
    # fused first stage: s @ [W_0 | W_1 | ... | W_{C-1}]  -> (L, C*D)
    t = jnp.dot(s, wflat_ref[...], preferred_element_type=jnp.float32)
    for c in range(C):
        tc = t[:, c * D:(c + 1) * D].astype(jnp.bfloat16)                           # (L, D)
        sc = jax.lax.dot_general(tc, e, (((1,), (1,)), ((), ())),
                                 preferred_element_type=jnp.float32)                # (L, L)
        o_ref[0, c] = (sc + su[:, c:c + 1] + ev[c:c + 1, :]).astype(o_ref.dtype)


def pallas_biaffine(start, end, wflat, u, vt, b0):
    """start/end: (B, L, D) bf16; wflat: (D, C*D); u: (D, C); vt: (C, D); b0: (1, C)."""
    B, L, D = start.shape
    C = vt.shape[0]
    return pl.pallas_call(
        functools.partial(_biaffine_kernel, C=C, D=D),
        out_shape=jax.ShapeDtypeStruct((B, C, L, L), jnp.float32),
        grid=(B,),
        in_specs=[pl.BlockSpec((1, L, D), lambda b: (b, 0, 0)),
                  pl.BlockSpec((1, L, D), lambda b: (b, 0, 0)),
                  pl.BlockSpec((D, C * D), lambda b: (0, 0)),
                  pl.BlockSpec((D, C), lambda b: (0, 0)),
                  pl.BlockSpec((C, D), lambda b: (0, 0)),
                  pl.BlockSpec((1, C), lambda b: (0, 0))],
        out_specs=pl.BlockSpec((1, C, L, L), lambda b: (b, 0, 0, 0)),
        compiler_params=pltpu.CompilerParams(
            dimension_semantics=("parallel",),
            vmem_limit_bytes=_VMEM_LIMIT),
    )(start, end, wflat, u, vt, b0)


# --------------------------------------------------------------------------
# Parameter initialization (deterministic, synthetic).  Matmul weights are bf16.
# TODO(synk): fp8 weight storage on v7x (native fp8 MXU) left unimplemented.
# --------------------------------------------------------------------------
def init_params(key, vocab_len, d_emb, d_in, d_hid, d_class, n_layers):
    keys = iter(jax.random.split(key, 64))

    def nrm(shape, dtype=jnp.float32, scale=0.1):
        return (scale * jax.random.normal(next(keys), shape, jnp.float32)).astype(dtype)

    params = {}
    emb = nrm((vocab_len, d_emb))
    emb = emb.at[1].set(0.0)                                  # padding_idx=1
    params["embedding"] = emb
    params["linear_w"] = nrm((d_emb, d_in), jnp.bfloat16)     # stored as (in, out)
    params["linear_b"] = nrm((1, d_in))

    H = d_hid
    lstm = []
    in_size = d_in
    for _ in range(n_layers):
        lstm.append(dict(
            w_ih=nrm((in_size, 8 * H), jnp.bfloat16),         # [W_ih_fwd | W_ih_bwd]^T
            b=nrm((1, 8 * H)),                                # (b_ih + b_hh) for both dirs
            w_hh_f=nrm((H, 4 * H), jnp.bfloat16),             # W_hh_fwd^T
            w_hh_b=nrm((H, 4 * H), jnp.bfloat16),             # W_hh_bwd^T
        ))
        in_size = 2 * H
    params["lstm"] = lstm

    D = 2 * H
    Dh = 8 * H
    params["ffn"] = dict(                                     # stacked: [feedStart, feedEnd]
        w1=nrm((2, D, Dh), jnp.bfloat16),
        b1=nrm((2, 1, Dh)),
        w2=nrm((2, Dh, D), jnp.bfloat16),
        b2=nrm((2, 1, D)),
        gamma=jnp.ones((2, 1, D), jnp.float32),
        beta=jnp.zeros((2, 1, D), jnp.float32),
    )
    # biaffine bilinear weights pre-flattened: [W_0 | W_1 | ... | W_{C-1}] -> (D, C*D)
    params["biaffine_wflat"] = nrm((D, d_class * D), jnp.bfloat16)
    params["biaffine_u"] = nrm((D, d_class), jnp.bfloat16)
    params["biaffine_vt"] = nrm((d_class, D), jnp.bfloat16)
    params["biaffine_b"] = nrm((1, d_class))
    return params


# --------------------------------------------------------------------------
# Forward pass (glue in JAX, hot paths in Pallas).
# --------------------------------------------------------------------------
def smodel_forward(params, ids):
    B, T = ids.shape
    # Transpose the int32 ids (cheap) so activations are time-major from the start —
    # no full-activation transpose between the linear and the LSTM stack.
    ids_tm = ids.T                                                      # (T, B)
    x = jnp.take(params["embedding"], ids_tm, axis=0).astype(jnp.bfloat16)  # (T, B, d_emb)
    d_emb = x.shape[-1]
    x = pallas_linear(x.reshape(T * B, d_emb),
                      params["linear_w"], params["linear_b"], relu=True)
    d_in = x.shape[-1]
    x_tm = x.reshape(T, B, d_in)                                        # (T, B, d_in) bf16

    for layer in params["lstm"]:
        xin = x_tm.reshape(T * B, x_tm.shape[-1])
        xp = pallas_linear(xin, layer["w_ih"], layer["b"])              # fused fwd+bwd proj
        xp = xp.reshape(T, B, -1)                                       # (T, B, 8H) bf16
        yf, yb = pallas_bilstm_layer(xp, layer["w_hh_f"], layer["w_hh_b"])
        x_tm = jnp.concatenate([yf, yb], axis=-1)                       # (T, B, 2H) bf16
        # TODO(synk): inter-layer LSTM dropout (p=0.3) omitted — inference identity.

    D = x_tm.shape[-1]
    x_bt = x_tm.transpose(1, 0, 2)                                      # single bf16 transpose
    xf = x_bt.reshape(B * T, D)
    start, end = pallas_ffn_pair(params["ffn"], xf)                     # fused feedStart/End
    start = start.reshape(B, T, D)
    end = end.reshape(B, T, D)

    score = pallas_biaffine(start, end, params["biaffine_wflat"],
                            params["biaffine_u"], params["biaffine_vt"],
                            params["biaffine_b"])                       # (B, C, T, T) f32
    # TODO(synk): final layout change kept as an XLA transpose — emitting (B,T,T,C)
    # directly from the kernel needs C-minor stores (masked for small C).
    return jnp.transpose(score, (0, 2, 3, 1))                           # (B, T, T, C)


if __name__ == "__main__":
    # d_hid=32 so each direction's 4H gate block (=128) is lane-tile aligned.
    vocab_len, d_emb, d_in, d_hid, d_class, n_layers = 50, 16, 32, 32, 4, 2
    B, T = 2, 8

    key = jax.random.PRNGKey(0)
    pkey, ikey = jax.random.split(key)
    params = init_params(pkey, vocab_len, d_emb, d_in, d_hid, d_class, n_layers)
    ids = jax.random.randint(ikey, (B, T), 0, vocab_len, dtype=jnp.int32)

    fwd = jax.jit(smodel_forward)
    out = fwd(params, ids)
    jax.block_until_ready(out)
    assert out.shape == (B, T, T, d_class), out.shape
    print("KERNEL_OK")
</pallas_src>

<mosaic_0001>
module attributes {stable_mosaic.version = 11 : i64} {
  func.func @_linear_kernel(%arg0: i32, %arg1: memref<16x32xbf16, #tpu.memory_space<vmem>>, %arg2: memref<32x256xbf16, #tpu.memory_space<vmem>>, %arg3: memref<1x256xf32, #tpu.memory_space<vmem>>, %arg4: memref<16x256xbf16, #tpu.memory_space<vmem>>) attributes {dimension_semantics = [#tpu.dimension_semantics<parallel>], iteration_bounds = array<i64: 1>, scalar_prefetch = 0 : i64, scratch_operands = 0 : i64, tpu.core_type = #tpu.core_type<tc>, window_params = [{transform_indices = @transform_0, window_bounds = array<i64: 16, 32>}, {pipeline_mode = #tpu.pipeline_mode<synchronous>, transform_indices = @transform_1, window_bounds = array<i64: 32, 256>}, {pipeline_mode = #tpu.pipeline_mode<synchronous>, transform_indices = @transform_2, window_bounds = array<i64: 1, 256>}, {transform_indices = @transform_3, window_bounds = array<i64: 16, 256>}]} {
    %c0 = arith.constant 0 : index
    %c0_0 = arith.constant 0 : index
    %0 = vector.load %arg1[%c0, %c0_0] : memref<16x32xbf16, #tpu.memory_space<vmem>>, vector<16x32xbf16>
    %c0_1 = arith.constant 0 : index
    %c0_2 = arith.constant 0 : index
    %1 = vector.load %arg2[%c0_1, %c0_2] : memref<32x256xbf16, #tpu.memory_space<vmem>>, vector<32x256xbf16>
    %cst = arith.constant dense<0.000000e+00> : vector<16x256xf32>
    %2 = tpu.matmul %0, %1, %cst {dimension_numbers = #tpu.dot_dimension_numbers<[1], [0], [0], [1], [0, 0, 1, 1], [], []>} : vector<16x32xbf16>, vector<32x256xbf16>, vector<16x256xf32> -> vector<16x256xf32>
    %c0_3 = arith.constant 0 : index
    %c0_4 = arith.constant 0 : index
    %3 = vector.load %arg3[%c0_3, %c0_4] : memref<1x256xf32, #tpu.memory_space<vmem>>, vector<1x256xf32>
    %4 = vector.broadcast %3 : vector<1x256xf32> to vector<16x256xf32>
    %5 = arith.addf %2, %4 : vector<16x256xf32>
    %6 = arith.truncf %5 : vector<16x256xf32> to vector<16x256xbf16>
    %c0_5 = arith.constant 0 : index
    %c0_6 = arith.constant 0 : index
    %7 = vector.load %arg4[%c0_5, %c0_6] : memref<16x256xbf16, #tpu.memory_space<vmem>>, vector<16x256xbf16>
    tpu.vector_store %arg4[%c0_5, %c0_6], %6 {strides = array<i32>} : memref<16x256xbf16, #tpu.memory_space<vmem>>, vector<16x256xbf16>,
    return
  }
  func.func @transform_0(%arg0: i32) -> (i32, i32) {
    %c0_i32 = arith.constant 0 : i32
    %c0_i32_0 = arith.constant 0 : i32
    return %arg0, %c0_i32 : i32, i32
  }
  func.func @transform_1(%arg0: i32) -> (i32, i32) {
    %c0_i32 = arith.constant 0 : i32
    %c0_i32_0 = arith.constant 0 : i32
    %c0_i32_1 = arith.constant 0 : i32
    return %c0_i32, %c0_i32_0 : i32, i32
  }
  func.func @transform_2(%arg0: i32) -> (i32, i32) {
    %c0_i32 = arith.constant 0 : i32
    %c0_i32_0 = arith.constant 0 : i32
    %c0_i32_1 = arith.constant 0 : i32
    return %c0_i32, %c0_i32_0 : i32, i32
  }
  func.func @transform_3(%arg0: i32) -> (i32, i32) {
    %c0_i32 = arith.constant 0 : i32
    %c0_i32_0 = arith.constant 0 : i32
    return %arg0, %c0_i32 : i32, i32
  }
}

module attributes {stable_mosaic.version = 11 : i64} {
  func.func @_linear_kernel(%arg0: i32, %arg1: memref<16x16xbf16, #tpu.memory_space<vmem>>, %arg2: memref<16x32xbf16, #tpu.memory_space<vmem>>, %arg3: memref<1x32xf32, #tpu.memory_space<vmem>>, %arg4: memref<16x32xbf16, #tpu.memory_space<vmem>>) attributes {dimension_semantics = [#tpu.dimension_semantics<parallel>], iteration_bounds = array<i64: 1>, scalar_prefetch = 0 : i64, scratch_operands = 0 : i64, tpu.core_type = #tpu.core_type<tc>, window_params = [{transform_indices = @transform_0, window_bounds = array<i64: 16, 16>}, {pipeline_mode = #tpu.pipeline_mode<synchronous>, transform_indices = @transform_1, window_bounds = array<i64: 16, 32>}, {pipeline_mode = #tpu.pipeline_mode<synchronous>, transform_indices = @transform_2, window_bounds = array<i64: 1, 32>}, {transform_indices = @transform_3, window_bounds = array<i64: 16, 32>}]} {
    %c0 = arith.constant 0 : index
    %c0_0 = arith.constant 0 : index
    %0 = vector.load %arg1[%c0, %c0_0] : memref<16x16xbf16, #tpu.memory_space<vmem>>, vector<16x16xbf16>
    %c0_1 = arith.constant 0 : index
    %c0_2 = arith.constant 0 : index
    %1 = vector.load %arg2[%c0_1, %c0_2] : memref<16x32xbf16, #tpu.memory_space<vmem>>, vector<16x32xbf16>
    %cst = arith.constant dense<0.000000e+00> : vector<16x32xf32>
    %2 = tpu.matmul %0, %1, %cst {dimension_numbers = #tpu.dot_dimension_numbers<[1], [0], [0], [1], [0, 0, 1, 1], [], []>} : vector<16x16xbf16>, vector<16x32xbf16>, vector<16x32xf32> -> vector<16x32xf32>
    %c0_3 = arith.constant 0 : index
    %c0_4 = arith.constant 0 : index
    %3 = vector.load %arg3[%c0_3, %c0_4] : memref<1x32xf32, #tpu.memory_space<vmem>>, vector<1x32xf32>
    %4 = vector.broadcast %3 : vector<1x32xf32> to vector<16x32xf32>
    %5 = arith.addf %2, %4 : vector<16x32xf32>
    %cst_5 = arith.constant 0.000000e+00 : f32
    %6 = vector.broadcast %cst_5 : f32 to vector<16x32xf32>
    %7 = arith.maximumf %5, %6 : vector<16x32xf32>
    %8 = arith.truncf %7 : vector<16x32xf32> to vector<16x32xbf16>
    %c0_6 = arith.constant 0 : index
    %c0_7 = arith.constant 0 : index
    %9 = vector.load %arg4[%c0_6, %c0_7] : memref<16x32xbf16, #tpu.memory_space<vmem>>, vector<16x32xbf16>
    tpu.vector_store %arg4[%c0_6, %c0_7], %8 {strides = array<i32>} : memref<16x32xbf16, #tpu.memory_space<vmem>>, vector<16x32xbf16>,
    return
  }
  func.func @transform_0(%arg0: i32) -> (i32, i32) {
    %c0_i32 = arith.constant 0 : i32
    %c0_i32_0 = arith.constant 0 : i32
    return %arg0, %c0_i32 : i32, i32
  }
  func.func @transform_1(%arg0: i32) -> (i32, i32) {
    %c0_i32 = arith.constant 0 : i32
    %c0_i32_0 = arith.constant 0 : i32
    %c0_i32_1 = arith.constant 0 : i32
    return %c0_i32, %c0_i32_0 : i32, i32
  }
  func.func @transform_2(%arg0: i32) -> (i32, i32) {
    %c0_i32 = arith.constant 0 : i32
    %c0_i32_0 = arith.constant 0 : i32
    %c0_i32_1 = arith.constant 0 : i32
    return %c0_i32, %c0_i32_0 : i32, i32
  }
  func.func @transform_3(%arg0: i32) -> (i32, i32) {
    %c0_i32 = arith.constant 0 : i32
    %c0_i32_0 = arith.constant 0 : i32
    return %arg0, %c0_i32 : i32, i32
  }
}

module attributes {stable_mosaic.version = 11 : i64} {
  func.func @_linear_kernel(%arg0: i32, %arg1: memref<16x64xbf16, #tpu.memory_space<vmem>>, %arg2: memref<64x256xbf16, #tpu.memory_space<vmem>>, %arg3: memref<1x256xf32, #tpu.memory_space<vmem>>, %arg4: memref<16x256xbf16, #tpu.memory_space<vmem>>) attributes {dimension_semantics = [#tpu.dimension_semantics<parallel>], iteration_bounds = array<i64: 1>, scalar_prefetch = 0 : i64, scratch_operands = 0 : i64, tpu.core_type = #tpu.core_type<tc>, window_params = [{transform_indices = @transform_0, window_bounds = array<i64: 16, 64>}, {pipeline_mode = #tpu.pipeline_mode<synchronous>, transform_indices = @transform_1, window_bounds = array<i64: 64, 256>}, {pipeline_mode = #tpu.pipeline_mode<synchronous>, transform_indices = @transform_2, window_bounds = array<i64: 1, 256>}, {transform_indices = @transform_3, window_bounds = array<i64: 16, 256>}]} {
    %c0 = arith.constant 0 : index
    %c0_0 = arith.constant 0 : index
    %0 = vector.load %arg1[%c0, %c0_0] : memref<16x64xbf16, #tpu.memory_space<vmem>>, vector<16x64xbf16>
    %c0_1 = arith.constant 0 : index
    %c0_2 = arith.constant 0 : index
    %1 = vector.load %arg2[%c0_1, %c0_2] : memref<64x256xbf16, #tpu.memory_space<vmem>>, vector<64x256xbf16>
    %cst = arith.constant dense<0.000000e+00> : vector<16x256xf32>
    %2 = tpu.matmul %0, %1, %cst {dimension_numbers = #tpu.dot_dimension_numbers<[1], [0], [0], [1], [0, 0, 1, 1], [], []>} : vector<16x64xbf16>, vector<64x256xbf16>, vector<16x256xf32> -> vector<16x256xf32>
    %c0_3 = arith.constant 0 : index
    %c0_4 = arith.constant 0 : index
    %3 = vector.load %arg3[%c0_3, %c0_4] : memref<1x256xf32, #tpu.memory_space<vmem>>, vector<1x256xf32>
    %4 = vector.broadcast %3 : vector<1x256xf32> to vector<16x256xf32>
    %5 = arith.addf %2, %4 : vector<16x256xf32>
    %6 = arith.truncf %5 : vector<16x256xf32> to vector<16x256xbf16>
    %c0_5 = arith.constant 0 : index
    %c0_6 = arith.constant 0 : index
    %7 = vector.load %arg4[%c0_5, %c0_6] : memref<16x256xbf16, #tpu.memory_space<vmem>>, vector<16x256xbf16>
    tpu.vector_store %arg4[%c0_5, %c0_6], %6 {strides = array<i32>} : memref<16x256xbf16, #tpu.memory_space<vmem>>, vector<16x256xbf16>,
    return
  }
  func.func @transform_0(%arg0: i32) -> (i32, i32) {
    %c0_i32 = arith.constant 0 : i32
    %c0_i32_0 = arith.constant 0 : i32
    return %arg0, %c0_i32 : i32, i32
  }
  func.func @transform_1(%arg0: i32) -> (i32, i32) {
    %c0_i32 = arith.constant 0 : i32
    %c0_i32_0 = arith.constant 0 : i32
    %c0_i32_1 = arith.constant 0 : i32
    return %c0_i32, %c0_i32_0 : i32, i32
  }
  func.func @transform_2(%arg0: i32) -> (i32, i32) {
    %c0_i32 = arith.constant 0 : i32
    %c0_i32_0 = arith.constant 0 : i32
    %c0_i32_1 = arith.constant 0 : i32
    return %c0_i32, %c0_i32_0 : i32, i32
  }
  func.func @transform_3(%arg0: i32) -> (i32, i32) {
    %c0_i32 = arith.constant 0 : i32
    %c0_i32_0 = arith.constant 0 : i32
    return %arg0, %c0_i32 : i32, i32
  }
}

module attributes {stable_mosaic.version = 11 : i64} {
  func.func @_bilstm_kernel(%arg0: i32, %arg1: memref<8x2x128xbf16, #tpu.memory_space<vmem>>, %arg2: memref<8x2x128xbf16, #tpu.memory_space<vmem>>, %arg3: memref<32x128xbf16, #tpu.memory_space<vmem>>, %arg4: memref<32x128xbf16, #tpu.memory_space<vmem>>, %arg5: memref<8x2x32xbf16, #tpu.memory_space<vmem>>, %arg6: memref<8x2x32xbf16, #tpu.memory_space<vmem>>, %arg7: memref<2x32xf32, #tpu.memory_space<vmem>>, %arg8: memref<2x32xf32, #tpu.memory_space<vmem>>, %arg9: memref<2x32xf32, #tpu.memory_space<vmem>>, %arg10: memref<2x32xf32, #tpu.memory_space<vmem>>) attributes {dimension_semantics = [#tpu.dimension_semantics<arbitrary>], iteration_bounds = array<i64: 1>, scalar_prefetch = 0 : i64, scratch_operands = 4 : i64, tpu.core_type = #tpu.core_type<tc>, window_params = [{transform_indices = @transform_0, window_bounds = array<i64: 8, 2, 128>}, {transform_indices = @transform_1, window_bounds = array<i64: 8, 2, 128>}, {pipeline_mode = #tpu.pipeline_mode<synchronous>, transform_indices = @transform_2, window_bounds = array<i64: 32, 128>}, {pipeline_mode = #tpu.pipeline_mode<synchronous>, transform_indices = @transform_3, window_bounds = array<i64: 32, 128>}, {transform_indices = @transform_4, window_bounds = array<i64: 8, 2, 32>}, {transform_indices = @transform_5, window_bounds = array<i64: 8, 2, 32>}]} {
    %c0_i32 = arith.constant 0 : i32
    %0 = arith.cmpi eq, %arg0, %c0_i32 : i32
    %1 = arith.extui %0 : i1 to i32
    %c0_i32_0 = arith.constant 0 : i32
    %2 = arith.cmpi ne, %1, %c0_i32_0 : i32
    scf.if %2 {
      %cst_268 = arith.constant 0.000000e+00 : f32
      %669 = vector.broadcast %cst_268 : f32 to vector<2x32xf32>
      %c0_269 = arith.constant 0 : index
      %c0_270 = arith.constant 0 : index
      %670 = vector.load %arg7[%c0_269, %c0_270] : memref<2x32xf32, #tpu.memory_space<vmem>>, vector<2x32xf32>
      tpu.vector_store %arg7[%c0_269, %c0_270], %669 {strides = array<i32>} : memref<2x32xf32, #tpu.memory_space<vmem>>, vector<2x32xf32>,
      %cst_271 = arith.constant 0.000000e+00 : f32
      %671 = vector.broadcast %cst_271 : f32 to vector<2x32xf32>
      %c0_272 = arith.constant 0 : index
      %c0_273 = arith.constant 0 : index
      %672 = vector.load %arg8[%c0_272, %c0_273] : memref<2x32xf32, #tpu.memory_space<vmem>>, vector<2x32xf32>
      tpu.vector_store %arg8[%c0_272, %c0_273], %671 {strides = array<i32>} : memref<2x32xf32, #tpu.memory_space<vmem>>, vector<2x32xf32>,
      %cst_274 = arith.constant 0.000000e+00 : f32
      %673 = vector.broadcast %cst_274 : f32 to vector<2x32xf32>
      %c0_275 = arith.constant 0 : index
      %c0_276 = arith.constant 0 : index
      %674 = vector.load %arg9[%c0_275, %c0_276] : memref<2x32xf32, #tpu.memory_space<vmem>>, vector<2x32xf32>
      tpu.vector_store %arg9[%c0_275, %c0_276], %673 {strides = array<i32>} : memref<2x32xf32, #tpu.memory_space<vmem>>, vector<2x32xf32>,
      %cst_277 = arith.constant 0.000000e+00 : f32
      %675 = vector.broadcast %cst_277 : f32 to vector<2x32xf32>
      %c0_278 = arith.constant 0 : index
      %c0_279 = arith.constant 0 : index
      %676 = vector.load %arg10[%c0_278, %c0_279] : memref<2x32xf32, #tpu.memory_space<vmem>>, vector<2x32xf32>
      tpu.vector_store %arg10[%c0_278, %c0_279], %675 {strides = array<i32>} : memref<2x32xf32, #tpu.memory_space<vmem>>, vector<2x32xf32>,
    } else {
    }
    %c0 = arith.constant 0 : index
    %c0_1 = arith.constant 0 : index
    %3 = vector.load %arg3[%c0, %c0_1] : memref<32x128xbf16, #tpu.memory_space<vmem>>, vector<32x128xbf16>
    %c0_2 = arith.constant 0 : index
    %c0_3 = arith.constant 0 : index
    %4 = vector.load %arg4[%c0_2, %c0_3] : memref<32x128xbf16, #tpu.memory_space<vmem>>, vector<32x128xbf16>
    %c0_i32_4 = arith.constant 0 : i32
    %5 = arith.index_cast %c0_i32_4 : i32 to index
    %c0_5 = arith.constant 0 : index
    %c0_6 = arith.constant 0 : index
    %6 = vector.load %arg1[%5, %c0_5, %c0_6] : memref<8x2x128xbf16, #tpu.memory_space<vmem>>, vector<1x2x128xbf16>
    %7 = vector.shape_cast %6 : vector<1x2x128xbf16> to vector<2x128xbf16>
    %c7_i32 = arith.constant 7 : i32
    %8 = arith.subi %c7_i32, %c0_i32_4 : i32
    %9 = arith.index_cast %8 : i32 to index
    %c0_7 = arith.constant 0 : index
    %c0_8 = arith.constant 0 : index
    %10 = vector.load %arg2[%9, %c0_7, %c0_8] : memref<8x2x128xbf16, #tpu.memory_space<vmem>>, vector<1x2x128xbf16>
    %11 = vector.shape_cast %10 : vector<1x2x128xbf16> to vector<2x128xbf16>
    %c0_9 = arith.constant 0 : index
    %c0_10 = arith.constant 0 : index
    %12 = vector.load %arg7[%c0_9, %c0_10] : memref<2x32xf32, #tpu.memory_space<vmem>>, vector<2x32xf32>
    %c0_11 = arith.constant 0 : index
    %c0_12 = arith.constant 0 : index
    %13 = vector.load %arg8[%c0_11, %c0_12] : memref<2x32xf32, #tpu.memory_space<vmem>>, vector<2x32xf32>
    %14 = arith.extf %7 : vector<2x128xbf16> to vector<2x128xf32>
    %15 = arith.truncf %12 : vector<2x32xf32> to vector<2x32xbf16>
    %cst = arith.constant dense<0.000000e+00> : vector<2x128xf32>
    %16 = tpu.matmul %15, %3, %cst {dimension_numbers = #tpu.dot_dimension_numbers<[1], [0], [0], [1], [0, 0, 1, 1], [], []>} : vector<2x32xbf16>, vector<32x128xbf16>, vector<2x128xf32> -> vector<2x128xf32>
    %17 = arith.addf %14, %16 : vector<2x128xf32>
    %18 = vector.extract_strided_slice %17 {offsets = [0, 0], sizes = [2, 32], strides = [1, 1]} : vector<2x128xf32> to vector<2x32xf32>
    %19 = arith.negf %18 : vector<2x32xf32>
    %20 = math.exp %19 : vector<2x32xf32>
    %cst_13 = arith.constant 1.000000e+00 : f32
    %21 = vector.broadcast %cst_13 : f32 to vector<2x32xf32>
    %22 = arith.addf %21, %20 : vector<2x32xf32>
    %23 = arith.divf %21, %22 : vector<2x32xf32>
    %24 = vector.extract_strided_slice %17 {offsets = [0, 32], sizes = [2, 32], strides = [1, 1]} : vector<2x128xf32> to vector<2x32xf32>
    %25 = arith.negf %24 : vector<2x32xf32>
    %26 = math.exp %25 : vector<2x32xf32>
    %cst_14 = arith.constant 1.000000e+00 : f32
    %27 = vector.broadcast %cst_14 : f32 to vector<2x32xf32>
    %28 = arith.addf %27, %26 : vector<2x32xf32>
    %29 = arith.divf %27, %28 : vector<2x32xf32>
    %30 = vector.extract_strided_slice %17 {offsets = [0, 64], sizes = [2, 32], strides = [1, 1]} : vector<2x128xf32> to vector<2x32xf32>
    %31 = math.tanh %30 : vector<2x32xf32>
    %32 = vector.extract_strided_slice %17 {offsets = [0, 96], sizes = [2, 32], strides = [1, 1]} : vector<2x128xf32> to vector<2x32xf32>
    %33 = arith.negf %32 : vector<2x32xf32>
    %34 = math.exp %33 : vector<2x32xf32>
    %cst_15 = arith.constant 1.000000e+00 : f32
    %35 = vector.broadcast %cst_15 : f32 to vector<2x32xf32>
    %36 = arith.addf %35, %34 : vector<2x32xf32>
    %37 = arith.divf %35, %36 : vector<2x32xf32>
    %38 = arith.mulf %29, %13 : vector<2x32xf32>
    %39 = arith.mulf %23, %31 : vector<2x32xf32>
    %40 = arith.addf %38, %39 : vector<2x32xf32>
    %41 = math.tanh %40 : vector<2x32xf32>
    %42 = arith.mulf %37, %41 : vector<2x32xf32>
    %c0_16 = arith.constant 0 : index
    %c0_17 = arith.constant 0 : index
    %43 = vector.load %arg7[%c0_16, %c0_17] : memref<2x32xf32, #tpu.memory_space<vmem>>, vector<2x32xf32>
    tpu.vector_store %arg7[%c0_16, %c0_17], %42 {strides = array<i32>} : memref<2x32xf32, #tpu.memory_space<vmem>>, vector<2x32xf32>,
    %c0_18 = arith.constant 0 : index
    %c0_19 = arith.constant 0 : index
    %44 = vector.load %arg8[%c0_18, %c0_19] : memref<2x32xf32, #tpu.memory_space<vmem>>, vector<2x32xf32>
    tpu.vector_store %arg8[%c0_18, %c0_19], %40 {strides = array<i32>} : memref<2x32xf32, #tpu.memory_space<vmem>>, vector<2x32xf32>,
    %45 = arith.truncf %42 : vector<2x32xf32> to vector<2x32xbf16>
    %46 = arith.index_cast %c0_i32_4 : i32 to index
    %c0_20 = arith.constant 0 : index
    %c0_21 = arith.constant 0 : index
    %47 = vector.load %arg5[%46, %c0_20, %c0_21] : memref<8x2x32xbf16, #tpu.memory_space<vmem>>, vector<1x2x32xbf16>
    %48 = vector.shape_cast %47 : vector<1x2x32xbf16> to vector<2x32xbf16>
    %49 = vector.shape_cast %45 : vector<2x32xbf16> to vector<1x2x32xbf16>
    tpu.vector_store %arg5[%46, %c0_20, %c0_21], %49 {strides = array<i32>} : memref<8x2x32xbf16, #tpu.memory_space<vmem>>, vector<1x2x32xbf16>,
    %c0_22 = arith.constant 0 : index
    %c0_23 = arith.constant 0 : index
    %50 = vector.load %arg9[%c0_22, %c0_23] : memref<2x32xf32, #tpu.memory_space<vmem>>, vector<2x32xf32>
    %c0_24 = arith.constant 0 : index
    %c0_25 = arith.constant 0 : index
    %51 = vector.load %arg10[%c0_24, %c0_25] : memref<2x32xf32, #tpu.memory_space<vmem>>, vector<2x32xf32>
    %52 = arith.extf %11 : vector<2x128xbf16> to vector<2x128xf32>
    %53 = arith.truncf %50 : vector<2x32xf32> to vector<2x32xbf16>
    %cst_26 = arith.constant dense<0.000000e+00> : vector<2x128xf32>
    %54 = tpu.matmul %53, %4, %cst_26 {dimension_numbers = #tpu.dot_dimension_numbers<[1], [0], [0], [1], [0, 0, 1, 1], [], []>} : vector<2x32xbf16>, vector<32x128xbf16>, vector<2x128xf32> -> vector<2x128xf32>
    %55 = arith.addf %52, %54 : vector<2x128xf32>
    %56 = vector.extract_strided_slice %55 {offsets = [0, 0], sizes = [2, 32], strides = [1, 1]} : vector<2x128xf32> to vector<2x32xf32>
    %57 = arith.negf %56 : vector<2x32xf32>
    %58 = math.exp %57 : vector<2x32xf32>
    %cst_27 = arith.constant 1.000000e+00 : f32
    %59 = vector.broadcast %cst_27 : f32 to vector<2x32xf32>
    %60 = arith.addf %59, %58 : vector<2x32xf32>
    %61 = arith.divf %59, %60 : vector<2x32xf32>
    %62 = vector.extract_strided_slice %55 {offsets = [0, 32], sizes = [2, 32], strides = [1, 1]} : vector<2x128xf32> to vector<2x32xf32>
    %63 = arith.negf %62 : vector<2x32xf32>
    %64 = math.exp %63 : vector<2x32xf32>
    %cst_28 = arith.constant 1.000000e+00 : f32
    %65 = vector.broadcast %cst_28 : f32 to vector<2x32xf32>
    %66 = arith.addf %65, %64 : vector<2x32xf32>
    %67 = arith.divf %65, %66 : vector<2x32xf32>
    %68 = vector.extract_strided_slice %55 {offsets = [0, 64], sizes = [2, 32], strides = [1, 1]} : vector<2x128xf32> to vector<2x32xf32>
    %69 = math.tanh %68 : vector<2x32xf32>
    %70 = vector.extract_strided_slice %55 {offsets = [0, 96], sizes = [2, 32], strides = [1, 1]} : vector<2x128xf32> to vector<2x32xf32>
    %71 = arith.negf %70 : vector<2x32xf32>
    %72 = math.exp %71 : vector<2x32xf32>
    %cst_29 = arith.constant 1.000000e+00 : f32
    %73 = vector.broadcast %cst_29 : f32 to vector<2x32xf32>
    %74 = arith.addf %73, %72 : vector<2x32xf32>
    %75 = arith.divf %73, %74 : vector<2x32xf32>
    %76 = arith.mulf %67, %51 : vector<2x32xf32>
    %77 = arith.mulf %61, %69 : vector<2x32xf32>
    %78 = arith.addf %76, %77 : vector<2x32xf32>
    %79 = math.tanh %78 : vector<2x32xf32>
    %80 = arith.mulf %75, %79 : vector<2x32xf32>
    %c0_30 = arith.constant 0 : index
    %c0_31 = arith.constant 0 : index
    %81 = vector.load %arg9[%c0_30, %c0_31] : memref<2x32xf32, #tpu.memory_space<vmem>>, vector<2x32xf32>
    tpu.vector_store %arg9[%c0_30, %c0_31], %80 {strides = array<i32>} : memref<2x32xf32, #tpu.memory_space<vmem>>, vector<2x32xf32>,
    %c0_32 = arith.constant 0 : index
    %c0_33 = arith.constant 0 : index
    %82 = vector.load %arg10[%c0_32, %c0_33] : memref<2x32xf32, #tpu.memory_space<vmem>>, vector<2x32xf32>
    tpu.vector_store %arg10[%c0_32, %c0_33], %78 {strides = array<i32>} : memref<2x32xf32, #tpu.memory_space<vmem>>, vector<2x32xf32>,
    %83 = arith.truncf %80 : vector<2x32xf32> to vector<2x32xbf16>
    %84 = arith.index_cast %8 : i32 to index
    %c0_34 = arith.constant 0 : index
    %c0_35 = arith.constant 0 : index
    %85 = vector.load %arg6[%84, %c0_34, %c0_35] : memref<8x2x32xbf16, #tpu.memory_space<vmem>>, vector<1x2x32xbf16>
    %86 = vector.shape_cast %85 : vector<1x2x32xbf16> to vector<2x32xbf16>
    %87 = vector.shape_cast %83 : vector<2x32xbf16> to vector<1x2x32xbf16>
    tpu.vector_store %arg6[%84, %c0_34, %c0_35], %87 {strides = array<i32>} : memref<8x2x32xbf16, #tpu.memory_space<vmem>>, vector<1x2x32xbf16>,
    %c1_i32 = arith.constant 1 : i32
    %88 = arith.index_cast %c1_i32 : i32 to index
    %c0_36 = arith.constant 0 : index
    %c0_37 = arith.constant 0 : index
    %89 = vector.load %arg1[%88, %c0_36, %c0_37] : memref<8x2x128xbf16, #tpu.memory_space<vmem>>, vector<1x2x128xbf16>
    %90 = vector.shape_cast %89 : vector<1x2x128xbf16> to vector<2x128xbf16>
    %c7_i32_38 = arith.constant 7 : i32
    %91 = arith.subi %c7_i32_38, %c1_i32 : i32
    %92 = arith.index_cast %91 : i32 to index
    %c0_39 = arith.constant 0 : index
    %c0_40 = arith.constant 0 : index
    %93 = vector.load %arg2[%92, %c0_39, %c0_40] : memref<8x2x128xbf16, #tpu.memory_space<vmem>>, vector<1x2x128xbf16>
    %94 = vector.shape_cast %93 : vector<1x2x128xbf16> to vector<2x128xbf16>
    %c0_41 = arith.constant 0 : index
    %c0_42 = arith.constant 0 : index
    %95 = vector.load %arg7[%c0_41, %c0_42] : memref<2x32xf32, #tpu.memory_space<vmem>>, vector<2x32xf32>
    %c0_43 = arith.constant 0 : index
    %c0_44 = arith.constant 0 : index
    %96 = vector.load %arg8[%c0_43, %c0_44] : memref<2x32xf32, #tpu.memory_space<vmem>>, vector<2x32xf32>
    %97 = arith.extf %90 : vector<2x128xbf16> to vector<2x128xf32>
    %98 = arith.truncf %95 : vector<2x32xf32> to vector<2x32xbf16>
    %cst_45 = arith.constant dense<0.000000e+00> : vector<2x128xf32>
    %99 = tpu.matmul %98, %3, %cst_45 {dimension_numbers = #tpu.dot_dimension_numbers<[1], [0], [0], [1], [0, 0, 1, 1], [], []>} : vector<2x32xbf16>, vector<32x128xbf16>, vector<2x128xf32> -> vector<2x128xf32>
    %100 = arith.addf %97, %99 : vector<2x128xf32>
    %101 = vector.extract_strided_slice %100 {offsets = [0, 0], sizes = [2, 32], strides = [1, 1]} : vector<2x128xf32> to vector<2x32xf32>
    %102 = arith.negf %101 : vector<2x32xf32>
    %103 = math.exp %102 : vector<2x32xf32>
    %cst_46 = arith.constant 1.000000e+00 : f32
    %104 = vector.broadcast %cst_46 : f32 to vector<2x32xf32>
    %105 = arith.addf %104, %103 : vector<2x32xf32>
    %106 = arith.divf %104, %105 : vector<2x32xf32>
    %107 = vector.extract_strided_slice %100 {offsets = [0, 32], sizes = [2, 32], strides = [1, 1]} : vector<2x128xf32> to vector<2x32xf32>
    %108 = arith.negf %107 : vector<2x32xf32>
    %109 = math.exp %108 : vector<2x32xf32>
    %cst_47 = arith.constant 1.000000e+00 : f32
    %110 = vector.broadcast %cst_47 : f32 to vector<2x32xf32>
    %111 = arith.addf %110, %109 : vector<2x32xf32>
    %112 = arith.divf %110, %111 : vector<2x32xf32>
    %113 = vector.extract_strided_slice %100 {offsets = [0, 64], sizes = [2, 32], strides = [1, 1]} : vector<2x128xf32> to vector<2x32xf32>
    %114 = math.tanh %113 : vector<2x32xf32>
    %115 = vector.extract_strided_slice %100 {offsets = [0, 96], sizes = [2, 32], strides = [1, 1]} : vector<2x128xf32> to vector<2x32xf32>
    %116 = arith.negf %115 : vector<2x32xf32>
    %117 = math.exp %116 : vector<2x32xf32>
    %cst_48 = arith.constant 1.000000e+00 : f32
    %118 = vector.broadcast %cst_48 : f32 to vector<2x32xf32>
    %119 = arith.addf %118, %117 : vector<2x32xf32>
    %120 = arith.divf %118, %119 : vector<2x32xf32>
    %121 = arith.mulf %112, %96 : vector<2x32xf32>
    %122 = arith.mulf %106, %114 : vector<2x32xf32>
    %123 = arith.addf %121, %122 : vector<2x32xf32>
    %124 = math.tanh %123 : vector<2x32xf32>
    %125 = arith.mulf %120, %124 : vector<2x32xf32>
    %c0_49 = arith.constant 0 : index
    %c0_50 = arith.constant 0 : index
    %126 = vector.load %arg7[%c0_49, %c0_50] : memref<2x32xf32, #tpu.memory_space<vmem>>, vector<2x32xf32>
    tpu.vector_store %arg7[%c0_49, %c0_50], %125 {strides = array<i32>} : memref<2x32xf32, #tpu.memory_space<vmem>>, vector<2x32xf32>,
    %c0_51 = arith.constant 0 : index
    %c0_52 = arith.constant 0 : index
    %127 = vector.load %arg8[%c0_51, %c0_52] : memref<2x32xf32, #tpu.memory_space<vmem>>, vector<2x32xf32>
    tpu.vector_store %arg8[%c0_51, %c0_52], %123 {strides = array<i32>} : memref<2x32xf32, #tpu.memory_space<vmem>>, vector<2x32xf32>,
    %128 = arith.truncf %125 : vector<2x32xf32> to vector<2x32xbf16>
    %129 = arith.index_cast %c1_i32 : i32 to index
    %c0_53 = arith.constant 0 : index
    %c0_54 = arith.constant 0 : index
    %130 = vector.load %arg5[%129, %c0_53, %c0_54] : memref<8x2x32xbf16, #tpu.memory_space<vmem>>, vector<1x2x32xbf16>
    %131 = vector.shape_cast %130 : vector<1x2x32xbf16> to vector<2x32xbf16>
    %132 = vector.shape_cast %128 : vector<2x32xbf16> to vector<1x2x32xbf16>
    tpu.vector_store %arg5[%129, %c0_53, %c0_54], %132 {strides = array<i32>} : memref<8x2x32xbf16, #tpu.memory_space<vmem>>, vector<1x2x32xbf16>,
    %c0_55 = arith.constant 0 : index
    %c0_56 = arith.constant 0 : index
    %133 = vector.load %arg9[%c0_55, %c0_56] : memref<2x32xf32, #tpu.memory_space<vmem>>, vector<2x32xf32>
    %c0_57 = arith.constant 0 : index
    %c0_58 = arith.constant 0 : index
    %134 = vector.load %arg10[%c0_57, %c0_58] : memref<2x32xf32, #tpu.memory_space<vmem>>, vector<2x32xf32>
    %135 = arith.extf %94 : vector<2x128xbf16> to vector<2x128xf32>
    %136 = arith.truncf %133 : vector<2x32xf32> to vector<2x32xbf16>
    %cst_59 = arith.constant dense<0.000000e+00> : vector<2x128xf32>
    %137 = tpu.matmul %136, %4, %cst_59 {dimension_numbers = #tpu.dot_dimension_numbers<[1], [0], [0], [1], [0, 0, 1, 1], [], []>} : vector<2x32xbf16>, vector<32x128xbf16>, vector<2x128xf32> -> vector<2x128xf32>
    %138 = arith.addf %135, %137 : vector<2x128xf32>
    %139 = vector.extract_strided_slice %138 {offsets = [0, 0], sizes = [2, 32], strides = [1, 1]} : vector<2x128xf32> to vector<2x32xf32>
    %140 = arith.negf %139 : vector<2x32xf32>
    %141 = math.exp %140 : vector<2x32xf32>
    %cst_60 = arith.constant 1.000000e+00 : f32
    %142 = vector.broadcast %cst_60 : f32 to vector<2x32xf32>
    %143 = arith.addf %142, %141 : vector<2x32xf32>
    %144 = arith.divf %142, %143 : vector<2x32xf32>
    %145 = vector.extract_strided_slice %138 {offsets = [0, 32], sizes = [2, 32], strides = [1, 1]} : vector<2x128xf32> to vector<2x32xf32>
    %146 = arith.negf %145 : vector<2x32xf32>
    %147 = math.exp %146 : vector<2x32xf32>
    %cst_61 = arith.constant 1.000000e+00 : f32
    %148 = vector.broadcast %cst_61 : f32 to vector<2x32xf32>
    %149 = arith.addf %148, %147 : vector<2x32xf32>
    %150 = arith.divf %148, %149 : vector<2x32xf32>
    %151 = vector.extract_strided_slice %138 {offsets = [0, 64], sizes = [2, 32], strides = [1, 1]} : vector<2x128xf32> to vector<2x32xf32>
    %152 = math.tanh %151 : vector<2x32xf32>
    %153 = vector.extract_strided_slice %138 {offsets = [0, 96], sizes = [2, 32], strides = [1, 1]} : vector<2x128xf32> to vector<2x32xf32>
    %154 = arith.negf %153 : vector<2x32xf32>
    %155 = math.exp %154 : vector<2x32xf32>
    %cst_62 = arith.constant 1.000000e+00 : f32
    %156 = vector.broadcast %cst_62 : f32 to vector<2x32xf32>
    %157 = arith.addf %156, %155 : vector<2x32xf32>
    %158 = arith.divf %156, %157 : vector<2x32xf32>
    %159 = arith.mulf %150, %134 : vector<2x32xf32>
    %160 = arith.mulf %144, %152 : vector<2x32xf32>
    %161 = arith.addf %159, %160 : vector<2x32xf32>
    %162 = math.tanh %161 : vector<2x32xf32>
    %163 = arith.mulf %158, %162 : vector<2x32xf32>
    %c0_63 = arith.constant 0 : index
    %c0_64 = arith.constant 0 : index
    %164 = vector.load %arg9[%c0_63, %c0_64] : memref<2x32xf32, #tpu.memory_space<vmem>>, vector<2x32xf32>
    tpu.vector_store %arg9[%c0_63, %c0_64], %163 {strides = array<i32>} : memref<2x32xf32, #tpu.memory_space<vmem>>, vector<2x32xf32>,
    %c0_65 = arith.constant 0 : index
    %c0_66 = arith.constant 0 : index
    %165 = vector.load %arg10[%c0_65, %c0_66] : memref<2x32xf32, #tpu.memory_space<vmem>>, vector<2x32xf32>
    tpu.vector_store %arg10[%c0_65, %c0_66], %161 {strides = array<i32>} : memref<2x32xf32, #tpu.memory_space<vmem>>, vector<2x32xf32>,
    %166 = arith.truncf %163 : vector<2x32xf32> to vector<2x32xbf16>
    %167 = arith.index_cast %91 : i32 to index
    %c0_67 = arith.constant 0 : index
    %c0_68 = arith.constant 0 : index
    %168 = vector.load %arg6[%167, %c0_67, %c0_68] : memref<8x2x32xbf16, #tpu.memory_space<vmem>>, vector<1x2x32xbf16>
    %169 = vector.shape_cast %168 : vector<1x2x32xbf16> to vector<2x32xbf16>
    %170 = vector.shape_cast %166 : vector<2x32xbf16> to vector<1x2x32xbf16>
    tpu.vector_store %arg6[%167, %c0_67, %c0_68], %170 {strides = array<i32>} : memref<8x2x32xbf16, #tpu.memory_space<vmem>>, vector<1x2x32xbf16>,
    %c2_i32 = arith.constant 2 : i32
    %171 = arith.index_cast %c2_i32 : i32 to index
    %c0_69 = arith.constant 0 : index
    %c0_70 = arith.constant 0 : index
    %172 = vector.load %arg1[%171, %c0_69, %c0_70] : memref<8x2x128xbf16, #tpu.memory_space<vmem>>, vector<1x2x128xbf16>
    %173 = vector.shape_cast %172 : vector<1x2x128xbf16> to vector<2x128xbf16>
    %c7_i32_71 = arith.constant 7 : i32
    %174 = arith.subi %c7_i32_71, %c2_i32 : i32
    %175 = arith.index_cast %174 : i32 to index
    %c0_72 = arith.constant 0 : index
    %c0_73 = arith.constant 0 : index
    %176 = vector.load %arg2[%175, %c0_72, %c0_73] : memref<8x2x128xbf16, #tpu.memory_space<vmem>>, vector<1x2x128xbf16>
    %177 = vector.shape_cast %176 : vector<1x2x128xbf16> to vector<2x128xbf16>
    %c0_74 = arith.constant 0 : index
    %c0_75 = arith.constant 0 : index
    %178 = vector.load %arg7[%c0_74, %c0_75] : memref<2x32xf32, #tpu.memory_space<vmem>>, vector<2x32xf32>
    %c0_76 = arith.constant 0 : index
    %c0_77 = arith.constant 0 : index
    %179 = vector.load %arg8[%c0_76, %c0_77] : memref<2x32xf32, #tpu.memory_space<vmem>>, vector<2x32xf32>
    %180 = arith.extf %173 : vector<2x128xbf16> to vector<2x128xf32>
    %181 = arith.truncf %178 : vector<2x32xf32> to vector<2x32xbf16>
    %cst_78 = arith.constant dense<0.000000e+00> : vector<2x128xf32>
    %182 = tpu.matmul %181, %3, %cst_78 {dimension_numbers = #tpu.dot_dimension_numbers<[1], [0], [0], [1], [0, 0, 1, 1], [], []>} : vector<2x32xbf16>, vector<32x128xbf16>, vector<2x128xf32> -> vector<2x128xf32>
    %183 = arith.addf %180, %182 : vector<2x128xf32>
    %184 = vector.extract_strided_slice %183 {offsets = [0, 0], sizes = [2, 32], strides = [1, 1]} : vector<2x128xf32> to vector<2x32xf32>
    %185 = arith.negf %184 : vector<2x32xf32>
    %186 = math.exp %185 : vector<2x32xf32>
    %cst_79 = arith.constant 1.000000e+00 : f32
    %187 = vector.broadcast %cst_79 : f32 to vector<2x32xf32>
    %188 = arith.addf %187, %186 : vector<2x32xf32>
    %189 = arith.divf %187, %188 : vector<2x32xf32>
    %190 = vector.extract_strided_slice %183 {offsets = [0, 32], sizes = [2, 32], strides = [1, 1]} : vector<2x128xf32> to vector<2x32xf32>
    %191 = arith.negf %190 : vector<2x32xf32>
    %192 = math.exp %191 : vector<2x32xf32>
    %cst_80 = arith.constant 1.000000e+00 : f32
    %193 = vector.broadcast %cst_80 : f32 to vector<2x32xf32>
    %194 = arith.addf %193, %192 : vector<2x32xf32>
    %195 = arith.divf %193, %194 : vector<2x32xf32>
    %196 = vector.extract_strided_slice %183 {offsets = [0, 64], sizes = [2, 32], strides = [1, 1]} : vector<2x128xf32> to vector<2x32xf32>
    %197 = math.tanh %196 : vector<2x32xf32>
    %198 = vector.extract_strided_slice %183 {offsets = [0, 96], sizes = [2, 32], strides = [1, 1]} : vector<2x128xf32> to vector<2x32xf32>
    %199 = arith.negf %198 : vector<2x32xf32>
    %200 = math.exp %199 : vector<2x32xf32>
    %cst_81 = arith.constant 1.000000e+00 : f32
    %201 = vector.broadcast %cst_81 : f32 to vector<2x32xf32>
    %202 = arith.addf %201, %200 : vector<2x32xf32>
    %203 = arith.divf %201, %202 : vector<2x32xf32>
    %204 = arith.mulf %195, %179 : vector<2x32xf32>
    %205 = arith.mulf %189, %197 : vector<2x32xf32>
    %206 = arith.addf %204, %205 : vector<2x32xf32>
    %207 = math.tanh %206 : vector<2x32xf32>
    %208 = arith.mulf %203, %207 : vector<2x32xf32>
    %c0_82 = arith.constant 0 : index
    %c0_83 = arith.constant 0 : index
    %209 = vector.load %arg7[%c0_82, %c0_83] : memref<2x32xf32, #tpu.memory_space<vmem>>, vector<2x32xf32>
    tpu.vector_store %arg7[%c0_82, %c0_83], %208 {strides = array<i32>} : memref<2x32xf32, #tpu.memory_space<vmem>>, vector<2x32xf32>,
    %c0_84 = arith.constant 0 : index
    %c0_85 = arith.constant 0 : index
    %210 = vector.load %arg8[%c0_84, %c0_85] : memref<2x32xf32, #tpu.memory_space<vmem>>, vector<2x32xf32>
    tpu.vector_store %arg8[%c0_84, %c0_85], %206 {strides = array<i32>} : memref<2x32xf32, #tpu.memory_space<vmem>>, vector<2x32xf32>,
    %211 = arith.truncf %208 : vector<2x32xf32> to vector<2x32xbf16>
    %212 = arith.index_cast %c2_i32 : i32 to index
    %c0_86 = arith.constant 0 : index
    %c0_87 = arith.constant 0 : index
    %213 = vector.load %arg5[%212, %c0_86, %c0_87] : memref<8x2x32xbf16, #tpu.memory_space<vmem>>, vector<1x2x32xbf16>
    %214 = vector.shape_cast %213 : vector<1x2x32xbf16> to vector<2x32xbf16>
    %215 = vector.shape_cast %211 : vector<2x32xbf16> to vector<1x2x32xbf16>
    tpu.vector_store %arg5[%212, %c0_86, %c0_87], %215 {strides = array<i32>} : memref<8x2x32xbf16, #tpu.memory_space<vmem>>, vector<1x2x32xbf16>,
    %c0_88 = arith.constant 0 : index
    %c0_89 = arith.constant 0 : index
    %216 = vector.load %arg9[%c0_88, %c0_89] : memref<2x32xf32, #tpu.memory_space<vmem>>, vector<2x32xf32>
    %c0_90 = arith.constant 0 : index
    %c0_91 = arith.constant 0 : index
    %217 = vector.load %arg10[%c0_90, %c0_91] : memref<2x32xf32, #tpu.memory_space<vmem>>, vector<2x32xf32>
    %218 = arith.extf %177 : vector<2x128xbf16> to vector<2x128xf32>
    %219 = arith.truncf %216 : vector<2x32xf32> to vector<2x32xbf16>
    %cst_92 = arith.constant dense<0.000000e+00> : vector<2x128xf32>
    %220 = tpu.matmul %219, %4, %cst_92 {dimension_numbers = #tpu.dot_dimension_numbers<[1], [0], [0], [1], [0, 0, 1, 1], [], []>} : vector<2x32xbf16>, vector<32x128xbf16>, vector<2x128xf32> -> vector<2x128xf32>
    %221 = arith.addf %218, %220 : vector<2x128xf32>
    %222 = vector.extract_strided_slice %221 {offsets = [0, 0], sizes = [2, 32], strides = [1, 1]} : vector<2x128xf32> to vector<2x32xf32>
    %223 = arith.negf %222 : vector<2x32xf32>
    %224 = math.exp %223 : vector<2x32xf32>
    %cst_93 = arith.constant 1.000000e+00 : f32
    %225 = vector.broadcast %cst_93 : f32 to vector<2x32xf32>
    %226 = arith.addf %225, %224 : vector<2x32xf32>
    %227 = arith.divf %225, %226 : vector<2x32xf32>
    %228 = vector.extract_strided_slice %221 {offsets = [0, 32], sizes = [2, 32], strides = [1, 1]} : vector<2x128xf32> to vector<2x32xf32>
    %229 = arith.negf %228 : vector<2x32xf32>
    %230 = math.exp %229 : vector<2x32xf32>
    %cst_94 = arith.constant 1.000000e+00 : f32
    %231 = vector.broadcast %cst_94 : f32 to vector<2x32xf32>
    %232 = arith.addf %231, %230 : vector<2x32xf32>
    %233 = arith.divf %231, %232 : vector<2x32xf32>
    %234 = vector.extract_strided_slice %221 {offsets = [0, 64], sizes = [2, 32], strides = [1, 1]} : vector<2x128xf32> to vector<2x32xf32>
    %235 = math.tanh %234 : vector<2x32xf32>
    %236 = vector.extract_strided_slice %221 {offsets = [0, 96], sizes = [2, 32], strides = [1, 1]} : vector<2x128xf32> to vector<2x32xf32>
    %237 = arith.negf %236 : vector<2x32xf32>
    %238 = math.exp %237 : vector<2x32xf32>
    %cst_95 = arith.constant 1.000000e+00 : f32
    %239 = vector.broadcast %cst_95 : f32 to vector<2x32xf32>
    %240 = arith.addf %239, %238 : vector<2x32xf32>
    %241 = arith.divf %239, %240 : vector<2x32xf32>
    %242 = arith.mulf %233, %217 : vector<2x32xf32>
    %243 = arith.mulf %227, %235 : vector<2x32xf32>
    %244 = arith.addf %242, %243 : vector<2x32xf32>
    %245 = math.tanh %244 : vector<2x32xf32>
    %246 = arith.mulf %241, %245 : vector<2x32xf32>
    %c0_96 = arith.constant 0 : index
    %c0_97 = arith.constant 0 : index
    %247 = vector.load %arg9[%c0_96, %c0_97] : memref<2x32xf32, #tpu.memory_space<vmem>>, vector<2x32xf32>
    tpu.vector_store %arg9[%c0_96, %c0_97], %246 {strides = array<i32>} : memref<2x32xf32, #tpu.memory_space<vmem>>, vector<2x32xf32>,
    %c0_98 = arith.constant 0 : index
    %c0_99 = arith.constant 0 : index
    %248 = vector.load %arg10[%c0_98, %c0_99] : memref<2x32xf32, #tpu.memory_space<vmem>>, vector<2x32xf32>
    tpu.vector_store %arg10[%c0_98, %c0_99], %244 {strides = array<i32>} : memref<2x32xf32, #tpu.memory_space<vmem>>, vector<2x32xf32>,
    %249 = arith.truncf %246 : vector<2x32xf32> to vector<2x32xbf16>
    %250 = arith.index_cast %174 : i32 to index
    %c0_100 = arith.constant 0 : index
    %c0_101 = arith.constant 0 : index
    %251 = vector.load %arg6[%250, %c0_100, %c0_101] : memref<8x2x32xbf16, #tpu.memory_space<vmem>>, vector<1x2x32xbf16>
    %252 = vector.shape_cast %251 : vector<1x2x32xbf16> to vector<2x32xbf16>
    %253 = vector.shape_cast %249 : vector<2x32xbf16> to vector<1x2x32xbf16>
    tpu.vector_store %arg6[%250, %c0_100, %c0_101], %253 {strides = array<i32>} : memref<8x2x32xbf16, #tpu.memory_space<vmem>>, vector<1x2x32xbf16>,
    %c3_i32 = arith.constant 3 : i32
    %254 = arith.index_cast %c3_i32 : i32 to index
    %c0_102 = arith.constant 0 : index
    %c0_103 = arith.constant 0 : index
    %255 = vector.load %arg1[%254, %c0_102, %c0_103] : memref<8x2x128xbf16, #tpu.memory_space<vmem>>, vector<1x2x128xbf16>
    %256 = vector.shape_cast %255 : vector<1x2x128xbf16> to vector<2x128xbf16>
    %c7_i32_104 = arith.constant 7 : i32
    %257 = arith.subi %c7_i32_104, %c3_i32 : i32
    %258 = arith.index_cast %257 : i32 to index
    %c0_105 = arith.constant 0 : index
    %c0_106 = arith.constant 0 : index
    %259 = vector.load %arg2[%258, %c0_105, %c0_106] : memref<8x2x128xbf16, #tpu.memory_space<vmem>>, vector<1x2x128xbf16>
    %260 = vector.shape_cast %259 : vector<1x2x128xbf16> to vector<2x128xbf16>
    %c0_107 = arith.constant 0 : index
    %c0_108 = arith.constant 0 : index
    %261 = vector.load %arg7[%c0_107, %c0_108] : memref<2x32xf32, #tpu.memory_space<vmem>>, vector<2x32xf32>
    %c0_109 = arith.constant 0 : index
    %c0_110 = arith.constant 0 : index
    %262 = vector.load %arg8[%c0_109, %c0_110] : memref<2x32xf32, #tpu.memory_space<vmem>>, vector<2x32xf32>
    %263 = arith.extf %256 : vector<2x128xbf16> to vector<2x128xf32>
    %264 = arith.truncf %261 : vector<2x32xf32> to vector<2x32xbf16>
    %cst_111 = arith.constant dense<0.000000e+00> : vector<2x128xf32>
    %265 = tpu.matmul %264, %3, %cst_111 {dimension_numbers = #tpu.dot_dimension_numbers<[1], [0], [0], [1], [0, 0, 1, 1], [], []>} : vector<2x32xbf16>, vector<32x128xbf16>, vector<2x128xf32> -> vector<2x128xf32>
    %266 = arith.addf %263, %265 : vector<2x128xf32>
    %267 = vector.extract_strided_slice %266 {offsets = [0, 0], sizes = [2, 32], strides = [1, 1]} : vector<2x128xf32> to vector<2x32xf32>
    %268 = arith.negf %267 : vector<2x32xf32>
    %269 = math.exp %268 : vector<2x32xf32>
    %cst_112 = arith.constant 1.000000e+00 : f32
    %270 = vector.broadcast %cst_112 : f32 to vector<2x32xf32>
    %271 = arith.addf %270, %269 : vector<2x32xf32>
    %272 = arith.divf %270, %271 : vector<2x32xf32>
    %273 = vector.extract_strided_slice %266 {offsets = [0, 32], sizes = [2, 32], strides = [1, 1]} : vector<2x128xf32> to vector<2x32xf32>
    %274 = arith.negf %273 : vector<2x32xf32>
    %275 = math.exp %274 : vector<2x32xf32>
    %cst_113 = arith.constant 1.000000e+00 : f32
    %276 = vector.broadcast %cst_113 : f32 to vector<2x32xf32>
    %277 = arith.addf %276, %275 : vector<2x32xf32>
    %278 = arith.divf %276, %277 : vector<2x32xf32>
    %279 = vector.extract_strided_slice %266 {offsets = [0, 64], sizes = [2, 32], strides = [1, 1]} : vector<2x128xf32> to vector<2x32xf32>
    %280 = math.tanh %279 : vector<2x32xf32>
    %281 = vector.extract_strided_slice %266 {offsets = [0, 96], sizes = [2, 32], strides = [1, 1]} : vector<2x128xf32> to vector<2x32xf32>
    %282 = arith.negf %281 : vector<2x32xf32>
    %283 = math.exp %282 : vector<2x32xf32>
    %cst_114 = arith.constant 1.000000e+00 : f32
    %284 = vector.broadcast %cst_114 : f32 to vector<2x32xf32>
    %285 = arith.addf %284, %283 : vector<2x32xf32>
    %286 = arith.divf %284, %285 : vector<2x32xf32>
    %287 = arith.mulf %278, %262 : vector<2x32xf32>
    %288 = arith.mulf %272, %280 : vector<2x32xf32>
    %289 = arith.addf %287, %288 : vector<2x32xf32>
    %290 = math.tanh %289 : vector<2x32xf32>
    %291 = arith.mulf %286, %290 : vector<2x32xf32>
    %c0_115 = arith.constant 0 : index
    %c0_116 = arith.constant 0 : index
    %292 = vector.load %arg7[%c0_115, %c0_116] : memref<2x32xf32, #tpu.memory_space<vmem>>, vector<2x32xf32>
    tpu.vector_store %arg7[%c0_115, %c0_116], %291 {strides = array<i32>} : memref<2x32xf32, #tpu.memory_space<vmem>>, vector<2x32xf32>,
    %c0_117 = arith.constant 0 : index
    %c0_118 = arith.constant 0 : index
    %293 = vector.load %arg8[%c0_117, %c0_118] : memref<2x32xf32, #tpu.memory_space<vmem>>, vector<2x32xf32>
    tpu.vector_store %arg8[%c0_117, %c0_118], %289 {strides = array<i32>} : memref<2x32xf32, #tpu.memory_space<vmem>>, vector<2x32xf32>,
    %294 = arith.truncf %291 : vector<2x32xf32> to vector<2x32xbf16>
    %295 = arith.index_cast %c3_i32 : i32 to index
    %c0_119 = arith.constant 0 : index
    %c0_120 = arith.constant 0 : index
    %296 = vector.load %arg5[%295, %c0_119, %c0_120] : memref<8x2x32xbf16, #tpu.memory_space<vmem>>, vector<1x2x32xbf16>
    %297 = vector.shape_cast %296 : vector<1x2x32xbf16> to vector<2x32xbf16>
    %298 = vector.shape_cast %294 : vector<2x32xbf16> to vector<1x2x32xbf16>
    tpu.vector_store %arg5[%295, %c0_119, %c0_120], %298 {strides = array<i32>} : memref<8x2x32xbf16, #tpu.memory_space<vmem>>, vector<1x2x32xbf16>,
    %c0_121 = arith.constant 0 : index
    %c0_122 = arith.constant 0 : index
    %299 = vector.load %arg9[%c0_121, %c0_122] : memref<2x32xf32, #tpu.memory_space<vmem>>, vector<2x32xf32>
    %c0_123 = arith.constant 0 : index
    %c0_124 = arith.constant 0 : index
    %300 = vector.load %arg10[%c0_123, %c0_124] : memref<2x32xf32, #tpu.memory_space<vmem>>, vector<2x32xf32>
    %301 = arith.extf %260 : vector<2x128xbf16> to vector<2x128xf32>
    %302 = arith.truncf %299 : vector<2x32xf32> to vector<2x32xbf16>
    %cst_125 = arith.constant dense<0.000000e+00> : vector<2x128xf32>
    %303 = tpu.matmul %302, %4, %cst_125 {dimension_numbers = #tpu.dot_dimension_numbers<[1], [0], [0], [1], [0, 0, 1, 1], [], []>} : vector<2x32xbf16>, vector<32x128xbf16>, vector<2x128xf32> -> vector<2x128xf32>
    %304 = arith.addf %301, %303 : vector<2x128xf32>
    %305 = vector.extract_strided_slice %304 {offsets = [0, 0], sizes = [2, 32], strides = [1, 1]} : vector<2x128xf32> to vector<2x32xf32>
    %306 = arith.negf %305 : vector<2x32xf32>
    %307 = math.exp %306 : vector<2x32xf32>
    %cst_126 = arith.constant 1.000000e+00 : f32
    %308 = vector.broadcast %cst_126 : f32 to vector<2x32xf32>
    %309 = arith.addf %308, %307 : vector<2x32xf32>
    %310 = arith.divf %308, %309 : vector<2x32xf32>
    %311 = vector.extract_strided_slice %304 {offsets = [0, 32], sizes = [2, 32], strides = [1, 1]} : vector<2x128xf32> to vector<2x32xf32>
    %312 = arith.negf %311 : vector<2x32xf32>
    %313 = math.exp %312 : vector<2x32xf32>
    %cst_127 = arith.constant 1.000000e+00 : f32
    %314 = vector.broadcast %cst_127 : f32 to vector<2x32xf32>
    %315 = arith.addf %314, %313 : vector<2x32xf32>
    %316 = arith.divf %314, %315 : vector<2x32xf32>
    %317 = vector.extract_strided_slice %304 {offsets = [0, 64], sizes = [2, 32], strides = [1, 1]} : vector<2x128xf32> to vector<2x32xf32>
    %318 = math.tanh %317 : vector<2x32xf32>
    %319 = vector.extract_strided_slice %304 {offsets = [0, 96], sizes = [2, 32], strides = [1, 1]} : vector<2x128xf32> to vector<2x32xf32>
    %320 = arith.negf %319 : vector<2x32xf32>
    %321 = math.exp %320 : vector<2x32xf32>
    %cst_128 = arith.constant 1.000000e+00 : f32
    %322 = vector.broadcast %cst_128 : f32 to vector<2x32xf32>
    %323 = arith.addf %322, %321 : vector<2x32xf32>
    %324 = arith.divf %322, %323 : vector<2x32xf32>
    %325 = arith.mulf %316, %300 : vector<2x32xf32>
    %326 = arith.mulf %310, %318 : vector<2x32xf32>
    %327 = arith.addf %325, %326 : vector<2x32xf32>
    %328 = math.tanh %327 : vector<2x32xf32>
    %329 = arith.mulf %324, %328 : vector<2x32xf32>
    %c0_129 = arith.constant 0 : index
    %c0_130 = arith.constant 0 : index
    %330 = vector.load %arg9[%c0_129, %c0_130] : memref<2x32xf32, #tpu.memory_space<vmem>>, vector<2x32xf32>
    tpu.vector_store %arg9[%c0_129, %c0_130], %329 {strides = array<i32>} : memref<2x32xf32, #tpu.memory_space<vmem>>, vector<2x32xf32>,
    %c0_131 = arith.constant 0 : index
    %c0_132 = arith.constant 0 : index
    %331 = vector.load %arg10[%c0_131, %c0_132] : memref<2x32xf32, #tpu.memory_space<vmem>>, vector<2x32xf32>
    tpu.vector_store %arg10[%c0_131, %c0_132], %327 {strides = array<i32>} : memref<2x32xf32, #tpu.memory_space<vmem>>, vector<2x32xf32>,
    %332 = arith.truncf %329 : vector<2x32xf32> to vector<2x32xbf16>
    %333 = arith.index_cast %257 : i32 to index
    %c0_133 = arith.constant 0 : index
    %c0_134 = arith.constant 0 : index
    %334 = vector.load %arg6[%333, %c0_133, %c0_134] : memref<8x2x32xbf16, #tpu.memory_space<vmem>>, vector<1x2x32xbf16>
    %335 = vector.shape_cast %334 : vector<1x2x32xbf16> to vector<2x32xbf16>
    %336 = vector.shape_cast %332 : vector<2x32xbf16> to vector<1x2x32xbf16>
    tpu.vector_store %arg6[%333, %c0_133, %c0_134], %336 {strides = array<i32>} : memref<8x2x32xbf16, #tpu.memory_space<vmem>>, vector<1x2x32xbf16>,
    %c4_i32 = arith.constant 4 : i32
    %337 = arith.index_cast %c4_i32 : i32 to index
    %c0_135 = arith.constant 0 : index
    %c0_136 = arith.constant 0 : index
    %338 = vector.load %arg1[%337, %c0_135, %c0_136] : memref<8x2x128xbf16, #tpu.memory_space<vmem>>, vector<1x2x128xbf16>
    %339 = vector.shape_cast %338 : vector<1x2x128xbf16> to vector<2x128xbf16>
    %c7_i32_137 = arith.constant 7 : i32
    %340 = arith.subi %c7_i32_137, %c4_i32 : i32
    %341 = arith.index_cast %340 : i32 to index
    %c0_138 = arith.constant 0 : index
    %c0_139 = arith.constant 0 : index
    %342 = vector.load %arg2[%341, %c0_138, %c0_139] : memref<8x2x128xbf16, #tpu.memory_space<vmem>>, vector<1x2x128xbf16>
    %343 = vector.shape_cast %342 : vector<1x2x128xbf16> to vector<2x128xbf16>
    %c0_140 = arith.constant 0 : index
    %c0_141 = arith.constant 0 : index
    %344 = vector.load %arg7[%c0_140, %c0_141] : memref<2x32xf32, #tpu.memory_space<vmem>>, vector<2x32xf32>
    %c0_142 = arith.constant 0 : index
    %c0_143 = arith.constant 0 : index
    %345 = vector.load %arg8[%c0_142, %c0_143] : memref<2x32xf32, #tpu.memory_space<vmem>>, vector<2x32xf32>
    %346 = arith.extf %339 : vector<2x128xbf16> to vector<2x128xf32>
    %347 = arith.truncf %344 : vector<2x32xf32> to vector<2x32xbf16>
    %cst_144 = arith.constant dense<0.000000e+00> : vector<2x128xf32>
    %348 = tpu.matmul %347, %3, %cst_144 {dimension_numbers = #tpu.dot_dimension_numbers<[1], [0], [0], [1], [0, 0, 1, 1], [], []>} : vector<2x32xbf16>, vector<32x128xbf16>, vector<2x128xf32> -> vector<2x128xf32>
    %349 = arith.addf %346, %348 : vector<2x128xf32>
    %350 = vector.extract_strided_slice %349 {offsets = [0, 0], sizes = [2, 32], strides = [1, 1]} : vector<2x128xf32> to vector<2x32xf32>
    %351 = arith.negf %350 : vector<2x32xf32>
    %352 = math.exp %351 : vector<2x32xf32>
    %cst_145 = arith.constant 1.000000e+00 : f32
    %353 = vector.broadcast %cst_145 : f32 to vector<2x32xf32>
    %354 = arith.addf %353, %352 : vector<2x32xf32>
    %355 = arith.divf %353, %354 : vector<2x32xf32>
    %356 = vector.extract_strided_slice %349 {offsets = [0, 32], sizes = [2, 32], strides = [1, 1]} : vector<2x128xf32> to vector<2x32xf32>
    %357 = arith.negf %356 : vector<2x32xf32>
    %358 = math.exp %357 : vector<2x32xf32>
    %cst_146 = arith.constant 1.000000e+00 : f32
    %359 = vector.broadcast %cst_146 : f32 to vector<2x32xf32>
    %360 = arith.addf %359, %358 : vector<2x32xf32>
    %361 = arith.divf %359, %360 : vector<2x32xf32>
    %362 = vector.extract_strided_slice %349 {offsets = [0, 64], sizes = [2, 32], strides = [1, 1]} : vector<2x128xf32> to vector<2x32xf32>
    %363 = math.tanh %362 : vector<2x32xf32>
    %364 = vector.extract_strided_slice %349 {offsets = [0, 96], sizes = [2, 32], strides = [1, 1]} : vector<2x128xf32> to vector<2x32xf32>
    %365 = arith.negf %364 : vector<2x32xf32>
    %366 = math.exp %365 : vector<2x32xf32>
    %cst_147 = arith.constant 1.000000e+00 : f32
    %367 = vector.broadcast %cst_147 : f32 to vector<2x32xf32>
    %368 = arith.addf %367, %366 : vector<2x32xf32>
    %369 = arith.divf %367, %368 : vector<2x32xf32>
    %370 = arith.mulf %361, %345 : vector<2x32xf32>
    %371 = arith.mulf %355, %363 : vector<2x32xf32>
    %372 = arith.addf %370, %371 : vector<2x32xf32>
    %373 = math.tanh %372 : vector<2x32xf32>
    %374 = arith.mulf %369, %373 : vector<2x32xf32>
    %c0_148 = arith.constant 0 : index
    %c0_149 = arith.constant 0 : index
    %375 = vector.load %arg7[%c0_148, %c0_149] : memref<2x32xf32, #tpu.memory_space<vmem>>, vector<2x32xf32>
    tpu.vector_store %arg7[%c0_148, %c0_149], %374 {strides = array<i32>} : memref<2x32xf32, #tpu.memory_space<vmem>>, vector<2x32xf32>,
    %c0_150 = arith.constant 0 : index
    %c0_151 = arith.constant 0 : index
    %376 = vector.load %arg8[%c0_150, %c0_151] : memref<2x32xf32, #tpu.memory_space<vmem>>, vector<2x32xf32>
    tpu.vector_store %arg8[%c0_150, %c0_151], %372 {strides = array<i32>} : memref<2x32xf32, #tpu.memory_space<vmem>>, vector<2x32xf32>,
    %377 = arith.truncf %374 : vector<2x32xf32> to vector<2x32xbf16>
    %378 = arith.index_cast %c4_i32 : i32 to index
    %c0_152 = arith.constant 0 : index
    %c0_153 = arith.constant 0 : index
    %379 = vector.load %arg5[%378, %c0_152, %c0_153] : memref<8x2x32xbf16, #tpu.memory_space<vmem>>, vector<1x2x32xbf16>
    %380 = vector.shape_cast %379 : vector<1x2x32xbf16> to vector<2x32xbf16>
    %381 = vector.shape_cast %377 : vector<2x32xbf16> to vector<1x2x32xbf16>
    tpu.vector_store %arg5[%378, %c0_152, %c0_153], %381 {strides = array<i32>} : memref<8x2x32xbf16, #tpu.memory_space<vmem>>, vector<1x2x32xbf16>,
    %c0_154 = arith.constant 0 : index
    %c0_155 = arith.constant 0 : index
    %382 = vector.load %arg9[%c0_154, %c0_155] : memref<2x32xf32, #tpu.memory_space<vmem>>, vector<2x32xf32>
    %c0_156 = arith.constant 0 : index
    %c0_157 = arith.constant 0 : index
    %383 = vector.load %arg10[%c0_156, %c0_157] : memref<2x32xf32, #tpu.memory_space<vmem>>, vector<2x32xf32>
    %384 = arith.extf %343 : vector<2x128xbf16> to vector<2x128xf32>
    %385 = arith.truncf %382 : vector<2x32xf32> to vector<2x32xbf16>
    %cst_158 = arith.constant dense<0.000000e+00> : vector<2x128xf32>
    %386 = tpu.matmul %385, %4, %cst_158 {dimension_numbers = #tpu.dot_dimension_numbers<[1], [0], [0], [1], [0, 0, 1, 1], [], []>} : vector<2x32xbf16>, vector<32x128xbf16>, vector<2x128xf32> -> vector<2x128xf32>
    %387 = arith.addf %384, %386 : vector<2x128xf32>
    %388 = vector.extract_strided_slice %387 {offsets = [0, 0], sizes = [2, 32], strides = [1, 1]} : vector<2x128xf32> to vector<2x32xf32>
    %389 = arith.negf %388 : vector<2x32xf32>
    %390 = math.exp %389 : vector<2x32xf32>
    %cst_159 = arith.constant 1.000000e+00 : f32
    %391 = vector.broadcast %cst_159 : f32 to vector<2x32xf32>
    %392 = arith.addf %391, %390 : vector<2x32xf32>
    %393 = arith.divf %391, %392 : vector<2x32xf32>
    %394 = vector.extract_strided_slice %387 {offsets = [0, 32], sizes = [2, 32], strides = [1, 1]} : vector<2x128xf32> to vector<2x32xf32>
    %395 = arith.negf %394 : vector<2x32xf32>
    %396 = math.exp %395 : vector<2x32xf32>
    %cst_160 = arith.constant 1.000000e+00 : f32
    %397 = vector.broadcast %cst_160 : f32 to vector<2x32xf32>
    %398 = arith.addf %397, %396 : vector<2x32xf32>
    %399 = arith.divf %397, %398 : vector<2x32xf32>
    %400 = vector.extract_strided_slice %387 {offsets = [0, 64], sizes = [2, 32], strides = [1, 1]} : vector<2x128xf32> to vector<2x32xf32>
    %401 = math.tanh %400 : vector<2x32xf32>
    %402 = vector.extract_strided_slice %387 {offsets = [0, 96], sizes = [2, 32], strides = [1, 1]} : vector<2x128xf32> to vector<2x32xf32>
    %403 = arith.negf %402 : vector<2x32xf32>
    %404 = math.exp %403 : vector<2x32xf32>
    %cst_161 = arith.constant 1.000000e+00 : f32
    %405 = vector.broadcast %cst_161 : f32 to vector<2x32xf32>
    %406 = arith.addf %405, %404 : vector<2x32xf32>
    %407 = arith.divf %405, %406 : vector<2x32xf32>
    %408 = arith.mulf %399, %383 : vector<2x32xf32>
    %409 = arith.mulf %393, %401 : vector<2x32xf32>
    %410 = arith.addf %408, %409 : vector<2x32xf32>
    %411 = math.tanh %410 : vector<2x32xf32>
    %412 = arith.mulf %407, %411 : vector<2x32xf32>
    %c0_162 = arith.constant 0 : index
    %c0_163 = arith.constant 0 : index
    %413 = vector.load %arg9[%c0_162, %c0_163] : memref<2x32xf32, #tpu.memory_space<vmem>>, vector<2x32xf32>
    tpu.vector_store %arg9[%c0_162, %c0_163], %412 {strides = array<i32>} : memref<2x32xf32, #tpu.memory_space<vmem>>, vector<2x32xf32>,
    %c0_164 = arith.constant 0 : index
    %c0_165 = arith.constant 0 : index
    %414 = vector.load %arg10[%c0_164, %c0_165] : memref<2x32xf32, #tpu.memory_space<vmem>>, vector<2x32xf32>
    tpu.vector_store %arg10[%c0_164, %c0_165], %410 {strides = array<i32>} : memref<2x32xf32, #tpu.memory_space<vmem>>, vector<2x32xf32>,
    %415 = arith.truncf %412 : vector<2x32xf32> to vector<2x32xbf16>
    %416 = arith.index_cast %340 : i32 to index
    %c0_166 = arith.constant 0 : index
    %c0_167 = arith.constant 0 : index
    %417 = vector.load %arg6[%416, %c0_166, %c0_167] : memref<8x2x32xbf16, #tpu.memory_space<vmem>>, vector<1x2x32xbf16>
    %418 = vector.shape_cast %417 : vector<1x2x32xbf16> to vector<2x32xbf16>
    %419 = vector.shape_cast %415 : vector<2x32xbf16> to vector<1x2x32xbf16>
    tpu.vector_store %arg6[%416, %c0_166, %c0_167], %419 {strides = array<i32>} : memref<8x2x32xbf16, #tpu.memory_space<vmem>>, vector<1x2x32xbf16>,
    %c5_i32 = arith.constant 5 : i32
    %420 = arith.index_cast %c5_i32 : i32 to index
    %c0_168 = arith.constant 0 : index
    %c0_169 = arith.constant 0 : index
    %421 = vector.load %arg1[%420, %c0_168, %c0_169] : memref<8x2x128xbf16, #tpu.memory_space<vmem>>, vector<1x2x128xbf16>
    %422 = vector.shape_cast %421 : vector<1x2x128xbf16> to vector<2x128xbf16>
    %c7_i32_170 = arith.constant 7 : i32
    %423 = arith.subi %c7_i32_170, %c5_i32 : i32
    %424 = arith.index_cast %423 : i32 to index
    %c0_171 = arith.constant 0 : index
    %c0_172 = arith.constant 0 : index
    %425 = vector.load %arg2[%424, %c0_171, %c0_172] : memref<8x2x128xbf16, #tpu.memory_space<vmem>>, vector<1x2x128xbf16>
    %426 = vector.shape_cast %425 : vector<1x2x128xbf16> to vector<2x128xbf16>
    %c0_173 = arith.constant 0 : index
    %c0_174 = arith.constant 0 : index
    %427 = vector.load %arg7[%c0_173, %c0_174] : memref<2x32xf32, #tpu.memory_space<vmem>>, vector<2x32xf32>
    %c0_175 = arith.constant 0 : index
    %c0_176 = arith.constant 0 : index
    %428 = vector.load %arg8[%c0_175, %c0_176] : memref<2x32xf32, #tpu.memory_space<vmem>>, vector<2x32xf32>
    %429 = arith.extf %422 : vector<2x128xbf16> to vector<2x128xf32>
    %430 = arith.truncf %427 : vector<2x32xf32> to vector<2x32xbf16>
    %cst_177 = arith.constant dense<0.000000e+00> : vector<2x128xf32>
    %431 = tpu.matmul %430, %3, %cst_177 {dimension_numbers = #tpu.dot_dimension_numbers<[1], [0], [0], [1], [0, 0, 1, 1], [], []>} : vector<2x32xbf16>, vector<32x128xbf16>, vector<2x128xf32> -> vector<2x128xf32>
    %432 = arith.addf %429, %431 : vector<2x128xf32>
    %433 = vector.extract_strided_slice %432 {offsets = [0, 0], sizes = [2, 32], strides = [1, 1]} : vector<2x128xf32> to vector<2x32xf32>
    %434 = arith.negf %433 : vector<2x32xf32>
    %435 = math.exp %434 : vector<2x32xf32>
    %cst_178 = arith.constant 1.000000e+00 : f32
    %436 = vector.broadcast %cst_178 : f32 to vector<2x32xf32>
    %437 = arith.addf %436, %435 : vector<2x32xf32>
    %438 = arith.divf %436, %437 : vector<2x32xf32>
    %439 = vector.extract_strided_slice %432 {offsets = [0, 32], sizes = [2, 32], strides = [1, 1]} : vector<2x128xf32> to vector<2x32xf32>
    %440 = arith.negf %439 : vector<2x32xf32>
    %441 = math.exp %440 : vector<2x32xf32>
    %cst_179 = arith.constant 1.000000e+00 : f32
    %442 = vector.broadcast %cst_179 : f32 to vector<2x32xf32>
    %443 = arith.addf %442, %441 : vector<2x32xf32>
    %444 = arith.divf %442, %443 : vector<2x32xf32>
    %445 = vector.extract_strided_slice %432 {offsets = [0, 64], sizes = [2, 32], strides = [1, 1]} : vector<2x128xf32> to vector<2x32xf32>
    %446 = math.tanh %445 : vector<2x32xf32>
    %447 = vector.extract_strided_slice %432 {offsets = [0, 96], sizes = [2, 32], strides = [1, 1]} : vector<2x128xf32> to vector<2x32xf32>
    %448 = arith.negf %447 : vector<2x32xf32>
    %449 = math.exp %448 : vector<2x32xf32>
    %cst_180 = arith.constant 1.000000e+00 : f32
    %450 = vector.broadcast %cst_180 : f32 to vector<2x32xf32>
    %451 = arith.addf %450, %449 : vector<2x32xf32>
    %452 = arith.divf %450, %451 : vector<2x32xf32>
    %453 = arith.mulf %444, %428 : vector<2x32xf32>
    %454 = arith.mulf %438, %446 : vector<2x32xf32>
    %455 = arith.addf %453, %454 : vector<2x32xf32>
    %456 = math.tanh %455 : vector<2x32xf32>
    %457 = arith.mulf %452, %456 : vector<2x32xf32>
    %c0_181 = arith.constant 0 : index
    %c0_182 = arith.constant 0 : index
    %458 = vector.load %arg7[%c0_181, %c0_182] : memref<2x32xf32, #tpu.memory_space<vmem>>, vector<2x32xf32>
    tpu.vector_store %arg7[%c0_181, %c0_182], %457 {strides = array<i32>} : memref<2x32xf32, #tpu.memory_space<vmem>>, vector<2x32xf32>,
    %c0_183 = arith.constant 0 : index
    %c0_184 = arith.constant 0 : index
    %459 = vector.load %arg8[%c0_183, %c0_184] : memref<2x32xf32, #tpu.memory_space<vmem>>, vector<2x32xf32>
    tpu.vector_store %arg8[%c0_183, %c0_184], %455 {strides = array<i32>} : memref<2x32xf32, #tpu.memory_space<vmem>>, vector<2x32xf32>,
    %460 = arith.truncf %457 : vector<2x32xf32> to vector<2x32xbf16>
    %461 = arith.index_cast %c5_i32 : i32 to index
    %c0_185 = arith.constant 0 : index
    %c0_186 = arith.constant 0 : index
    %462 = vector.load %arg5[%461, %c0_185, %c0_186] : memref<8x2x32xbf16, #tpu.memory_space<vmem>>, vector<1x2x32xbf16>
    %463 = vector.shape_cast %462 : vector<1x2x32xbf16> to vector<2x32xbf16>
    %464 = vector.shape_cast %460 : vector<2x32xbf16> to vector<1x2x32xbf16>
    tpu.vector_store %arg5[%461, %c0_185, %c0_186], %464 {strides = array<i32>} : memref<8x2x32xbf16, #tpu.memory_space<vmem>>, vector<1x2x32xbf16>,
    %c0_187 = arith.constant 0 : index
    %c0_188 = arith.constant 0 : index
    %465 = vector.load %arg9[%c0_187, %c0_188] : memref<2x32xf32, #tpu.memory_space<vmem>>, vector<2x32xf32>
    %c0_189 = arith.constant 0 : index
    %c0_190 = arith.constant 0 : index
    %466 = vector.load %arg10[%c0_189, %c0_190] : memref<2x32xf32, #tpu.memory_space<vmem>>, vector<2x32xf32>
    %467 = arith.extf %426 : vector<2x128xbf16> to vector<2x128xf32>
    %468 = arith.truncf %465 : vector<2x32xf32> to vector<2x32xbf16>
    %cst_191 = arith.constant dense<0.000000e+00> : vector<2x128xf32>
    %469 = tpu.matmul %468, %4, %cst_191 {dimension_numbers = #tpu.dot_dimension_numbers<[1], [0], [0], [1], [0, 0, 1, 1], [], []>} : vector<2x32xbf16>, vector<32x128xbf16>, vector<2x128xf32> -> vector<2x128xf32>
    %470 = arith.addf %467, %469 : vector<2x128xf32>
    %471 = vector.extract_strided_slice %470 {offsets = [0, 0], sizes = [2, 32], strides = [1, 1]} : vector<2x128xf32> to vector<2x32xf32>
    %472 = arith.negf %471 : vector<2x32xf32>
    %473 = math.exp %472 : vector<2x32xf32>
    %cst_192 = arith.constant 1.000000e+00 : f32
    %474 = vector.broadcast %cst_192 : f32 to vector<2x32xf32>
    %475 = arith.addf %474, %473 : vector<2x32xf32>
    %476 = arith.divf %474, %475 : vector<2x32xf32>
    %477 = vector.extract_strided_slice %470 {offsets = [0, 32], sizes = [2, 32], strides = [1, 1]} : vector<2x128xf32> to vector<2x32xf32>
    %478 = arith.negf %477 : vector<2x32xf32>
    %479 = math.exp %478 : vector<2x32xf32>
    %cst_193 = arith.constant 1.000000e+00 : f32
    %480 = vector.broadcast %cst_193 : f32 to vector<2x32xf32>
    %481 = arith.addf %480, %479 : vector<2x32xf32>
    %482 = arith.divf %480, %481 : vector<2x32xf32>
    %483 = vector.extract_strided_slice %470 {offsets = [0, 64], sizes = [2, 32], strides = [1, 1]} : vector<2x128xf32> to vector<2x32xf32>
    %484 = math.tanh %483 : vector<2x32xf32>
    %485 = vector.extract_strided_slice %470 {offsets = [0, 96], sizes = [2, 32], strides = [1, 1]} : vector<2x128xf32> to vector<2x32xf32>
    %486 = arith.negf %485 : vector<2x32xf32>
    %487 = math.exp %486 : vector<2x32xf32>
    %cst_194 = arith.constant 1.000000e+00 : f32
    %488 = vector.broadcast %cst_194 : f32 to vector<2x32xf32>
    %489 = arith.addf %488, %487 : vector<2x32xf32>
    %490 = arith.divf %488, %489 : vector<2x32xf32>
    %491 = arith.mulf %482, %466 : vector<2x32xf32>
    %492 = arith.mulf %476, %484 : vector<2x32xf32>
    %493 = arith.addf %491, %492 : vector<2x32xf32>
    %494 = math.tanh %493 : vector<2x32xf32>
    %495 = arith.mulf %490, %494 : vector<2x32xf32>
    %c0_195 = arith.constant 0 : index
    %c0_196 = arith.constant 0 : index
    %496 = vector.load %arg9[%c0_195, %c0_196] : memref<2x32xf32, #tpu.memory_space<vmem>>, vector<2x32xf32>
    tpu.vector_store %arg9[%c0_195, %c0_196], %495 {strides = array<i32>} : memref<2x32xf32, #tpu.memory_space<vmem>>, vector<2x32xf32>,
    %c0_197 = arith.constant 0 : index
    %c0_198 = arith.constant 0 : index
    %497 = vector.load %arg10[%c0_197, %c0_198] : memref<2x32xf32, #tpu.memory_space<vmem>>, vector<2x32xf32>
    tpu.vector_store %arg10[%c0_197, %c0_198], %493 {strides = array<i32>} : memref<2x32xf32, #tpu.memory_space<vmem>>, vector<2x32xf32>,
    %498 = arith.truncf %495 : vector<2x32xf32> to vector<2x32xbf16>
    %499 = arith.index_cast %423 : i32 to index
    %c0_199 = arith.constant 0 : index
    %c0_200 = arith.constant 0 : index
    %500 = vector.load %arg6[%499, %c0_199, %c0_200] : memref<8x2x32xbf16, #tpu.memory_space<vmem>>, vector<1x2x32xbf16>
    %501 = vector.shape_cast %500 : vector<1x2x32xbf16> to vector<2x32xbf16>
    %502 = vector.shape_cast %498 : vector<2x32xbf16> to vector<1x2x32xbf16>
    tpu.vector_store %arg6[%499, %c0_199, %c0_200], %502 {strides = array<i32>} : memref<8x2x32xbf16, #tpu.memory_space<vmem>>, vector<1x2x32xbf16>,
    %c6_i32 = arith.constant 6 : i32
    %503 = arith.index_cast %c6_i32 : i32 to index
    %c0_201 = arith.constant 0 : index
    %c0_202 = arith.constant 0 : index
    %504 = vector.load %arg1[%503, %c0_201, %c0_202] : memref<8x2x128xbf16, #tpu.memory_space<vmem>>, vector<1x2x128xbf16>
    %505 = vector.shape_cast %504 : vector<1x2x128xbf16> to vector<2x128xbf16>
    %c7_i32_203 = arith.constant 7 : i32
    %506 = arith.subi %c7_i32_203, %c6_i32 : i32
    %507 = arith.index_cast %506 : i32 to index
    %c0_204 = arith.constant 0 : index
    %c0_205 = arith.constant 0 : index
    %508 = vector.load %arg2[%507, %c0_204, %c0_205] : memref<8x2x128xbf16, #tpu.memory_space<vmem>>, vector<1x2x128xbf16>
    %509 = vector.shape_cast %508 : vector<1x2x128xbf16> to vector<2x128xbf16>
    %c0_206 = arith.constant 0 : index
    %c0_207 = arith.constant 0 : index
    %510 = vector.load %arg7[%c0_206, %c0_207] : memref<2x32xf32, #tpu.memory_space<vmem>>, vector<2x32xf32>
    %c0_208 = arith.constant 0 : index
    %c0_209 = arith.constant 0 : index
    %511 = vector.load %arg8[%c0_208, %c0_209] : memref<2x32xf32, #tpu.memory_space<vmem>>, vector<2x32xf32>
    %512 = arith.extf %505 : vector<2x128xbf16> to vector<2x128xf32>
    %513 = arith.truncf %510 : vector<2x32xf32> to vector<2x32xbf16>
    %cst_210 = arith.constant dense<0.000000e+00> : vector<2x128xf32>
    %514 = tpu.matmul %513, %3, %cst_210 {dimension_numbers = #tpu.dot_dimension_numbers<[1], [0], [0], [1], [0, 0, 1, 1], [], []>} : vector<2x32xbf16>, vector<32x128xbf16>, vector<2x128xf32> -> vector<2x128xf32>
    %515 = arith.addf %512, %514 : vector<2x128xf32>
    %516 = vector.extract_strided_slice %515 {offsets = [0, 0], sizes = [2, 32], strides = [1, 1]} : vector<2x128xf32> to vector<2x32xf32>
    %517 = arith.negf %516 : vector<2x32xf32>
    %518 = math.exp %517 : vector<2x32xf32>
    %cst_211 = arith.constant 1.000000e+00 : f32
    %519 = vector.broadcast %cst_211 : f32 to vector<2x32xf32>
    %520 = arith.addf %519, %518 : vector<2x32xf32>
    %521 = arith.divf %519, %520 : vector<2x32xf32>
    %522 = vector.extract_strided_slice %515 {offsets = [0, 32], sizes = [2, 32], strides = [1, 1]} : vector<2x128xf32> to vector<2x32xf32>
    %523 = arith.negf %522 : vector<2x32xf32>
    %524 = math.exp %523 : vector<2x32xf32>
    %cst_212 = arith.constant 1.000000e+00 : f32
    %525 = vector.broadcast %cst_212 : f32 to vector<2x32xf32>
    %526 = arith.addf %525, %524 : vector<2x32xf32>
    %527 = arith.divf %525, %526 : vector<2x32xf32>
    %528 = vector.extract_strided_slice %515 {offsets = [0, 64], sizes = [2, 32], strides = [1, 1]} : vector<2x128xf32> to vector<2x32xf32>
    %529 = math.tanh %528 : vector<2x32xf32>
    %530 = vector.extract_strided_slice %515 {offsets = [0, 96], sizes = [2, 32], strides = [1, 1]} : vector<2x128xf32> to vector<2x32xf32>
    %531 = arith.negf %530 : vector<2x32xf32>
    %532 = math.exp %531 : vector<2x32xf32>
    %cst_213 = arith.constant 1.000000e+00 : f32
    %533 = vector.broadcast %cst_213 : f32 to vector<2x32xf32>
    %534 = arith.addf %533, %532 : vector<2x32xf32>
    %535 = arith.divf %533, %534 : vector<2x32xf32>
    %536 = arith.mulf %527, %511 : vector<2x32xf32>
    %537 = arith.mulf %521, %529 : vector<2x32xf32>
    %538 = arith.addf %536, %537 : vector<2x32xf32>
    %539 = math.tanh %538 : vector<2x32xf32>
    %540 = arith.mulf %535, %539 : vector<2x32xf32>
    %c0_214 = arith.constant 0 : index
    %c0_215 = arith.constant 0 : index
    %541 = vector.load %arg7[%c0_214, %c0_215] : memref<2x32xf32, #tpu.memory_space<vmem>>, vector<2x32xf32>
    tpu.vector_store %arg7[%c0_214, %c0_215], %540 {strides = array<i32>} : memref<2x32xf32, #tpu.memory_space<vmem>>, vector<2x32xf32>,
    %c0_216 = arith.constant 0 : index
    %c0_217 = arith.constant 0 : index
    %542 = vector.load %arg8[%c0_216, %c0_217] : memref<2x32xf32, #tpu.memory_space<vmem>>, vector<2x32xf32>
    tpu.vector_store %arg8[%c0_216, %c0_217], %538 {strides = array<i32>} : memref<2x32xf32, #tpu.memory_space<vmem>>, vector<2x32xf32>,
    %543 = arith.truncf %540 : vector<2x32xf32> to vector<2x32xbf16>
    %544 = arith.index_cast %c6_i32 : i32 to index
    %c0_218 = arith.constant 0 : index
    %c0_219 = arith.constant 0 : index
    %545 = vector.load %arg5[%544, %c0_218, %c0_219] : memref<8x2x32xbf16, #tpu.memory_space<vmem>>, vector<1x2x32xbf16>
    %546 = vector.shape_cast %545 : vector<1x2x32xbf16> to vector<2x32xbf16>
    %547 = vector.shape_cast %543 : vector<2x32xbf16> to vector<1x2x32xbf16>
    tpu.vector_store %arg5[%544, %c0_218, %c0_219], %547 {strides = array<i32>} : memref<8x2x32xbf16, #tpu.memory_space<vmem>>, vector<1x2x32xbf16>,
    %c0_220 = arith.constant 0 : index
    %c0_221 = arith.constant 0 : index
    %548 = vector.load %arg9[%c0_220, %c0_221] : memref<2x32xf32, #tpu.memory_space<vmem>>, vector<2x32xf32>
    %c0_222 = arith.constant 0 : index
    %c0_223 = arith.constant 0 : index
    %549 = vector.load %arg10[%c0_222, %c0_223] : memref<2x32xf32, #tpu.memory_space<vmem>>, vector<2x32xf32>
    %550 = arith.extf %509 : vector<2x128xbf16> to vector<2x128xf32>
    %551 = arith.truncf %548 : vector<2x32xf32> to vector<2x32xbf16>
    %cst_224 = arith.constant dense<0.000000e+00> : vector<2x128xf32>
    %552 = tpu.matmul %551, %4, %cst_224 {dimension_numbers = #tpu.dot_dimension_numbers<[1], [0], [0], [1], [0, 0, 1, 1], [], []>} : vector<2x32xbf16>, vector<32x128xbf16>, vector<2x128xf32> -> vector<2x128xf32>
    %553 = arith.addf %550, %552 : vector<2x128xf32>
    %554 = vector.extract_strided_slice %553 {offsets = [0, 0], sizes = [2, 32], strides = [1, 1]} : vector<2x128xf32> to vector<2x32xf32>
    %555 = arith.negf %554 : vector<2x32xf32>
    %556 = math.exp %555 : vector<2x32xf32>
    %cst_225 = arith.constant 1.000000e+00 : f32
    %557 = vector.broadcast %cst_225 : f32 to vector<2x32xf32>
    %558 = arith.addf %557, %556 : vector<2x32xf32>
    %559 = arith.divf %557, %558 : vector<2x32xf32>
    %560 = vector.extract_strided_slice %553 {offsets = [0, 32], sizes = [2, 32], strides = [1, 1]} : vector<2x128xf32> to vector<2x32xf32>
    %561 = arith.negf %560 : vector<2x32xf32>
    %562 = math.exp %561 : vector<2x32xf32>
    %cst_226 = arith.constant 1.000000e+00 : f32
    %563 = vector.broadcast %cst_226 : f32 to vector<2x32xf32>
    %564 = arith.addf %563, %562 : vector<2x32xf32>
    %565 = arith.divf %563, %564 : vector<2x32xf32>
    %566 = vector.extract_strided_slice %553 {offsets = [0, 64], sizes = [2, 32], strides = [1, 1]} : vector<2x128xf32> to vector<2x32xf32>
    %567 = math.tanh %566 : vector<2x32xf32>
    %568 = vector.extract_strided_slice %553 {offsets = [0, 96], sizes = [2, 32], strides = [1, 1]} : vector<2x128xf32> to vector<2x32xf32>
    %569 = arith.negf %568 : vector<2x32xf32>
    %570 = math.exp %569 : vector<2x32xf32>
    %cst_227 = arith.constant 1.000000e+00 : f32
    %571 = vector.broadcast %cst_227 : f32 to vector<2x32xf32>
    %572 = arith.addf %571, %570 : vector<2x32xf32>
    %573 = arith.divf %571, %572 : vector<2x32xf32>
    %574 = arith.mulf %565, %549 : vector<2x32xf32>
    %575 = arith.mulf %559, %567 : vector<2x32xf32>
    %576 = arith.addf %574, %575 : vector<2x32xf32>
    %577 = math.tanh %576 : vector<2x32xf32>
    %578 = arith.mulf %573, %577 : vector<2x32xf32>
    %c0_228 = arith.constant 0 : index
    %c0_229 = arith.constant 0 : index
    %579 = vector.load %arg9[%c0_228, %c0_229] : memref<2x32xf32, #tpu.memory_space<vmem>>, vector<2x32xf32>
    tpu.vector_store %arg9[%c0_228, %c0_229], %578 {strides = array<i32>} : memref<2x32xf32, #tpu.memory_space<vmem>>, vector<2x32xf32>,
    %c0_230 = arith.constant 0 : index
    %c0_231 = arith.constant 0 : index
    %580 = vector.load %arg10[%c0_230, %c0_231] : memref<2x32xf32, #tpu.memory_space<vmem>>, vector<2x32xf32>
    tpu.vector_store %arg10[%c0_230, %c0_231], %576 {strides = array<i32>} : memref<2x32xf32, #tpu.memory_space<vmem>>, vector<2x32xf32>,
    %581 = arith.truncf %578 : vector<2x32xf32> to vector<2x32xbf16>
    %582 = arith.index_cast %506 : i32 to index
    %c0_232 = arith.constant 0 : index
    %c0_233 = arith.constant 0 : index
    %583 = vector.load %arg6[%582, %c0_232, %c0_233] : memref<8x2x32xbf16, #tpu.memory_space<vmem>>, vector<1x2x32xbf16>
    %584 = vector.shape_cast %583 : vector<1x2x32xbf16> to vector<2x32xbf16>
    %585 = vector.shape_cast %581 : vector<2x32xbf16> to vector<1x2x32xbf16>
    tpu.vector_store %arg6[%582, %c0_232, %c0_233], %585 {strides = array<i32>} : memref<8x2x32xbf16, #tpu.memory_space<vmem>>, vector<1x2x32xbf16>,
    %c7_i32_234 = arith.constant 7 : i32
    %586 = arith.index_cast %c7_i32_234 : i32 to index
    %c0_235 = arith.constant 0 : index
    %c0_236 = arith.constant 0 : index
    %587 = vector.load %arg1[%586, %c0_235, %c0_236] : memref<8x2x128xbf16, #tpu.memory_space<vmem>>, vector<1x2x128xbf16>
    %588 = vector.shape_cast %587 : vector<1x2x128xbf16> to vector<2x128xbf16>
    %c7_i32_237 = arith.constant 7 : i32
    %589 = arith.subi %c7_i32_237, %c7_i32_234 : i32
    %590 = arith.index_cast %589 : i32 to index
    %c0_238 = arith.constant 0 : index
    %c0_239 = arith.constant 0 : index
    %591 = vector.load %arg2[%590, %c0_238, %c0_239] : memref<8x2x128xbf16, #tpu.memory_space<vmem>>, vector<1x2x128xbf16>
    %592 = vector.shape_cast %591 : vector<1x2x128xbf16> to vector<2x128xbf16>
    %c0_240 = arith.constant 0 : index
    %c0_241 = arith.constant 0 : index
    %593 = vector.load %arg7[%c0_240, %c0_241] : memref<2x32xf32, #tpu.memory_space<vmem>>, vector<2x32xf32>
    %c0_242 = arith.constant 0 : index
    %c0_243 = arith.constant 0 : index
    %594 = vector.load %arg8[%c0_242, %c0_243] : memref<2x32xf32, #tpu.memory_space<vmem>>, vector<2x32xf32>
    %595 = arith.extf %588 : vector<2x128xbf16> to vector<2x128xf32>
    %596 = arith.truncf %593 : vector<2x32xf32> to vector<2x32xbf16>
    %cst_244 = arith.constant dense<0.000000e+00> : vector<2x128xf32>
    %597 = tpu.matmul %596, %3, %cst_244 {dimension_numbers = #tpu.dot_dimension_numbers<[1], [0], [0], [1], [0, 0, 1, 1], [], []>} : vector<2x32xbf16>, vector<32x128xbf16>, vector<2x128xf32> -> vector<2x128xf32>
    %598 = arith.addf %595, %597 : vector<2x128xf32>
    %599 = vector.extract_strided_slice %598 {offsets = [0, 0], sizes = [2, 32], strides = [1, 1]} : vector<2x128xf32> to vector<2x32xf32>
    %600 = arith.negf %599 : vector<2x32xf32>
    %601 = math.exp %600 : vector<2x32xf32>
    %cst_245 = arith.constant 1.000000e+00 : f32
    %602 = vector.broadcast %cst_245 : f32 to vector<2x32xf32>
    %603 = arith.addf %602, %601 : vector<2x32xf32>
    %604 = arith.divf %602, %603 : vector<2x32xf32>
    %605 = vector.extract_strided_slice %598 {offsets = [0, 32], sizes = [2, 32], strides = [1, 1]} : vector<2x128xf32> to vector<2x32xf32>
    %606 = arith.negf %605 : vector<2x32xf32>
    %607 = math.exp %606 : vector<2x32xf32>
    %cst_246 = arith.constant 1.000000e+00 : f32
    %608 = vector.broadcast %cst_246 : f32 to vector<2x32xf32>
    %609 = arith.addf %608, %607 : vector<2x32xf32>
    %610 = arith.divf %608, %609 : vector<2x32xf32>
    %611 = vector.extract_strided_slice %598 {offsets = [0, 64], sizes = [2, 32], strides = [1, 1]} : vector<2x128xf32> to vector<2x32xf32>
    %612 = math.tanh %611 : vector<2x32xf32>
    %613 = vector.extract_strided_slice %598 {offsets = [0, 96], sizes = [2, 32], strides = [1, 1]} : vector<2x128xf32> to vector<2x32xf32>
    %614 = arith.negf %613 : vector<2x32xf32>
    %615 = math.exp %614 : vector<2x32xf32>
    %cst_247 = arith.constant 1.000000e+00 : f32
    %616 = vector.broadcast %cst_247 : f32 to vector<2x32xf32>
    %617 = arith.addf %616, %615 : vector<2x32xf32>
    %618 = arith.divf %616, %617 : vector<2x32xf32>
    %619 = arith.mulf %610, %594 : vector<2x32xf32>
    %620 = arith.mulf %604, %612 : vector<2x32xf32>
    %621 = arith.addf %619, %620 : vector<2x32xf32>
    %622 = math.tanh %621 : vector<2x32xf32>
    %623 = arith.mulf %618, %622 : vector<2x32xf32>
    %c0_248 = arith.constant 0 : index
    %c0_249 = arith.constant 0 : index
    %624 = vector.load %arg7[%c0_248, %c0_249] : memref<2x32xf32, #tpu.memory_space<vmem>>, vector<2x32xf32>
    tpu.vector_store %arg7[%c0_248, %c0_249], %623 {strides = array<i32>} : memref<2x32xf32, #tpu.memory_space<vmem>>, vector<2x32xf32>,
    %c0_250 = arith.constant 0 : index
    %c0_251 = arith.constant 0 : index
    %625 = vector.load %arg8[%c0_250, %c0_251] : memref<2x32xf32, #tpu.memory_space<vmem>>, vector<2x32xf32>
    tpu.vector_store %arg8[%c0_250, %c0_251], %621 {strides = array<i32>} : memref<2x32xf32, #tpu.memory_space<vmem>>, vector<2x32xf32>,
    %626 = arith.truncf %623 : vector<2x32xf32> to vector<2x32xbf16>
    %627 = arith.index_cast %c7_i32_234 : i32 to index
    %c0_252 = arith.constant 0 : index
    %c0_253 = arith.constant 0 : index
    %628 = vector.load %arg5[%627, %c0_252, %c0_253] : memref<8x2x32xbf16, #tpu.memory_space<vmem>>, vector<1x2x32xbf16>
    %629 = vector.shape_cast %628 : vector<1x2x32xbf16> to vector<2x32xbf16>
    %630 = vector.shape_cast %626 : vector<2x32xbf16> to vector<1x2x32xbf16>
    tpu.vector_store %arg5[%627, %c0_252, %c0_253], %630 {strides = array<i32>} : memref<8x2x32xbf16, #tpu.memory_space<vmem>>, vector<1x2x32xbf16>,
    %c0_254 = arith.constant 0 : index
    %c0_255 = arith.constant 0 : index
    %631 = vector.load %arg9[%c0_254, %c0_255] : memref<2x32xf32, #tpu.memory_space<vmem>>, vector<2x32xf32>
    %c0_256 = arith.constant 0 : index
    %c0_257 = arith.constant 0 : index
    %632 = vector.load %arg10[%c0_256, %c0_257] : memref<2x32xf32, #tpu.memory_space<vmem>>, vector<2x32xf32>
    %633 = arith.extf %592 : vector<2x128xbf16> to vector<2x128xf32>
    %634 = arith.truncf %631 : vector<2x32xf32> to vector<2x32xbf16>
    %cst_258 = arith.constant dense<0.000000e+00> : vector<2x128xf32>
    %635 = tpu.matmul %634, %4, %cst_258 {dimension_numbers = #tpu.dot_dimension_numbers<[1], [0], [0], [1], [0, 0, 1, 1], [], []>} : vector<2x32xbf16>, vector<32x128xbf16>, vector<2x128xf32> -> vector<2x128xf32>
    %636 = arith.addf %633, %635 : vector<2x128xf32>
    %637 = vector.extract_strided_slice %636 {offsets = [0, 0], sizes = [2, 32], strides = [1, 1]} : vector<2x128xf32> to vector<2x32xf32>
    %638 = arith.negf %637 : vector<2x32xf32>
    %639 = math.exp %638 : vector<2x32xf32>
    %cst_259 = arith.constant 1.000000e+00 : f32
    %640 = vector.broadcast %cst_259 : f32 to vector<2x32xf32>
    %641 = arith.addf %640, %639 : vector<2x32xf32>
    %642 = arith.divf %640, %641 : vector<2x32xf32>
    %643 = vector.extract_strided_slice %636 {offsets = [0, 32], sizes = [2, 32], strides = [1, 1]} : vector<2x128xf32> to vector<2x32xf32>
    %644 = arith.negf %643 : vector<2x32xf32>
    %645 = math.exp %644 : vector<2x32xf32>
    %cst_260 = arith.constant 1.000000e+00 : f32
    %646 = vector.broadcast %cst_260 : f32 to vector<2x32xf32>
    %647 = arith.addf %646, %645 : vector<2x32xf32>
    %648 = arith.divf %646, %647 : vector<2x32xf32>
    %649 = vector.extract_strided_slice %636 {offsets = [0, 64], sizes = [2, 32], strides = [1, 1]} : vector<2x128xf32> to vector<2x32xf32>
    %650 = math.tanh %649 : vector<2x32xf32>
    %651 = vector.extract_strided_slice %636 {offsets = [0, 96], sizes = [2, 32], strides = [1, 1]} : vector<2x128xf32> to vector<2x32xf32>
    %652 = arith.negf %651 : vector<2x32xf32>
    %653 = math.exp %652 : vector<2x32xf32>
    %cst_261 = arith.constant 1.000000e+00 : f32
    %654 = vector.broadcast %cst_261 : f32 to vector<2x32xf32>
    %655 = arith.addf %654, %653 : vector<2x32xf32>
    %656 = arith.divf %654, %655 : vector<2x32xf32>
    %657 = arith.mulf %648, %632 : vector<2x32xf32>
    %658 = arith.mulf %642, %650 : vector<2x32xf32>
    %659 = arith.addf %657, %658 : vector<2x32xf32>
    %660 = math.tanh %659 : vector<2x32xf32>
    %661 = arith.mulf %656, %660 : vector<2x32xf32>
    %c0_262 = arith.constant 0 : index
    %c0_263 = arith.constant 0 : index
    %662 = vector.load %arg9[%c0_262, %c0_263] : memref<2x32xf32, #tpu.memory_space<vmem>>, vector<2x32xf32>
    tpu.vector_store %arg9[%c0_262, %c0_263], %661 {strides = array<i32>} : memref<2x32xf32, #tpu.memory_space<vmem>>, vector<2x32xf32>,
    %c0_264 = arith.constant 0 : index
    %c0_265 = arith.constant 0 : index
    %663 = vector.load %arg10[%c0_264, %c0_265] : memref<2x32xf32, #tpu.memory_space<vmem>>, vector<2x32xf32>
    tpu.vector_store %arg10[%c0_264, %c0_265], %659 {strides = array<i32>} : memref<2x32xf32, #tpu.memory_space<vmem>>, vector<2x32xf32>,
    %664 = arith.truncf %661 : vector<2x32xf32> to vector<2x32xbf16>
    %665 = arith.index_cast %589 : i32 to index
    %c0_266 = arith.constant 0 : index
    %c0_267 = arith.constant 0 : index
    %666 = vector.load %arg6[%665, %c0_266, %c0_267] : memref<8x2x32xbf16, #tpu.memory_space<vmem>>, vector<1x2x32xbf16>
    %667 = vector.shape_cast %666 : vector<1x2x32xbf16> to vector<2x32xbf16>
    %668 = vector.shape_cast %664 : vector<2x32xbf16> to vector<1x2x32xbf16>
    tpu.vector_store %arg6[%665, %c0_266, %c0_267], %668 {strides = array<i32>} : memref<8x2x32xbf16, #tpu.memory_space<vmem>>, vector<1x2x32xbf16>,
    %c8_i32 = arith.constant 8 : i32
    return
  }
  func.func @transform_0(%arg0: i32) -> (i32, i32, i32) {
    %c0_i32 = arith.constant 0 : i32
    %c0_i32_0 = arith.constant 0 : i32
    %c0_i32_1 = arith.constant 0 : i32
    return %arg0, %c0_i32, %c0_i32_0 : i32, i32, i32
  }
  func.func @transform_1(%arg0: i32) -> (i32, i32, i32) {
    %c0_i32 = arith.constant 0 : i32
    %0 = arith.subi %c0_i32, %arg0 : i32
    %c0_i32_0 = arith.constant 0 : i32
    %c1_i32 = arith.constant 1 : i32
    %c0_i32_1 = arith.constant 0 : i32
    return %0, %c0_i32_0, %c1_i32 : i32, i32, i32
  }
  func.func @transform_2(%arg0: i32) -> (i32, i32) {
    %c0_i32 = arith.constant 0 : i32
    %c0_i32_0 = arith.constant 0 : i32
    %c0_i32_1 = arith.constant 0 : i32
    return %c0_i32, %c0_i32_0 : i32, i32
  }
  func.func @transform_3(%arg0: i32) -> (i32, i32) {
    %c0_i32 = arith.constant 0 : i32
    %c0_i32_0 = arith.constant 0 : i32
    %c0_i32_1 = arith.constant 0 : i32
    return %c0_i32, %c0_i32_0 : i32, i32
  }
  func.func @transform_4(%arg0: i32) -> (i32, i32, i32) {
    %c0_i32 = arith.constant 0 : i32
    %c0_i32_0 = arith.constant 0 : i32
    %c0_i32_1 = arith.constant 0 : i32
    return %arg0, %c0_i32, %c0_i32_0 : i32, i32, i32
  }
  func.func @transform_5(%arg0: i32) -> (i32, i32, i32) {
    %c0_i32 = arith.constant 0 : i32
    %0 = arith.subi %c0_i32, %arg0 : i32
    %c0_i32_0 = arith.constant 0 : i32
    %c0_i32_1 = arith.constant 0 : i32
    %c0_i32_2 = arith.constant 0 : i32
    return %0, %c0_i32_0, %c0_i32_1 : i32, i32, i32
  }
}

module attributes {stable_mosaic.version = 11 : i64} {
  func.func @_ffn_pair_kernel(%arg0: i32, %arg1: memref<16x64xbf16, #tpu.memory_space<vmem>>, %arg2: memref<2x64x256xbf16, #tpu.memory_space<vmem>>, %arg3: memref<2x1x256xf32, #tpu.memory_space<vmem>>, %arg4: memref<2x256x64xbf16, #tpu.memory_space<vmem>>, %arg5: memref<2x1x64xf32, #tpu.memory_space<vmem>>, %arg6: memref<2x1x64xf32, #tpu.memory_space<vmem>>, %arg7: memref<2x1x64xf32, #tpu.memory_space<vmem>>, %arg8: memref<2x16x64xbf16, #tpu.memory_space<vmem>>) attributes {dimension_semantics = [#tpu.dimension_semantics<parallel>], iteration_bounds = array<i64: 1>, scalar_prefetch = 0 : i64, scratch_operands = 0 : i64, tpu.core_type = #tpu.core_type<tc>, window_params = [{transform_indices = @transform_0, window_bounds = array<i64: 16, 64>}, {pipeline_mode = #tpu.pipeline_mode<synchronous>, transform_indices = @transform_1, window_bounds = array<i64: 2, 64, 256>}, {pipeline_mode = #tpu.pipeline_mode<synchronous>, transform_indices = @transform_2, window_bounds = array<i64: 2, 1, 256>}, {pipeline_mode = #tpu.pipeline_mode<synchronous>, transform_indices = @transform_3, window_bounds = array<i64: 2, 256, 64>}, {pipeline_mode = #tpu.pipeline_mode<synchronous>, transform_indices = @transform_4, window_bounds = array<i64: 2, 1, 64>}, {pipeline_mode = #tpu.pipeline_mode<synchronous>, transform_indices = @transform_5, window_bounds = array<i64: 2, 1, 64>}, {pipeline_mode = #tpu.pipeline_mode<synchronous>, transform_indices = @transform_6, window_bounds = array<i64: 2, 1, 64>}, {transform_indices = @transform_7, window_bounds = array<i64: 2, 16, 64>}]} {
    %c0 = arith.constant 0 : index
    %c0_0 = arith.constant 0 : index
    %0 = vector.load %arg1[%c0, %c0_0] : memref<16x64xbf16, #tpu.memory_space<vmem>>, vector<16x64xbf16>
    %1 = arith.extf %0 : vector<16x64xbf16> to vector<16x64xf32>
    %c0_1 = arith.constant 0 : index
    %c0_2 = arith.constant 0 : index
    %c0_3 = arith.constant 0 : index
    %2 = vector.load %arg2[%c0_1, %c0_2, %c0_3] : memref<2x64x256xbf16, #tpu.memory_space<vmem>>, vector<1x64x256xbf16>
    %3 = vector.shape_cast %2 : vector<1x64x256xbf16> to vector<64x256xbf16>
    %cst = arith.constant dense<0.000000e+00> : vector<16x256xf32>
    %4 = tpu.matmul %0, %3, %cst {dimension_numbers = #tpu.dot_dimension_numbers<[1], [0], [0], [1], [0, 0, 1, 1], [], []>} : vector<16x64xbf16>, vector<64x256xbf16>, vector<16x256xf32> -> vector<16x256xf32>
    %c0_4 = arith.constant 0 : index
    %c0_5 = arith.constant 0 : index
    %c0_6 = arith.constant 0 : index
    %5 = vector.load %arg3[%c0_4, %c0_5, %c0_6] : memref<2x1x256xf32, #tpu.memory_space<vmem>>, vector<1x1x256xf32>
    %6 = vector.shape_cast %5 : vector<1x1x256xf32> to vector<1x256xf32>
    %7 = vector.broadcast %6 : vector<1x256xf32> to vector<16x256xf32>
    %8 = arith.addf %4, %7 : vector<16x256xf32>
    %cst_7 = arith.constant 0.000000e+00 : f32
    %9 = vector.broadcast %cst_7 : f32 to vector<16x256xf32>
    %10 = arith.maximumf %8, %9 : vector<16x256xf32>
    %11 = arith.truncf %10 : vector<16x256xf32> to vector<16x256xbf16>
    %c0_8 = arith.constant 0 : index
    %c0_9 = arith.constant 0 : index
    %c0_10 = arith.constant 0 : index
    %12 = vector.load %arg4[%c0_8, %c0_9, %c0_10] : memref<2x256x64xbf16, #tpu.memory_space<vmem>>, vector<1x256x64xbf16>
    %13 = vector.shape_cast %12 : vector<1x256x64xbf16> to vector<256x64xbf16>
    %cst_11 = arith.constant dense<0.000000e+00> : vector<16x64xf32>
    %14 = tpu.matmul %11, %13, %cst_11 {dimension_numbers = #tpu.dot_dimension_numbers<[1], [0], [0], [1], [0, 0, 1, 1], [], []>} : vector<16x256xbf16>, vector<256x64xbf16>, vector<16x64xf32> -> vector<16x64xf32>
    %c0_12 = arith.constant 0 : index
    %c0_13 = arith.constant 0 : index
    %c0_14 = arith.constant 0 : index
    %15 = vector.load %arg5[%c0_12, %c0_13, %c0_14] : memref<2x1x64xf32, #tpu.memory_space<vmem>>, vector<1x1x64xf32>
    %16 = vector.shape_cast %15 : vector<1x1x64xf32> to vector<1x64xf32>
    %17 = vector.broadcast %16 : vector<1x64xf32> to vector<16x64xf32>
    %18 = arith.addf %14, %17 : vector<16x64xf32>
    %19 = arith.addf %18, %1 : vector<16x64xf32>
    %cst_15 = arith.constant dense<0.000000e+00> : vector<16xf32>
    %20 = vector.multi_reduction <add>, %19, %cst_15 [1] : vector<16x64xf32> to vector<16xf32>
    %21 = vector.shape_cast %20 : vector<16xf32> to vector<16x1xf32>
    %cst_16 = arith.constant 6.400000e+01 : f32
    %22 = vector.broadcast %cst_16 : f32 to vector<16x1xf32>
    %23 = arith.divf %21, %22 : vector<16x1xf32>
    %24 = vector.broadcast %23 : vector<16x1xf32> to vector<16x64xf32>
    %25 = arith.subf %19, %24 : vector<16x64xf32>
    %26 = arith.mulf %25, %25 : vector<16x64xf32>
    %cst_17 = arith.constant dense<0.000000e+00> : vector<16xf32>
    %27 = vector.multi_reduction <add>, %26, %cst_17 [1] : vector<16x64xf32> to vector<16xf32>
    %28 = vector.shape_cast %27 : vector<16xf32> to vector<16x1xf32>
    %cst_18 = arith.constant 6.400000e+01 : f32
    %29 = vector.broadcast %cst_18 : f32 to vector<16x1xf32>
    %30 = arith.divf %28, %29 : vector<16x1xf32>
    %31 = vector.broadcast %23 : vector<16x1xf32> to vector<16x64xf32>
    %32 = arith.subf %19, %31 : vector<16x64xf32>
    %cst_19 = arith.constant 9.99999974E-6 : f32
    %33 = vector.broadcast %cst_19 : f32 to vector<16x1xf32>
    %34 = arith.addf %30, %33 : vector<16x1xf32>
    %35 = math.rsqrt %34 : vector<16x1xf32>
    %36 = vector.broadcast %35 : vector<16x1xf32> to vector<16x64xf32>
    %37 = arith.mulf %32, %36 : vector<16x64xf32>
    %c0_20 = arith.constant 0 : index
    %c0_21 = arith.constant 0 : index
    %c0_22 = arith.constant 0 : index
    %38 = vector.load %arg6[%c0_20, %c0_21, %c0_22] : memref<2x1x64xf32, #tpu.memory_space<vmem>>, vector<1x1x64xf32>
    %39 = vector.shape_cast %38 : vector<1x1x64xf32> to vector<1x64xf32>
    %40 = vector.broadcast %39 : vector<1x64xf32> to vector<16x64xf32>
    %41 = arith.mulf %37, %40 : vector<16x64xf32>
    %c0_23 = arith.constant 0 : index
    %c0_24 = arith.constant 0 : index
    %c0_25 = arith.constant 0 : index
    %42 = vector.load %arg7[%c0_23, %c0_24, %c0_25] : memref<2x1x64xf32, #tpu.memory_space<vmem>>, vector<1x1x64xf32>
    %43 = vector.shape_cast %42 : vector<1x1x64xf32> to vector<1x64xf32>
    %44 = vector.broadcast %43 : vector<1x64xf32> to vector<16x64xf32>
    %45 = arith.addf %41, %44 : vector<16x64xf32>
    %46 = arith.truncf %45 : vector<16x64xf32> to vector<16x64xbf16>
    %c0_26 = arith.constant 0 : index
    %c0_27 = arith.constant 0 : index
    %c0_28 = arith.constant 0 : index
    %47 = vector.load %arg8[%c0_26, %c0_27, %c0_28] : memref<2x16x64xbf16, #tpu.memory_space<vmem>>, vector<1x16x64xbf16>
    %48 = vector.shape_cast %47 : vector<1x16x64xbf16> to vector<16x64xbf16>
    %49 = vector.shape_cast %46 : vector<16x64xbf16> to vector<1x16x64xbf16>
    tpu.vector_store %arg8[%c0_26, %c0_27, %c0_28], %49 {strides = array<i32>} : memref<2x16x64xbf16, #tpu.memory_space<vmem>>, vector<1x16x64xbf16>,
    %c1 = arith.constant 1 : index
    %c0_29 = arith.constant 0 : index
    %c0_30 = arith.constant 0 : index
    %50 = vector.load %arg2[%c1, %c0_29, %c0_30] : memref<2x64x256xbf16, #tpu.memory_space<vmem>>, vector<1x64x256xbf16>
    %51 = vector.shape_cast %50 : vector<1x64x256xbf16> to vector<64x256xbf16>
    %cst_31 = arith.constant dense<0.000000e+00> : vector<16x256xf32>
    %52 = tpu.matmul %0, %51, %cst_31 {dimension_numbers = #tpu.dot_dimension_numbers<[1], [0], [0], [1], [0, 0, 1, 1], [], []>} : vector<16x64xbf16>, vector<64x256xbf16>, vector<16x256xf32> -> vector<16x256xf32>
    %c1_32 = arith.constant 1 : index
    %c0_33 = arith.constant 0 : index
    %c0_34 = arith.constant 0 : index
    %53 = vector.load %arg3[%c1_32, %c0_33, %c0_34] : memref<2x1x256xf32, #tpu.memory_space<vmem>>, vector<1x1x256xf32>
    %54 = vector.shape_cast %53 : vector<1x1x256xf32> to vector<1x256xf32>
    %55 = vector.broadcast %54 : vector<1x256xf32> to vector<16x256xf32>
    %56 = arith.addf %52, %55 : vector<16x256xf32>
    %cst_35 = arith.constant 0.000000e+00 : f32
    %57 = vector.broadcast %cst_35 : f32 to vector<16x256xf32>
    %58 = arith.maximumf %56, %57 : vector<16x256xf32>
    %59 = arith.truncf %58 : vector<16x256xf32> to vector<16x256xbf16>
    %c1_36 = arith.constant 1 : index
    %c0_37 = arith.constant 0 : index
    %c0_38 = arith.constant 0 : index
    %60 = vector.load %arg4[%c1_36, %c0_37, %c0_38] : memref<2x256x64xbf16, #tpu.memory_space<vmem>>, vector<1x256x64xbf16>
    %61 = vector.shape_cast %60 : vector<1x256x64xbf16> to vector<256x64xbf16>
    %cst_39 = arith.constant dense<0.000000e+00> : vector<16x64xf32>
    %62 = tpu.matmul %59, %61, %cst_39 {dimension_numbers = #tpu.dot_dimension_numbers<[1], [0], [0], [1], [0, 0, 1, 1], [], []>} : vector<16x256xbf16>, vector<256x64xbf16>, vector<16x64xf32> -> vector<16x64xf32>
    %c1_40 = arith.constant 1 : index
    %c0_41 = arith.constant 0 : index
    %c0_42 = arith.constant 0 : index
    %63 = vector.load %arg5[%c1_40, %c0_41, %c0_42] : memref<2x1x64xf32, #tpu.memory_space<vmem>>, vector<1x1x64xf32>
    %64 = vector.shape_cast %63 : vector<1x1x64xf32> to vector<1x64xf32>
    %65 = vector.broadcast %64 : vector<1x64xf32> to vector<16x64xf32>
    %66 = arith.addf %62, %65 : vector<16x64xf32>
    %67 = arith.addf %66, %1 : vector<16x64xf32>
    %cst_43 = arith.constant dense<0.000000e+00> : vector<16xf32>
    %68 = vector.multi_reduction <add>, %67, %cst_43 [1] : vector<16x64xf32> to vector<16xf32>
    %69 = vector.shape_cast %68 : vector<16xf32> to vector<16x1xf32>
    %cst_44 = arith.constant 6.400000e+01 : f32
    %70 = vector.broadcast %cst_44 : f32 to vector<16x1xf32>
    %71 = arith.divf %69, %70 : vector<16x1xf32>
    %72 = vector.broadcast %71 : vector<16x1xf32> to vector<16x64xf32>
    %73 = arith.subf %67, %72 : vector<16x64xf32>
    %74 = arith.mulf %73, %73 : vector<16x64xf32>
    %cst_45 = arith.constant dense<0.000000e+00> : vector<16xf32>
    %75 = vector.multi_reduction <add>, %74, %cst_45 [1] : vector<16x64xf32> to vector<16xf32>
    %76 = vector.shape_cast %75 : vector<16xf32> to vector<16x1xf32>
    %cst_46 = arith.constant 6.400000e+01 : f32
    %77 = vector.broadcast %cst_46 : f32 to vector<16x1xf32>
    %78 = arith.divf %76, %77 : vector<16x1xf32>
    %79 = vector.broadcast %71 : vector<16x1xf32> to vector<16x64xf32>
    %80 = arith.subf %67, %79 : vector<16x64xf32>
    %cst_47 = arith.constant 9.99999974E-6 : f32
    %81 = vector.broadcast %cst_47 : f32 to vector<16x1xf32>
    %82 = arith.addf %78, %81 : vector<16x1xf32>
    %83 = math.rsqrt %82 : vector<16x1xf32>
    %84 = vector.broadcast %83 : vector<16x1xf32> to vector<16x64xf32>
    %85 = arith.mulf %80, %84 : vector<16x64xf32>
    %c1_48 = arith.constant 1 : index
    %c0_49 = arith.constant 0 : index
    %c0_50 = arith.constant 0 : index
    %86 = vector.load %arg6[%c1_48, %c0_49, %c0_50] : memref<2x1x64xf32, #tpu.memory_space<vmem>>, vector<1x1x64xf32>
    %87 = vector.shape_cast %86 : vector<1x1x64xf32> to vector<1x64xf32>
    %88 = vector.broadcast %87 : vector<1x64xf32> to vector<16x64xf32>
    %89 = arith.mulf %85, %88 : vector<16x64xf32>
    %c1_51 = arith.constant 1 : index
    %c0_52 = arith.constant 0 : index
    %c0_53 = arith.constant 0 : index
    %90 = vector.load %arg7[%c1_51, %c0_52, %c0_53] : memref<2x1x64xf32, #tpu.memory_space<vmem>>, vector<1x1x64xf32>
    %91 = vector.shape_cast %90 : vector<1x1x64xf32> to vector<1x64xf32>
    %92 = vector.broadcast %91 : vector<1x64xf32> to vector<16x64xf32>
    %93 = arith.addf %89, %92 : vector<16x64xf32>
    %94 = arith.truncf %93 : vector<16x64xf32> to vector<16x64xbf16>
    %c1_54 = arith.constant 1 : index
    %c0_55 = arith.constant 0 : index
    %c0_56 = arith.constant 0 : index
    %95 = vector.load %arg8[%c1_54, %c0_55, %c0_56] : memref<2x16x64xbf16, #tpu.memory_space<vmem>>, vector<1x16x64xbf16>
    %96 = vector.shape_cast %95 : vector<1x16x64xbf16> to vector<16x64xbf16>
    %97 = vector.shape_cast %94 : vector<16x64xbf16> to vector<1x16x64xbf16>
    tpu.vector_store %arg8[%c1_54, %c0_55, %c0_56], %97 {strides = array<i32>} : memref<2x16x64xbf16, #tpu.memory_space<vmem>>, vector<1x16x64xbf16>,
    return
  }
  func.func @transform_0(%arg0: i32) -> (i32, i32) {
    %c0_i32 = arith.constant 0 : i32
    %c0_i32_0 = arith.constant 0 : i32
    return %arg0, %c0_i32 : i32, i32
  }
  func.func @transform_1(%arg0: i32) -> (i32, i32, i32) {
    %c0_i32 = arith.constant 0 : i32
    %c0_i32_0 = arith.constant 0 : i32
    %c0_i32_1 = arith.constant 0 : i32
    %c0_i32_2 = arith.constant 0 : i32
    return %c0_i32, %c0_i32_0, %c0_i32_1 : i32, i32, i32
  }
  func.func @transform_2(%arg0: i32) -> (i32, i32, i32) {
    %c0_i32 = arith.constant 0 : i32
    %c0_i32_0 = arith.constant 0 : i32
    %c0_i32_1 = arith.constant 0 : i32
    %c0_i32_2 = arith.constant 0 : i32
    return %c0_i32, %c0_i32_0, %c0_i32_1 : i32, i32, i32
  }
  func.func @transform_3(%arg0: i32) -> (i32, i32, i32) {
    %c0_i32 = arith.constant 0 : i32
    %c0_i32_0 = arith.constant 0 : i32
    %c0_i32_1 = arith.constant 0 : i32
    %c0_i32_2 = arith.constant 0 : i32
    return %c0_i32, %c0_i32_0, %c0_i32_1 : i32, i32, i32
  }
  func.func @transform_4(%arg0: i32) -> (i32, i32, i32) {
    %c0_i32 = arith.constant 0 : i32
    %c0_i32_0 = arith.constant 0 : i32
    %c0_i32_1 = arith.constant 0 : i32
    %c0_i32_2 = arith.constant 0 : i32
    return %c0_i32, %c0_i32_0, %c0_i32_1 : i32, i32, i32
  }
  func.func @transform_5(%arg0: i32) -> (i32, i32, i32) {
    %c0_i32 = arith.constant 0 : i32
    %c0_i32_0 = arith.constant 0 : i32
    %c0_i32_1 = arith.constant 0 : i32
    %c0_i32_2 = arith.constant 0 : i32
    return %c0_i32, %c0_i32_0, %c0_i32_1 : i32, i32, i32
  }
  func.func @transform_6(%arg0: i32) -> (i32, i32, i32) {
    %c0_i32 = arith.constant 0 : i32
    %c0_i32_0 = arith.constant 0 : i32
    %c0_i32_1 = arith.constant 0 : i32
    %c0_i32_2 = arith.constant 0 : i32
    return %c0_i32, %c0_i32_0, %c0_i32_1 : i32, i32, i32
  }
  func.func @transform_7(%arg0: i32) -> (i32, i32, i32) {
    %c0_i32 = arith.constant 0 : i32
    %c0_i32_0 = arith.constant 0 : i32
    %c0_i32_1 = arith.constant 0 : i32
    return %c0_i32, %arg0, %c0_i32_0 : i32, i32, i32
  }
}

module attributes {stable_mosaic.version = 11 : i64} {
  func.func @_biaffine_kernel(%arg0: i32, %arg1: memref<1x8x64xbf16, #tpu.memory_space<vmem>>, %arg2: memref<1x8x64xbf16, #tpu.memory_space<vmem>>, %arg3: memref<64x256xbf16, #tpu.memory_space<vmem>>, %arg4: memref<64x4xbf16, #tpu.memory_space<vmem>>, %arg5: memref<4x64xbf16, #tpu.memory_space<vmem>>, %arg6: memref<1x4xf32, #tpu.memory_space<vmem>>, %arg7: memref<1x4x8x8xf32, #tpu.memory_space<vmem>>) attributes {dimension_semantics = [#tpu.dimension_semantics<parallel>], iteration_bounds = array<i64: 2>, scalar_prefetch = 0 : i64, scratch_operands = 0 : i64, tpu.core_type = #tpu.core_type<tc>, window_params = [{transform_indices = @transform_0, window_bounds = array<i64: 1, 8, 64>}, {transform_indices = @transform_1, window_bounds = array<i64: 1, 8, 64>}, {pipeline_mode = #tpu.pipeline_mode<synchronous>, transform_indices = @transform_2, window_bounds = array<i64: 64, 256>}, {pipeline_mode = #tpu.pipeline_mode<synchronous>, transform_indices = @transform_3, window_bounds = array<i64: 64, 4>}, {pipeline_mode = #tpu.pipeline_mode<synchronous>, transform_indices = @transform_4, window_bounds = array<i64: 4, 64>}, {pipeline_mode = #tpu.pipeline_mode<synchronous>, transform_indices = @transform_5, window_bounds = array<i64: 1, 4>}, {transform_indices = @transform_6, window_bounds = array<i64: 1, 4, 8, 8>}]} {
    %c0 = arith.constant 0 : index
    %c0_0 = arith.constant 0 : index
    %c0_1 = arith.constant 0 : index
    %0 = vector.load %arg1[%c0, %c0_0, %c0_1] : memref<1x8x64xbf16, #tpu.memory_space<vmem>>, vector<1x8x64xbf16>
    %1 = vector.shape_cast %0 : vector<1x8x64xbf16> to vector<8x64xbf16>
    %c0_2 = arith.constant 0 : index
    %c0_3 = arith.constant 0 : index
    %c0_4 = arith.constant 0 : index
    %2 = vector.load %arg2[%c0_2, %c0_3, %c0_4] : memref<1x8x64xbf16, #tpu.memory_space<vmem>>, vector<1x8x64xbf16>
    %3 = vector.shape_cast %2 : vector<1x8x64xbf16> to vector<8x64xbf16>
    %c0_5 = arith.constant 0 : index
    %c0_6 = arith.constant 0 : index
    %4 = vector.load %arg4[%c0_5, %c0_6] : memref<64x4xbf16, #tpu.memory_space<vmem>>, vector<64x4xbf16>
    %cst = arith.constant dense<0.000000e+00> : vector<8x4xf32>
    %5 = tpu.matmul %1, %4, %cst {dimension_numbers = #tpu.dot_dimension_numbers<[1], [0], [0], [1], [0, 0, 1, 1], [], []>} : vector<8x64xbf16>, vector<64x4xbf16>, vector<8x4xf32> -> vector<8x4xf32>
    %c0_7 = arith.constant 0 : index
    %c0_8 = arith.constant 0 : index
    %6 = vector.load %arg6[%c0_7, %c0_8] : memref<1x4xf32, #tpu.memory_space<vmem>>, vector<1x4xf32>
    %7 = vector.broadcast %6 : vector<1x4xf32> to vector<8x4xf32>
    %8 = arith.addf %5, %7 : vector<8x4xf32>
    %c0_9 = arith.constant 0 : index
    %c0_10 = arith.constant 0 : index
    %9 = vector.load %arg5[%c0_9, %c0_10] : memref<4x64xbf16, #tpu.memory_space<vmem>>, vector<4x64xbf16>
    %cst_11 = arith.constant dense<0.000000e+00> : vector<4x8xf32>
    %10 = tpu.matmul %9, %3, %cst_11 {dimension_numbers = #tpu.dot_dimension_numbers<[1], [1], [0], [0], [0, 0, 1, 0], [], []>} : vector<4x64xbf16>, vector<8x64xbf16>, vector<4x8xf32> -> vector<4x8xf32>
    %c0_12 = arith.constant 0 : index
    %c0_13 = arith.constant 0 : index
    %11 = vector.load %arg3[%c0_12, %c0_13] : memref<64x256xbf16, #tpu.memory_space<vmem>>, vector<64x256xbf16>
    %cst_14 = arith.constant dense<0.000000e+00> : vector<8x256xf32>
    %12 = tpu.matmul %1, %11, %cst_14 {dimension_numbers = #tpu.dot_dimension_numbers<[1], [0], [0], [1], [0, 0, 1, 1], [], []>} : vector<8x64xbf16>, vector<64x256xbf16>, vector<8x256xf32> -> vector<8x256xf32>
    %13 = vector.extract_strided_slice %12 {offsets = [0, 0], sizes = [8, 64], strides = [1, 1]} : vector<8x256xf32> to vector<8x64xf32>
    %14 = arith.truncf %13 : vector<8x64xf32> to vector<8x64xbf16>
    %cst_15 = arith.constant dense<0.000000e+00> : vector<8x8xf32>
    %15 = tpu.matmul %14, %3, %cst_15 {dimension_numbers = #tpu.dot_dimension_numbers<[1], [1], [0], [0], [0, 0, 1, 0], [], []>} : vector<8x64xbf16>, vector<8x64xbf16>, vector<8x8xf32> -> vector<8x8xf32>
    %16 = vector.extract_strided_slice %8 {offsets = [0, 0], sizes = [8, 1], strides = [1, 1]} : vector<8x4xf32> to vector<8x1xf32>
    %17 = vector.broadcast %16 : vector<8x1xf32> to vector<8x8xf32>
    %18 = arith.addf %15, %17 : vector<8x8xf32>
    %19 = vector.extract_strided_slice %10 {offsets = [0, 0], sizes = [1, 8], strides = [1, 1]} : vector<4x8xf32> to vector<1x8xf32>
    %20 = vector.broadcast %19 : vector<1x8xf32> to vector<8x8xf32>
    %21 = arith.addf %18, %20 : vector<8x8xf32>
    %c0_16 = arith.constant 0 : index
    %c0_17 = arith.constant 0 : index
    %c0_18 = arith.constant 0 : index
    %c0_19 = arith.constant 0 : index
    %22 = vector.load %arg7[%c0_16, %c0_17, %c0_18, %c0_19] : memref<1x4x8x8xf32, #tpu.memory_space<vmem>>, vector<1x1x8x8xf32>
    %23 = vector.shape_cast %22 : vector<1x1x8x8xf32> to vector<8x8xf32>
    %24 = vector.shape_cast %21 : vector<8x8xf32> to vector<1x1x8x8xf32>
    tpu.vector_store %arg7[%c0_16, %c0_17, %c0_18, %c0_19], %24 {strides = array<i32>} : memref<1x4x8x8xf32, #tpu.memory_space<vmem>>, vector<1x1x8x8xf32>,
    %25 = vector.extract_strided_slice %12 {offsets = [0, 64], sizes = [8, 64], strides = [1, 1]} : vector<8x256xf32> to vector<8x64xf32>
    %26 = arith.truncf %25 : vector<8x64xf32> to vector<8x64xbf16>
    %cst_20 = arith.constant dense<0.000000e+00> : vector<8x8xf32>
    %27 = tpu.matmul %26, %3, %cst_20 {dimension_numbers = #tpu.dot_dimension_numbers<[1], [1], [0], [0], [0, 0, 1, 0], [], []>} : vector<8x64xbf16>, vector<8x64xbf16>, vector<8x8xf32> -> vector<8x8xf32>
    %28 = vector.extract_strided_slice %8 {offsets = [0, 1], sizes = [8, 1], strides = [1, 1]} : vector<8x4xf32> to vector<8x1xf32>
    %29 = vector.broadcast %28 : vector<8x1xf32> to vector<8x8xf32>
    %30 = arith.addf %27, %29 : vector<8x8xf32>
    %31 = vector.extract_strided_slice %10 {offsets = [1, 0], sizes = [1, 8], strides = [1, 1]} : vector<4x8xf32> to vector<1x8xf32>
    %32 = vector.broadcast %31 : vector<1x8xf32> to vector<8x8xf32>
    %33 = arith.addf %30, %32 : vector<8x8xf32>
    %c0_21 = arith.constant 0 : index
    %c1 = arith.constant 1 : index
    %c0_22 = arith.constant 0 : index
    %c0_23 = arith.constant 0 : index
    %34 = vector.load %arg7[%c0_21, %c1, %c0_22, %c0_23] : memref<1x4x8x8xf32, #tpu.memory_space<vmem>>, vector<1x1x8x8xf32>
    %35 = vector.shape_cast %34 : vector<1x1x8x8xf32> to vector<8x8xf32>
    %36 = vector.shape_cast %33 : vector<8x8xf32> to vector<1x1x8x8xf32>
    tpu.vector_store %arg7[%c0_21, %c1, %c0_22, %c0_23], %36 {strides = array<i32>} : memref<1x4x8x8xf32, #tpu.memory_space<vmem>>, vector<1x1x8x8xf32>,
    %37 = vector.extract_strided_slice %12 {offsets = [0, 128], sizes = [8, 64], strides = [1, 1]} : vector<8x256xf32> to vector<8x64xf32>
    %38 = arith.truncf %37 : vector<8x64xf32> to vector<8x64xbf16>
    %cst_24 = arith.constant dense<0.000000e+00> : vector<8x8xf32>
    %39 = tpu.matmul %38, %3, %cst_24 {dimension_numbers = #tpu.dot_dimension_numbers<[1], [1], [0], [0], [0, 0, 1, 0], [], []>} : vector<8x64xbf16>, vector<8x64xbf16>, vector<8x8xf32> -> vector<8x8xf32>
    %40 = vector.extract_strided_slice %8 {offsets = [0, 2], sizes = [8, 1], strides = [1, 1]} : vector<8x4xf32> to vector<8x1xf32>
    %41 = vector.broadcast %40 : vector<8x1xf32> to vector<8x8xf32>
    %42 = arith.addf %39, %41 : vector<8x8xf32>
    %43 = vector.extract_strided_slice %10 {offsets = [2, 0], sizes = [1, 8], strides = [1, 1]} : vector<4x8xf32> to vector<1x8xf32>
    %44 = vector.broadcast %43 : vector<1x8xf32> to vector<8x8xf32>
    %45 = arith.addf %42, %44 : vector<8x8xf32>
    %c0_25 = arith.constant 0 : index
    %c2 = arith.constant 2 : index
    %c0_26 = arith.constant 0 : index
    %c0_27 = arith.constant 0 : index
    %46 = vector.load %arg7[%c0_25, %c2, %c0_26, %c0_27] : memref<1x4x8x8xf32, #tpu.memory_space<vmem>>, vector<1x1x8x8xf32>
    %47 = vector.shape_cast %46 : vector<1x1x8x8xf32> to vector<8x8xf32>
    %48 = vector.shape_cast %45 : vector<8x8xf32> to vector<1x1x8x8xf32>
    tpu.vector_store %arg7[%c0_25, %c2, %c0_26, %c0_27], %48 {strides = array<i32>} : memref<1x4x8x8xf32, #tpu.memory_space<vmem>>, vector<1x1x8x8xf32>,
    %49 = vector.extract_strided_slice %12 {offsets = [0, 192], sizes = [8, 64], strides = [1, 1]} : vector<8x256xf32> to vector<8x64xf32>
    %50 = arith.truncf %49 : vector<8x64xf32> to vector<8x64xbf16>
    %cst_28 = arith.constant dense<0.000000e+00> : vector<8x8xf32>
    %51 = tpu.matmul %50, %3, %cst_28 {dimension_numbers = #tpu.dot_dimension_numbers<[1], [1], [0], [0], [0, 0, 1, 0], [], []>} : vector<8x64xbf16>, vector<8x64xbf16>, vector<8x8xf32> -> vector<8x8xf32>
    %52 = vector.extract_strided_slice %8 {offsets = [0, 3], sizes = [8, 1], strides = [1, 1]} : vector<8x4xf32> to vector<8x1xf32>
    %53 = vector.broadcast %52 : vector<8x1xf32> to vector<8x8xf32>
    %54 = arith.addf %51, %53 : vector<8x8xf32>
    %55 = vector.extract_strided_slice %10 {offsets = [3, 0], sizes = [1, 8], strides = [1, 1]} : vector<4x8xf32> to vector<1x8xf32>
    %56 = vector.broadcast %55 : vector<1x8xf32> to vector<8x8xf32>
    %57 = arith.addf %54, %56 : vector<8x8xf32>
    %c0_29 = arith.constant 0 : index
    %c3 = arith.constant 3 : index
    %c0_30 = arith.constant 0 : index
    %c0_31 = arith.constant 0 : index
    %58 = vector.load %arg7[%c0_29, %c3, %c0_30, %c0_31] : memref<1x4x8x8xf32, #tpu.memory_space<vmem>>, vector<1x1x8x8xf32>
    %59 = vector.shape_cast %58 : vector<1x1x8x8xf32> to vector<8x8xf32>
    %60 = vector.shape_cast %57 : vector<8x8xf32> to vector<1x1x8x8xf32>
    tpu.vector_store %arg7[%c0_29, %c3, %c0_30, %c0_31], %60 {strides = array<i32>} : memref<1x4x8x8xf32, #tpu.memory_space<vmem>>, vector<1x1x8x8xf32>,
    return
  }
  func.func @transform_0(%arg0: i32) -> (i32, i32, i32) {
    %c0_i32 = arith.constant 0 : i32
    %c0_i32_0 = arith.constant 0 : i32
    %c0_i32_1 = arith.constant 0 : i32
    return %arg0, %c0_i32, %c0_i32_0 : i32, i32, i32
  }
  func.func @transform_1(%arg0: i32) -> (i32, i32, i32) {
    %c0_i32 = arith.constant 0 : i32
    %c0_i32_0 = arith.constant 0 : i32
    %c0_i32_1 = arith.constant 0 : i32
    return %arg0, %c0_i32, %c0_i32_0 : i32, i32, i32
  }
  func.func @transform_2(%arg0: i32) -> (i32, i32) {
    %c0_i32 = arith.constant 0 : i32
    %c0_i32_0 = arith.constant 0 : i32
    %c0_i32_1 = arith.constant 0 : i32
    return %c0_i32, %c0_i32_0 : i32, i32
  }
  func.func @transform_3(%arg0: i32) -> (i32, i32) {
    %c0_i32 = arith.constant 0 : i32
    %c0_i32_0 = arith.constant 0 : i32
    %c0_i32_1 = arith.constant 0 : i32
    return %c0_i32, %c0_i32_0 : i32, i32
  }
  func.func @transform_4(%arg0: i32) -> (i32, i32) {
    %c0_i32 = arith.constant 0 : i32
    %c0_i32_0 = arith.constant 0 : i32
    %c0_i32_1 = arith.constant 0 : i32
    return %c0_i32, %c0_i32_0 : i32, i32
  }
  func.func @transform_5(%arg0: i32) -> (i32, i32) {
    %c0_i32 = arith.constant 0 : i32
    %c0_i32_0 = arith.constant 0 : i32
    %c0_i32_1 = arith.constant 0 : i32
    return %c0_i32, %c0_i32_0 : i32, i32
  }
  func.func @transform_6(%arg0: i32) -> (i32, i32, i32, i32) {
    %c0_i32 = arith.constant 0 : i32
    %c0_i32_0 = arith.constant 0 : i32
    %c0_i32_1 = arith.constant 0 : i32
    %c0_i32_2 = arith.constant 0 : i32
    return %arg0, %c0_i32, %c0_i32_0, %c0_i32_1 : i32, i32, i32, i32
  }
}

</mosaic_0001>

<llo_original>
// kernel: smodel_forward.10
$region0: #{smodel_forward.10}
  #allocation0 [shape = 'u32[]', space=smem, size = 0x4, offset = 0x4, fixed_abs, tag = 'smem constant byte address 0x4 - core index']
  #allocation1 [shape = 'u32[144,128]{1,0:T(1,128)}', space=vmem, size = 0x12000, scoped, tag = 'internal scratch']
  %s0 = inlined_call_operand.vmem [shape: bf16[16,64], index: 0, kind: input, shape index: {}]
  %s1 = inlined_call_operand.vmem [shape: bf16[64,256], index: 1, kind: input, shape index: {}]
  %s2 = inlined_call_operand.vmem [shape: f32[1,256], index: 2, kind: input, shape index: {}]
  %s3 = inlined_call_operand.vmem [shape: bf16[16,256], index: 3, kind: output, shape index: {}]
  %s4 = sld [smem:[#allocation0]]
  $region22: #{smodel_forward.10} parent=0
    _
  %s6 = ssub.s32 1, %s4
  %s7 = scalar_select 0, %s6, %s4
  // Predicated region
  $region2: #{smodel_forward.10} parent=0 // pred_check
    _
  $region3: #{smodel_forward.10} parent=0 // pred_check_branch
    %9 = sbr.rel (0) target = $region5
  $region4: #{smodel_forward.10} parent=0 // pred_region
    _
  $region5: #{smodel_forward.10} parent=0 // pred_fallthru
    _
  // Predicated region
  $region6: #{smodel_forward.10} parent=0 // pred_check
    _
  $region7: #{smodel_forward.10} parent=0 // pred_check_branch
    %11 = sbr.rel (0) target = $region9
  $region8: #{smodel_forward.10} parent=0 // pred_region
    _
  $region9: #{smodel_forward.10} parent=0 // pred_fallthru
    _
  // Predicated region
  $region10: #{smodel_forward.10} parent=0 // pred_check
    _
  $region11: #{smodel_forward.10} parent=0 // pred_check_branch
    %13 = sbr.rel (0) target = $region13
  $region12: #{smodel_forward.10} parent=0 // pred_region
    _
  $region13: #{smodel_forward.10} parent=0 // pred_fallthru
    _
  %v15 = vld [vmem:[%s0] sm:$0xf]
  %v16 = vld [vmem:[%s0 + $0x4] sm:$0xf]
  %v17 = vld [vmem:[%s1] sm:$0xff]
  %v18 = vld [vmem:[%s1 + $0x8] sm:$0xff]
  %v19 = vld [vmem:[%s1 + $0x10] sm:$0xff]
  %v20 = vld [vmem:[%s1 + $0x18] sm:$0xff]
  %v21 = vld [vmem:[%s1 + $0x20] sm:$0xff]
  %v22 = vld [vmem:[%s1 + $0x28] sm:$0xff]
  %v23 = vld [vmem:[%s1 + $0x30] sm:$0xff]
  %v24 = vld [vmem:[%s1 + $0x38] sm:$0xff]
  %v25 = vld [vmem:[%s2] sm:$0x3]
  %v27 = vlaneseq
  %v28 = vshrl.u32 %v27, 7
  %v29 = vsub.s32 0, %v28
  %v30 = vrot.slane %v25, %v29
  %v31 = vlaneseq
  %v32 = vshrl.u32 %v31, 7
  %v33 = vsub.s32 1, %v32
  %v34 = vrot.slane %v25, %v33
  %v39 = vunpack.c.l.b16 %v15
  %v40 = vunpack.c.l.b16 %v16
  %v41 = vpack.c.b16 %v40, %v39
  %v50 = vunpack.c.l.b16 %v17
  %v51 = vunpack.c.h.b16 %v17
  %v52 = vunpack.c.l.b16 %v18
  %v53 = vunpack.c.h.b16 %v18
  %v54 = vunpack.c.l.b16 %v19
  %v55 = vunpack.c.h.b16 %v19
  %v56 = vunpack.c.l.b16 %v20
  %v57 = vunpack.c.h.b16 %v20
  %v58 = vunpack.c.l.b16 %v21
  %v59 = vunpack.c.h.b16 %v21
  %v60 = vunpack.c.l.b16 %v22
  %v61 = vunpack.c.h.b16 %v22
  %v62 = vunpack.c.l.b16 %v23
  %v63 = vunpack.c.h.b16 %v23
  %v64 = vunpack.c.l.b16 %v24
  %v65 = vunpack.c.h.b16 %v24
  %v66 = vpack.c.b16 %v52, %v50
  %v67 = vpack.c.b16 %v53, %v51
  %v68 = vpack.c.b16 %v56, %v54
  %v69 = vpack.c.b16 %v57, %v55
  %v70 = vpack.c.b16 %v60, %v58
  %v71 = vpack.c.b16 %v61, %v59
  %v72 = vpack.c.b16 %v64, %v62
  %v73 = vpack.c.b16 %v65, %v63
  %vm82 = vcmask 523264
  %v84 = vsel %vm82, %v41, 0
  %86 = vmatprep.subr.bf16.mxu0 0
  %87 = vmatpush1.bf16.msra.mxu0 0
  %88 = vmatprep.subr.bf16.mxu0 0
  %89 = vmatpush1.bf16.msra.mxu0 0
  %90 = vmatprep.subr.bf16.mxu0 0
  %91 = vmatpush1.bf16.msra.mxu0 0
  %92 = vmatprep.subr.bf16.mxu0 0
  %93 = vmatpush1.bf16.msra.mxu0 0
  %94 = vmatprep.subr.bf16.mxu0 %v73
  %95 = vmatpush1.bf16.msra.mxu0 %v72
  %96 = vmatprep.subr.bf16.mxu0 %v71
  %97 = vmatpush1.bf16.msra.mxu0 %v70
  %98 = vmatprep.subr.bf16.mxu0 %v69
  %99 = vmatpush1.bf16.msra.mxu0 %v68
  %100 = vmatprep.subr.bf16.mxu0 %v67
  %101 = vmatpush1.bf16.msra.mxu0 %v66
  %102 = vmatprep.subr.bf16.mxu0 0
  %103 = vmatpush2.bf16.msra.mxu0 0
  %104 = vmatprep.subr.bf16.mxu0 0
  %105 = vmatpush2.bf16.msra.mxu0 0
  %106 = vmatprep.subr.bf16.mxu0 0
  %107 = vmatpush2.bf16.msra.mxu0 0
  %108 = vmatprep.subr.bf16.mxu0 0
  %109 = vmatpush2.bf16.msra.mxu0 0
  %110 = vmatprep.subr.bf16.mxu0 0
  %111 = vmatpush2.bf16.msra.mxu0 0
  %112 = vmatprep.subr.bf16.mxu0 0
  %113 = vmatpush2.bf16.msra.mxu0 0
  %114 = vmatprep.subr.bf16.mxu0 0
  %115 = vmatpush2.bf16.msra.mxu0 0
  %116 = vmatprep.subr.bf16.mxu0 0
  %117 = vmatpush2.bf16.msra.mxu0 0
  %118 = vmatprep.mubr.bf16.mxu0 0
  %119 = vmatmul.mubr.bf16.gmra.mxu0 %v84
  %v120 = vpop.f32.mrf.mxu0
  %v121 = vadd.f32 %v30, %v120
  %v122 = vpop.f32.mrf.mxu0
  %v123 = vadd.f32 %v34, %v122
  %v124 = vpop.f32.mrf.mxu0
  %v125 = vadd.f32 %v30, %v124
  %v126 = vpop.f32.mrf.mxu0
  %v127 = vadd.f32 %v34, %v126
  %128 = vdwg.mxu0
  %v129 = vpack.c.bf16 %v125, %v121
  %v130 = vpack.c.bf16 %v127, %v123
  %v133 = vunpack.c.l.b16 %v129
  %v134 = vunpack.c.l.b16 %v130
  %v135 = vunpack.c.h.b16 %v129
  %v136 = vunpack.c.h.b16 %v130
  %v137 = vpack.c.b16 %v134, %v133
  %v138 = vpack.c.b16 %v136, %v135
  %141 = vst [vmem:[%s3] sm:$0xff] %v137
  %142 = vst [vmem:[%s3 + $0x8] sm:$0xff] %v138
  // Predicated region
  $region14: #{smodel_forward.10} parent=0 // pred_check
    _
  $region15: #{smodel_forward.10} parent=0 // pred_check_branch
    %144 = sbr.rel (0) target = $region17
  $region16: #{smodel_forward.10} parent=0 // pred_region
    _
  $region17: #{smodel_forward.10} parent=0 // pred_fallthru
    _
  // Predicated region
  $region18: #{smodel_forward.10} parent=0 // pred_check
    _
  $region19: #{smodel_forward.10} parent=0 // pred_check_branch
    %146 = sbr.rel (0) target = $region21
  $region20: #{smodel_forward.10} parent=0 // pred_region
    _
  $region21: #{smodel_forward.10} parent=0 // pred_fallthru
    _

// kernel: smodel_forward.8
$region0: #{smodel_forward.8}
  #allocation0 [shape = 'u32[]', space=smem, size = 0x4, offset = 0x4, fixed_abs, tag = 'smem constant byte address 0x4 - core index']
  #allocation1 [shape = 'u32[144,128]{1,0:T(1,128)}', space=vmem, size = 0x12000, scoped, tag = 'internal scratch']
  %s0 = inlined_call_operand.vmem [shape: bf16[16,32], index: 0, kind: input, shape index: {}]
  %s1 = inlined_call_operand.vmem [shape: bf16[32,256], index: 1, kind: input, shape index: {}]
  %s2 = inlined_call_operand.vmem [shape: f32[1,256], index: 2, kind: input, shape index: {}]
  %s3 = inlined_call_operand.vmem [shape: bf16[16,256], index: 3, kind: output, shape index: {}]
  %s4 = sld [smem:[#allocation0]]
  $region22: #{smodel_forward.8} parent=0
    _
  %s6 = ssub.s32 1, %s4
  %s7 = scalar_select 0, %s6, %s4
  // Predicated region
  $region2: #{smodel_forward.8} parent=0 // pred_check
    _
  $region3: #{smodel_forward.8} parent=0 // pred_check_branch
    %9 = sbr.rel (0) target = $region5
  $region4: #{smodel_forward.8} parent=0 // pred_region
    _
  $region5: #{smodel_forward.8} parent=0 // pred_fallthru
    _
  // Predicated region
  $region6: #{smodel_forward.8} parent=0 // pred_check
    _
  $region7: #{smodel_forward.8} parent=0 // pred_check_branch
    %11 = sbr.rel (0) target = $region9
  $region8: #{smodel_forward.8} parent=0 // pred_region
    _
  $region9: #{smodel_forward.8} parent=0 // pred_fallthru
    _
  // Predicated region
  $region10: #{smodel_forward.8} parent=0 // pred_check
    _
  $region11: #{smodel_forward.8} parent=0 // pred_check_branch
    %13 = sbr.rel (0) target = $region13
  $region12: #{smodel_forward.8} parent=0 // pred_region
    _
  $region13: #{smodel_forward.8} parent=0 // pred_fallthru
    _
  %v15 = vld [vmem:[%s0] sm:$0xf]
  %v16 = vld [vmem:[%s0 + $0x4] sm:$0xf]
  %v17 = vld [vmem:[%s1] sm:$0xff]
  %v18 = vld [vmem:[%s1 + $0x8] sm:$0xff]
  %v19 = vld [vmem:[%s1 + $0x10] sm:$0xff]
  %v20 = vld [vmem:[%s1 + $0x18] sm:$0xff]
  %v21 = vld [vmem:[%s2] sm:$0x3]
  %v23 = vlaneseq
  %v24 = vshrl.u32 %v23, 7
  %v25 = vsub.s32 0, %v24
  %v26 = vrot.slane %v21, %v25
  %v27 = vlaneseq
  %v28 = vshrl.u32 %v27, 7
  %v29 = vsub.s32 1, %v28
  %v30 = vrot.slane %v21, %v29
  %v35 = vunpack.c.l.b16 %v15
  %v36 = vunpack.c.l.b16 %v16
  %v37 = vpack.c.b16 %v36, %v35
  %v42 = vunpack.c.l.b16 %v17
  %v43 = vunpack.c.h.b16 %v17
  %v44 = vunpack.c.l.b16 %v18
  %v45 = vunpack.c.h.b16 %v18
  %v46 = vunpack.c.l.b16 %v19
  %v47 = vunpack.c.h.b16 %v19
  %v48 = vunpack.c.l.b16 %v20
  %v49 = vunpack.c.h.b16 %v20
  %v50 = vpack.c.b16 %v44, %v42
  %v51 = vpack.c.b16 %v45, %v43
  %v52 = vpack.c.b16 %v48, %v46
  %v53 = vpack.c.b16 %v49, %v47
  %vm58 = vcmask 261120
  %v60 = vsel %vm58, %v37, 0
  %62 = vmatprep.subr.bf16.mxu0 0
  %63 = vmatpush1.bf16.msra.mxu0 0
  %64 = vmatprep.subr.bf16.mxu0 0
  %65 = vmatpush1.bf16.msra.mxu0 0
  %66 = vmatprep.subr.bf16.mxu0 0
  %67 = vmatpush1.bf16.msra.mxu0 0
  %68 = vmatprep.subr.bf16.mxu0 0
  %69 = vmatpush1.bf16.msra.mxu0 0
  %70 = vmatprep.subr.bf16.mxu0 0
  %71 = vmatpush1.bf16.msra.mxu0 0
  %72 = vmatprep.subr.bf16.mxu0 0
  %73 = vmatpush1.bf16.msra.mxu0 0
  %74 = vmatprep.subr.bf16.mxu0 %v53
  %75 = vmatpush1.bf16.msra.mxu0 %v52
  %76 = vmatprep.subr.bf16.mxu0 %v51
  %77 = vmatpush1.bf16.msra.mxu0 %v50
  %78 = vmatprep.subr.bf16.mxu0 0
  %79 = vmatpush2.bf16.msra.mxu0 0
  %80 = vmatprep.subr.bf16.mxu0 0
  %81 = vmatpush2.bf16.msra.mxu0 0
  %82 = vmatprep.subr.bf16.mxu0 0
  %83 = vmatpush2.bf16.msra.mxu0 0
  %84 = vmatprep.subr.bf16.mxu0 0
  %85 = vmatpush2.bf16.msra.mxu0 0
  %86 = vmatprep.subr.bf16.mxu0 0
  %87 = vmatpush2.bf16.msra.mxu0 0
  %88 = vmatprep.subr.bf16.mxu0 0
  %89 = vmatpush2.bf16.msra.mxu0 0
  %90 = vmatprep.subr.bf16.mxu0 0
  %91 = vmatpush2.bf16.msra.mxu0 0
  %92 = vmatprep.subr.bf16.mxu0 0
  %93 = vmatpush2.bf16.msra.mxu0 0
  %94 = vmatprep.mubr.bf16.mxu0 0
  %95 = vmatmul.mubr.bf16.gmra.mxu0 %v60
  %v96 = vpop.f32.mrf.mxu0
  %v97 = vadd.f32 %v26, %v96
  %v98 = vpop.f32.mrf.mxu0
  %v99 = vadd.f32 %v30, %v98
  %v100 = vpop.f32.mrf.mxu0
  %v101 = vadd.f32 %v26, %v100
  %v102 = vpop.f32.mrf.mxu0
  %v103 = vadd.f32 %v30, %v102
  %104 = vdwg.mxu0
  %v105 = vpack.c.bf16 %v101, %v97
  %v106 = vpack.c.bf16 %v103, %v99
  %v109 = vunpack.c.l.b16 %v105
  %v110 = vunpack.c.l.b16 %v106
  %v111 = vunpack.c.h.b16 %v105
  %v112 = vunpack.c.h.b16 %v106
  %v113 = vpack.c.b16 %v110, %v109
  %v114 = vpack.c.b16 %v112, %v111
  %117 = vst [vmem:[%s3] sm:$0xff] %v113
  %118 = vst [vmem:[%s3 + $0x8] sm:$0xff] %v114
  // Predicated region
  $region14: #{smodel_forward.8} parent=0 // pred_check
    _
  $region15: #{smodel_forward.8} parent=0 // pred_check_branch
    %120 = sbr.rel (0) target = $region17
  $region16: #{smodel_forward.8} parent=0 // pred_region
    _
  $region17: #{smodel_forward.8} parent=0 // pred_fallthru
    _
  // Predicated region
  $region18: #{smodel_forward.8} parent=0 // pred_check
    _
  $region19: #{smodel_forward.8} parent=0 // pred_check_branch
    %122 = sbr.rel (0) target = $region21
  $region20: #{smodel_forward.8} parent=0 // pred_region
    _
  $region21: #{smodel_forward.8} parent=0 // pred_fallthru
    _

// kernel: smodel_forward.7
$region0: #{smodel_forward.7}
  #allocation0 [shape = 'u32[]', space=smem, size = 0x4, offset = 0x4, fixed_abs, tag = 'smem constant byte address 0x4 - core index']
  #allocation1 [shape = 'u32[144,128]{1,0:T(1,128)}', space=vmem, size = 0x12000, scoped, tag = 'internal scratch']
  %s0 = inlined_call_operand.vmem [shape: bf16[16,16], index: 0, kind: input, shape index: {}]
  %s1 = inlined_call_operand.vmem [shape: bf16[16,32], index: 1, kind: input, shape index: {}]
  %s2 = inlined_call_operand.vmem [shape: f32[1,32], index: 2, kind: input, shape index: {}]
  %s3 = inlined_call_operand.vmem [shape: bf16[16,32], index: 3, kind: output, shape index: {}]
  %s4 = sld [smem:[#allocation0]]
  $region22: #{smodel_forward.7} parent=0
    _
  %s6 = ssub.s32 1, %s4
  %s7 = scalar_select 0, %s6, %s4
  // Predicated region
  $region2: #{smodel_forward.7} parent=0 // pred_check
    _
  $region3: #{smodel_forward.7} parent=0 // pred_check_branch
    %9 = sbr.rel (0) target = $region5
  $region4: #{smodel_forward.7} parent=0 // pred_region
    _
  $region5: #{smodel_forward.7} parent=0 // pred_fallthru
    _
  // Predicated region
  $region6: #{smodel_forward.7} parent=0 // pred_check
    _
  $region7: #{smodel_forward.7} parent=0 // pred_check_branch
    %11 = sbr.rel (0) target = $region9
  $region8: #{smodel_forward.7} parent=0 // pred_region
    _
  $region9: #{smodel_forward.7} parent=0 // pred_fallthru
    _
  // Predicated region
  $region10: #{smodel_forward.7} parent=0 // pred_check
    _
  $region11: #{smodel_forward.7} parent=0 // pred_check_branch
    %13 = sbr.rel (0) target = $region13
  $region12: #{smodel_forward.7} parent=0 // pred_region
    _
  $region13: #{smodel_forward.7} parent=0 // pred_fallthru
    _
  %v15 = vld [vmem:[%s0] sm:$0xf]
  %v16 = vld [vmem:[%s0 + $0x4] sm:$0xf]
  %v17 = vld [vmem:[%s1] sm:$0xf]
  %v18 = vld [vmem:[%s1 + $0x4] sm:$0xf]
  %v19 = vld [vmem:[%s2] sm:$0x1]
  %v21 = vlaneseq
  %v22 = vshrl.u32 %v21, 7
  %v23 = vsub.s32 0, %v22
  %v24 = vrot.slane %v19, %v23
  %v28 = vunpack.c.l.b16 %v15
  %v29 = vunpack.c.l.b16 %v16
  %v30 = vpack.c.b16 %v29, %v28
  %v33 = vunpack.c.l.b16 %v17
  %v34 = vunpack.c.l.b16 %v18
  %v35 = vpack.c.b16 %v34, %v33
  %vm37 = vcmask 130048
  %v39 = vsel %vm37, %v30, 0
  %41 = vmatprep.subr.bf16.mxu0 0
  %42 = vmatpush1.bf16.msra.mxu0 0
  %43 = vmatprep.subr.bf16.mxu0 0
  %44 = vmatpush1.bf16.msra.mxu0 0
  %45 = vmatprep.subr.bf16.mxu0 0
  %46 = vmatpush1.bf16.msra.mxu0 0
  %47 = vmatprep.subr.bf16.mxu0 0
  %48 = vmatpush1.bf16.msra.mxu0 0
  %49 = vmatprep.subr.bf16.mxu0 0
  %50 = vmatpush1.bf16.msra.mxu0 0
  %51 = vmatprep.subr.bf16.mxu0 0
  %52 = vmatpush1.bf16.msra.mxu0 0
  %53 = vmatprep.subr.bf16.mxu0 0
  %54 = vmatpush1.bf16.msra.mxu0 0
  %55 = vmatprep.subr.bf16.mxu0 0
  %56 = vmatpush1.bf16.msra.mxu0 %v35
  %57 = vmatprep.subr.bf16.mxu0 0
  %58 = vmatpush2.bf16.msra.mxu0 0
  %59 = vmatprep.subr.bf16.mxu0 0
  %60 = vmatpush2.bf16.msra.mxu0 0
  %61 = vmatprep.subr.bf16.mxu0 0
  %62 = vmatpush2.bf16.msra.mxu0 0
  %63 = vmatprep.subr.bf16.mxu0 0
  %64 = vmatpush2.bf16.msra.mxu0 0
  %65 = vmatprep.subr.bf16.mxu0 0
  %66 = vmatpush2.bf16.msra.mxu0 0
  %67 = vmatprep.subr.bf16.mxu0 0
  %68 = vmatpush2.bf16.msra.mxu0 0
  %69 = vmatprep.subr.bf16.mxu0 0
  %70 = vmatpush2.bf16.msra.mxu0 0
  %71 = vmatprep.subr.bf16.mxu0 0
  %72 = vmatpush2.bf16.msra.mxu0 0
  %73 = vmatprep.mubr.bf16.mxu0 0
  %74 = vmatmul.mubr.bf16.gmra.mxu0 %v39
  %v75 = vpop.f32.mrf.mxu0
  %v76 = vadd.f32 %v24, %v75
  %v77 = vpop.f32.mrf.mxu0
  %v78 = vpop.f32.mrf.mxu0
  %v79 = vadd.f32 %v24, %v78
  %v80 = vpop.f32.mrf.mxu0
  %81 = vdwg.mxu0
  %v82 = vmax.f32 %v76, 0.0
  %v83 = vmax.f32 %v79, 0.0
  %v84 = vpack.c.bf16 %v83, %v82
  %v86 = vunpack.c.l.b16 %v84
  %v87 = vunpack.c.h.b16 %v84
  %v88 = vpack.c.b16 %v86, %v86
  %v89 = vpack.c.b16 %v87, %v87
  %vm92 = vcmask 257024
  %93 = vst.msk [vmem:[%s3] sm:$0xf] %vm92, %v88
  %94 = vst.msk [vmem:[%s3 + $0x4] sm:$0xf] %vm92, %v89
  // Predicated region
  $region14: #{smodel_forward.7} parent=0 // pred_check
    _
  $region15: #{smodel_forward.7} parent=0 // pred_check_branch
    %96 = sbr.rel (0) target = $region17
  $region16: #{smodel_forward.7} parent=0 // pred_region
    _
  $region17: #{smodel_forward.7} parent=0 // pred_fallthru
    _
  // Predicated region
  $region18: #{smodel_forward.7} parent=0 // pred_check
    _
  $region19: #{smodel_forward.7} parent=0 // pred_check_branch
    %98 = sbr.rel (0) target = $region21
  $region20: #{smodel_forward.7} parent=0 // pred_region
    _
  $region21: #{smodel_forward.7} parent=0 // pred_fallthru
    _

// kernel: smodel_forward.12
$region0: #{smodel_forward.12}
  #allocation0 [shape = 'u32[]', space=smem, size = 0x4, offset = 0x4, fixed_abs, tag = 'smem constant byte address 0x4 - core index']
  #allocation1 [shape = 'u32[144,128]{1,0:T(1,128)}', space=vmem, size = 0x12000, scoped, tag = 'internal scratch']
  %s0 = inlined_call_operand.vmem [shape: bf16[16,64], index: 0, kind: input, shape index: {}]
  %s1 = inlined_call_operand.vmem [shape: bf16[2,64,256], index: 1, kind: input, shape index: {}]
  %s2 = inlined_call_operand.vmem [shape: f32[2,1,256], index: 2, kind: input, shape index: {}]
  %s3 = inlined_call_operand.vmem [shape: bf16[2,256,64], index: 3, kind: input, shape index: {}]
  %s4 = inlined_call_operand.vmem [shape: f32[2,1,64], index: 4, kind: input, shape index: {}]
  %s5 = inlined_call_operand.vmem [shape: f32[2,1,64], index: 5, kind: input, shape index: {}]
  %s6 = inlined_call_operand.vmem [shape: f32[2,1,64], index: 6, kind: input, shape index: {}]
  %s7 = inlined_call_operand.vmem [shape: bf16[2,16,64], index: 7, kind: output, shape index: {}]
  %s8 = sld [smem:[#allocation0]]
  $region38: #{smodel_forward.12} parent=0
    _
  %s10 = ssub.s32 1, %s8
  %s11 = scalar_select 0, %s10, %s8
  // Predicated region
  $region2: #{smodel_forward.12} parent=0 // pred_check
    _
  $region3: #{smodel_forward.12} parent=0 // pred_check_branch
    %13 = sbr.rel (0) target = $region5
  $region4: #{smodel_forward.12} parent=0 // pred_region
    _
  $region5: #{smodel_forward.12} parent=0 // pred_fallthru
    _
  // Predicated region
  $region6: #{smodel_forward.12} parent=0 // pred_check
    _
  $region7: #{smodel_forward.12} parent=0 // pred_check_branch
    %15 = sbr.rel (0) target = $region9
  $region8: #{smodel_forward.12} parent=0 // pred_region
    _
  $region9: #{smodel_forward.12} parent=0 // pred_fallthru
    _
  // Predicated region
  $region10: #{smodel_forward.12} parent=0 // pred_check
    _
  $region11: #{smodel_forward.12} parent=0 // pred_check_branch
    %17 = sbr.rel (0) target = $region13
  $region12: #{smodel_forward.12} parent=0 // pred_region
    _
  $region13: #{smodel_forward.12} parent=0 // pred_fallthru
    _
  // Predicated region
  $region14: #{smodel_forward.12} parent=0 // pred_check
    _
  $region15: #{smodel_forward.12} parent=0 // pred_check_branch
    %19 = sbr.rel (0) target = $region17
  $region16: #{smodel_forward.12} parent=0 // pred_region
    _
  $region17: #{smodel_forward.12} parent=0 // pred_fallthru
    _
  // Predicated region
  $region18: #{smodel_forward.12} parent=0 // pred_check
    _
  $region19: #{smodel_forward.12} parent=0 // pred_check_branch
    %21 = sbr.rel (0) target = $region21
  $region20: #{smodel_forward.12} parent=0 // pred_region
    _
  $region21: #{smodel_forward.12} parent=0 // pred_fallthru
    _
  // Predicated region
  $region22: #{smodel_forward.12} parent=0 // pred_check
    _
  $region23: #{smodel_forward.12} parent=0 // pred_check_branch
    %23 = sbr.rel (0) target = $region25
  $region24: #{smodel_forward.12} parent=0 // pred_region
    _
  $region25: #{smodel_forward.12} parent=0 // pred_fallthru
    _
  // Predicated region
  $region26: #{smodel_forward.12} parent=0 // pred_check
    _
  $region27: #{smodel_forward.12} parent=0 // pred_check_branch
    %25 = sbr.rel (0) target = $region29
  $region28: #{smodel_forward.12} parent=0 // pred_region
    _
  $region29: #{smodel_forward.12} parent=0 // pred_fallthru
    _
  %v27 = vld [vmem:[%s0] sm:$0xf]
  %v28 = vld [vmem:[%s0 + $0x4] sm:$0xf]
  %v29 = vunpack.c.l.bf16 %v27
  %v30 = vunpack.c.l.bf16 %v28
  %v31 = vld [vmem:[%s1] sm:$0xff]
  %v32 = vld [vmem:[%s1 + $0x8] sm:$0xff]
  %v33 = vld [vmem:[%s1 + $0x10] sm:$0xff]
  %v34 = vld [vmem:[%s1 + $0x18] sm:$0xff]
  %v35 = vld [vmem:[%s1 + $0x20] sm:$0xff]
  %v36 = vld [vmem:[%s1 + $0x28] sm:$0xff]
  %v37 = vld [vmem:[%s1 + $0x30] sm:$0xff]
  %v38 = vld [vmem:[%s1 + $0x38] sm:$0xff]
  %v39 = vld [vmem:[%s2] sm:$0x3]
  %v41 = vlaneseq
  %v42 = vshrl.u32 %v41, 7
  %v43 = vsub.s32 0, %v42
  %v44 = vrot.slane %v39, %v43
  %v45 = vlaneseq
  %v46 = vshrl.u32 %v45, 7
  %v47 = vsub.s32 1, %v46
  %v48 = vrot.slane %v39, %v47
  %v53 = vunpack.c.l.b16 %v27
  %v54 = vunpack.c.l.b16 %v28
  %v55 = vpack.c.b16 %v54, %v53
  %v64 = vunpack.c.l.b16 %v31
  %v65 = vunpack.c.h.b16 %v31
  %v66 = vunpack.c.l.b16 %v32
  %v67 = vunpack.c.h.b16 %v32
  %v68 = vunpack.c.l.b16 %v33
  %v69 = vunpack.c.h.b16 %v33
  %v70 = vunpack.c.l.b16 %v34
  %v71 = vunpack.c.h.b16 %v34
  %v72 = vunpack.c.l.b16 %v35
  %v73 = vunpack.c.h.b16 %v35
  %v74 = vunpack.c.l.b16 %v36
  %v75 = vunpack.c.h.b16 %v36
  %v76 = vunpack.c.l.b16 %v37
  %v77 = vunpack.c.h.b16 %v37
  %v78 = vunpack.c.l.b16 %v38
  %v79 = vunpack.c.h.b16 %v38
  %v80 = vpack.c.b16 %v66, %v64
  %v81 = vpack.c.b16 %v67, %v65
  %v82 = vpack.c.b16 %v70, %v68
  %v83 = vpack.c.b16 %v71, %v69
  %v84 = vpack.c.b16 %v74, %v72
  %v85 = vpack.c.b16 %v75, %v73
  %v86 = vpack.c.b16 %v78, %v76
  %v87 = vpack.c.b16 %v79, %v77
  %vm96 = vcmask 523264
  %v98 = vsel %vm96, %v55, 0
  %100 = vmatprep.subr.bf16.mxu0 0
  %101 = vmatpush1.bf16.msra.mxu0 0
  %102 = vmatprep.subr.bf16.mxu0 0
  %103 = vmatpush1.bf16.msra.mxu0 0
  %104 = vmatprep.subr.bf16.mxu0 0
  %105 = vmatpush1.bf16.msra.mxu0 0
  %106 = vmatprep.subr.bf16.mxu0 0
  %107 = vmatpush1.bf16.msra.mxu0 0
  %108 = vmatprep.subr.bf16.mxu0 %v87
  %109 = vmatpush1.bf16.msra.mxu0 %v86
  %110 = vmatprep.subr.bf16.mxu0 %v85
  %111 = vmatpush1.bf16.msra.mxu0 %v84
  %112 = vmatprep.subr.bf16.mxu0 %v83
  %113 = vmatpush1.bf16.msra.mxu0 %v82
  %114 = vmatprep.subr.bf16.mxu0 %v81
  %115 = vmatpush1.bf16.msra.mxu0 %v80
  %116 = vmatprep.subr.bf16.mxu0 0
  %117 = vmatpush2.bf16.msra.mxu0 0
  %118 = vmatprep.subr.bf16.mxu0 0
  %119 = vmatpush2.bf16.msra.mxu0 0
  %120 = vmatprep.subr.bf16.mxu0 0
  %121 = vmatpush2.bf16.msra.mxu0 0
  %122 = vmatprep.subr.bf16.mxu0 0
  %123 = vmatpush2.bf16.msra.mxu0 0
  %124 = vmatprep.subr.bf16.mxu0 0
  %125 = vmatpush2.bf16.msra.mxu0 0
  %126 = vmatprep.subr.bf16.mxu0 0
  %127 = vmatpush2.bf16.msra.mxu0 0
  %128 = vmatprep.subr.bf16.mxu0 0
  %129 = vmatpush2.bf16.msra.mxu0 0
  %130 = vmatprep.subr.bf16.mxu0 0
  %131 = vmatpush2.bf16.msra.mxu0 0
  %132 = vmatprep.mubr.bf16.mxu0 0
  %133 = vmatmul.mubr.bf16.gmra.mxu0 %v98
  %v134 = vpop.f32.mrf.mxu0
  %v135 = vadd.f32 %v44, %v134
  %v136 = vpop.f32.mrf.mxu0
  %v137 = vadd.f32 %v48, %v136
  %v138 = vpop.f32.mrf.mxu0
  %v139 = vadd.f32 %v44, %v138
  %v140 = vpop.f32.mrf.mxu0
  %v141 = vadd.f32 %v48, %v140
  %142 = vdwg.mxu0
  %v143 = vmax.f32 %v135, 0.0
  %v144 = vmax.f32 %v137, 0.0
  %v145 = vmax.f32 %v139, 0.0
  %v146 = vmax.f32 %v141, 0.0
  %v147 = vpack.c.bf16 %v145, %v143
  %v148 = vpack.c.bf16 %v146, %v144
  %v149 = vld [vmem:[%s3] sm:$0xf]
  %v150 = vld [vmem:[%s3 + $0x4] sm:$0xf]
  %v151 = vld [vmem:[%s3 + $0x8] sm:$0xf]
  %v152 = vld [vmem:[%s3 + $0xc] sm:$0xf]
  %v153 = vld [vmem:[%s3 + $0x10] sm:$0xf]
  %v154 = vld [vmem:[%s3 + $0x14] sm:$0xf]
  %v155 = vld [vmem:[%s3 + $0x18] sm:$0xf]
  %v156 = vld [vmem:[%s3 + $0x1c] sm:$0xf]
  %v157 = vld [vmem:[%s3 + $0x20] sm:$0xf]
  %v158 = vld [vmem:[%s3 + $0x24] sm:$0xf]
  %v159 = vld [vmem:[%s3 + $0x28] sm:$0xf]
  %v160 = vld [vmem:[%s3 + $0x2c] sm:$0xf]
  %v161 = vld [vmem:[%s3 + $0x30] sm:$0xf]
  %v162 = vld [vmem:[%s3 + $0x34] sm:$0xf]
  %v163 = vld [vmem:[%s3 + $0x38] sm:$0xf]
  %v164 = vld [vmem:[%s3 + $0x3c] sm:$0xf]
  %v165 = vld [vmem:[%s3 + $0x40] sm:$0xf]
  %v166 = vld [vmem:[%s3 + $0x44] sm:$0xf]
  %v167 = vld [vmem:[%s3 + $0x48] sm:$0xf]
  %v168 = vld [vmem:[%s3 + $0x4c] sm:$0xf]
  %v169 = vld [vmem:[%s3 + $0x50] sm:$0xf]
  %v170 = vld [vmem:[%s3 + $0x54] sm:$0xf]
  %v171 = vld [vmem:[%s3 + $0x58] sm:$0xf]
  %v172 = vld [vmem:[%s3 + $0x5c] sm:$0xf]
  %v173 = vld [vmem:[%s3 + $0x60] sm:$0xf]
  %v174 = vld [vmem:[%s3 + $0x64] sm:$0xf]
  %v175 = vld [vmem:[%s3 + $0x68] sm:$0xf]
  %v176 = vld [vmem:[%s3 + $0x6c] sm:$0xf]
  %v177 = vld [vmem:[%s3 + $0x70] sm:$0xf]
  %v178 = vld [vmem:[%s3 + $0x74] sm:$0xf]
  %v179 = vld [vmem:[%s3 + $0x78] sm:$0xf]
  %v180 = vld [vmem:[%s3 + $0x7c] sm:$0xf]
  %v181 = vld [vmem:[%s4] sm:$0x1]
  %v183 = vlaneseq
  %v184 = vshrl.u32 %v183, 7
  %v185 = vsub.s32 0, %v184
  %v186 = vrot.slane %v181, %v185
  %v220 = vunpack.c.l.b16 %v149
  %v221 = vunpack.c.l.b16 %v150
  %v222 = vunpack.c.l.b16 %v151
  %v223 = vunpack.c.l.b16 %v152
  %v224 = vunpack.c.l.b16 %v153
  %v225 = vunpack.c.l.b16 %v154
  %v226 = vunpack.c.l.b16 %v155
  %v227 = vunpack.c.l.b16 %v156
  %v228 = vunpack.c.l.b16 %v157
  %v229 = vunpack.c.l.b16 %v158
  %v230 = vunpack.c.l.b16 %v159
  %v231 = vunpack.c.l.b16 %v160
  %v232 = vunpack.c.l.b16 %v161
  %v233 = vunpack.c.l.b16 %v162
  %v234 = vunpack.c.l.b16 %v163
  %v235 = vunpack.c.l.b16 %v164
  %v236 = vunpack.c.l.b16 %v165
  %v237 = vunpack.c.l.b16 %v166
  %v238 = vunpack.c.l.b16 %v167
  %v239 = vunpack.c.l.b16 %v168
  %v240 = vunpack.c.l.b16 %v169
  %v241 = vunpack.c.l.b16 %v170
  %v242 = vunpack.c.l.b16 %v171
  %v243 = vunpack.c.l.b16 %v172
  %v244 = vunpack.c.l.b16 %v173
  %v245 = vunpack.c.l.b16 %v174
  %v246 = vunpack.c.l.b16 %v175
  %v247 = vunpack.c.l.b16 %v176
  %v248 = vunpack.c.l.b16 %v177
  %v249 = vunpack.c.l.b16 %v178
  %v250 = vunpack.c.l.b16 %v179
  %v251 = vunpack.c.l.b16 %v180
  %v252 = vpack.c.b16 %v221, %v220
  %v253 = vpack.c.b16 %v223, %v222
  %v254 = vpack.c.b16 %v225, %v224
  %v255 = vpack.c.b16 %v227, %v226
  %v256 = vpack.c.b16 %v229, %v228
  %v257 = vpack.c.b16 %v231, %v230
  %v258 = vpack.c.b16 %v233, %v232
  %v259 = vpack.c.b16 %v235, %v234
  %v260 = vpack.c.b16 %v237, %v236
  %v261 = vpack.c.b16 %v239, %v238
  %v262 = vpack.c.b16 %v241, %v240
  %v263 = vpack.c.b16 %v243, %v242
  %v264 = vpack.c.b16 %v245, %v244
  %v265 = vpack.c.b16 %v247, %v246
  %v266 = vpack.c.b16 %v249, %v248
  %v267 = vpack.c.b16 %v251, %v250
  %284 = vmatprep.subr.bf16.mxu0 0
  %285 = vmatpush1.bf16.msra.mxu0 %v259
  %286 = vmatprep.subr.bf16.mxu0 0
  %287 = vmatpush1.bf16.msra.mxu0 %v258
  %288 = vmatprep.subr.bf16.mxu0 0
  %289 = vmatpush1.bf16.msra.mxu0 %v257
  %290 = vmatprep.subr.bf16.mxu0 0
  %291 = vmatpush1.bf16.msra.mxu0 %v256
  %292 = vmatprep.subr.bf16.mxu0 0
  %293 = vmatpush1.bf16.msra.mxu0 %v255
  %294 = vmatprep.subr.bf16.mxu0 0
  %295 = vmatpush1.bf16.msra.mxu0 %v254
  %296 = vmatprep.subr.bf16.mxu0 0
  %297 = vmatpush1.bf16.msra.mxu0 %v253
  %298 = vmatprep.subr.bf16.mxu0 0
  %299 = vmatpush1.bf16.msra.mxu0 %v252
  %300 = vmatprep.subr.bf16.mxu0 0
  %301 = vmatpush2.bf16.msra.mxu0 %v267
  %302 = vmatprep.subr.bf16.mxu0 0
  %303 = vmatpush2.bf16.msra.mxu0 %v266
  %304 = vmatprep.subr.bf16.mxu0 0
  %305 = vmatpush2.bf16.msra.mxu0 %v265
  %306 = vmatprep.subr.bf16.mxu0 0
  %307 = vmatpush2.bf16.msra.mxu0 %v264
  %308 = vmatprep.subr.bf16.mxu0 0
  %309 = vmatpush2.bf16.msra.mxu0 %v263
  %310 = vmatprep.subr.bf16.mxu0 0
  %311 = vmatpush2.bf16.msra.mxu0 %v262
  %312 = vmatprep.subr.bf16.mxu0 0
  %313 = vmatpush2.bf16.msra.mxu0 %v261
  %314 = vmatprep.subr.bf16.mxu0 0
  %315 = vmatpush2.bf16.msra.mxu0 %v260
  %316 = vmatprep.mubr.bf16.mxu0 %v148
  %317 = vmatmul.mubr.bf16.gmra.mxu0 %v147
  %v318 = vpop.f32.mrf.mxu0
  %v319 = vadd.f32 %v186, %v318
  %v320 = vpop.f32.mrf.mxu0
  %v321 = vpop.f32.mrf.mxu0
  %v322 = vadd.f32 %v186, %v321
  %v323 = vpop.f32.mrf.mxu0
  %324 = vdwg.mxu0
  %v325 = vadd.f32 %v319, %v29
  %v326 = vadd.f32 %v322, %v30
  %v327 = vsel %vm96, %v325, 0.0
  %328 = vadd.xlane.f32.xlu0 %v327
  %v329 = vpop.xlane.xlu0 %328
  %v330 = vsel %vm96, %v326, 0.0
  %331 = vadd.xlane.f32.xlu0 %v330
  %v332 = vpop.xlane.xlu0 %331
  %v333 = vrcp.pop 64.0
  %v334 = vmul.f32 %v329, %v333
  %v335 = vmul.f32 %v332, %v333
  %v336 = vsub.f32 %v325, %v334
  %v337 = vsub.f32 %v326, %v335
  %v338 = vmul.f32 %v336, %v336
  %v339 = vmul.f32 %v337, %v337
  %v340 = vsel %vm96, %v338, 0.0
  %341 = vadd.xlane.f32.xlu0 %v340
  %v342 = vpop.xlane.xlu0 %341
  %v343 = vsel %vm96, %v339, 0.0
  %344 = vadd.xlane.f32.xlu0 %v343
  %v345 = vpop.xlane.xlu0 %344
  %v346 = vmul.f32 %v342, %v333
  %v347 = vmul.f32 %v345, %v333
  %v348 = vadd.f32 %v346, 1e-05
  %v349 = vadd.f32 %v347, 1e-05
  %v350 = vrsqrt.pop %v348
  %v351 = vrsqrt.pop %v349
  %v352 = vmul.f32 %v336, %v350
  %v353 = vmul.f32 %v337, %v351
  %v354 = vld [vmem:[%s5] sm:$0x1]
  %v356 = vlaneseq
  %v357 = vshrl.u32 %v356, 7
  %v358 = vsub.s32 0, %v357
  %v359 = vrot.slane %v354, %v358
  %v361 = vmul.f32 %v352, %v359
  %v362 = vmul.f32 %v353, %v359
  %v363 = vld [vmem:[%s6] sm:$0x1]
  %v365 = vlaneseq
  %v366 = vshrl.u32 %v365, 7
  %v367 = vsub.s32 0, %v366
  %v368 = vrot.slane %v363, %v367
  %v370 = vadd.f32 %v361, %v368
  %v371 = vadd.f32 %v362, %v368
  %v372 = vpack.c.bf16 %v371, %v370
  %v374 = vunpack.c.l.b16 %v372
  %v375 = vunpack.c.h.b16 %v372
  %v376 = vpack.c.b16 %v374, %v374
  %v377 = vpack.c.b16 %v375, %v375
  %vm380 = vcmask 519168
  %381 = vst.msk [vmem:[%s7] sm:$0xf] %vm380, %v376
  %382 = vst.msk [vmem:[%s7 + $0x4] sm:$0xf] %vm380, %v377
  %s383 = scalar_lea.vmem %s1, 64
  %v384 = vld [vmem:[%s383] sm:$0xff]
  %v385 = vld [vmem:[%s383 + $0x8] sm:$0xff]
  %v386 = vld [vmem:[%s383 + $0x10] sm:$0xff]
  %v387 = vld [vmem:[%s383 + $0x18] sm:$0xff]
  %v388 = vld [vmem:[%s383 + $0x20] sm:$0xff]
  %v389 = vld [vmem:[%s383 + $0x28] sm:$0xff]
  %v390 = vld [vmem:[%s383 + $0x30] sm:$0xff]
  %v391 = vld [vmem:[%s383 + $0x38] sm:$0xff]
  %s392 = scalar_lea.vmem %s2, 2
  %v393 = vld [vmem:[%s392] sm:$0x3]
  %v395 = vlaneseq
  %v396 = vshrl.u32 %v395, 7
  %v397 = vsub.s32 0, %v396
  %v398 = vrot.slane %v393, %v397
  %v399 = vlaneseq
  %v400 = vshrl.u32 %v399, 7
  %v401 = vsub.s32 1, %v400
  %v402 = vrot.slane %v393, %v401
  %v413 = vunpack.c.l.b16 %v384
  %v414 = vunpack.c.h.b16 %v384
  %v415 = vunpack.c.l.b16 %v385
  %v416 = vunpack.c.h.b16 %v385
  %v417 = vunpack.c.l.b16 %v386
  %v418 = vunpack.c.h.b16 %v386
  %v419 = vunpack.c.l.b16 %v387
  %v420 = vunpack.c.h.b16 %v387
  %v421 = vunpack.c.l.b16 %v388
  %v422 = vunpack.c.h.b16 %v388
  %v423 = vunpack.c.l.b16 %v389
  %v424 = vunpack.c.h.b16 %v389
  %v425 = vunpack.c.l.b16 %v390
  %v426 = vunpack.c.h.b16 %v390
  %v427 = vunpack.c.l.b16 %v391
  %v428 = vunpack.c.h.b16 %v391
  %v429 = vpack.c.b16 %v415, %v413
  %v430 = vpack.c.b16 %v416, %v414
  %v431 = vpack.c.b16 %v419, %v417
  %v432 = vpack.c.b16 %v420, %v418
  %v433 = vpack.c.b16 %v423, %v421
  %v434 = vpack.c.b16 %v424, %v422
  %v435 = vpack.c.b16 %v427, %v425
  %v436 = vpack.c.b16 %v428, %v426
  %445 = vmatprep.subr.bf16.mxu0 0
  %446 = vmatpush1.bf16.msra.mxu0 0
  %447 = vmatprep.subr.bf16.mxu0 0
  %448 = vmatpush1.bf16.msra.mxu0 0
  %449 = vmatprep.subr.bf16.mxu0 0
  %450 = vmatpush1.bf16.msra.mxu0 0
  %451 = vmatprep.subr.bf16.mxu0 0
  %452 = vmatpush1.bf16.msra.mxu0 0
  %453 = vmatprep.subr.bf16.mxu0 %v436
  %454 = vmatpush1.bf16.msra.mxu0 %v435
  %455 = vmatprep.subr.bf16.mxu0 %v434
  %456 = vmatpush1.bf16.msra.mxu0 %v433
  %457 = vmatprep.subr.bf16.mxu0 %v432
  %458 = vmatpush1.bf16.msra.mxu0 %v431
  %459 = vmatprep.subr.bf16.mxu0 %v430
  %460 = vmatpush1.bf16.msra.mxu0 %v429
  %461 = vmatprep.subr.bf16.mxu0 0
  %462 = vmatpush2.bf16.msra.mxu0 0
  %463 = vmatprep.subr.bf16.mxu0 0
  %464 = vmatpush2.bf16.msra.mxu0 0
  %465 = vmatprep.subr.bf16.mxu0 0
  %466 = vmatpush2.bf16.msra.mxu0 0
  %467 = vmatprep.subr.bf16.mxu0 0
  %468 = vmatpush2.bf16.msra.mxu0 0
  %469 = vmatprep.subr.bf16.mxu0 0
  %470 = vmatpush2.bf16.msra.mxu0 0
  %471 = vmatprep.subr.bf16.mxu0 0
  %472 = vmatpush2.bf16.msra.mxu0 0
  %473 = vmatprep.subr.bf16.mxu0 0
  %474 = vmatpush2.bf16.msra.mxu0 0
  %475 = vmatprep.subr.bf16.mxu0 0
  %476 = vmatpush2.bf16.msra.mxu0 0
  %477 = vmatprep.mubr.bf16.mxu0 0
  %478 = vmatmul.mubr.bf16.gmra.mxu0 %v98
  %v479 = vpop.f32.mrf.mxu0
  %v480 = vadd.f32 %v398, %v479
  %v481 = vpop.f32.mrf.mxu0
  %v482 = vadd.f32 %v402, %v481
  %v483 = vpop.f32.mrf.mxu0
  %v484 = vadd.f32 %v398, %v483
  %v485 = vpop.f32.mrf.mxu0
  %v486 = vadd.f32 %v402, %v485
  %487 = vdwg.mxu0
  %v488 = vmax.f32 %v480, 0.0
  %v489 = vmax.f32 %v482, 0.0
  %v490 = vmax.f32 %v484, 0.0
  %v491 = vmax.f32 %v486, 0.0
  %v492 = vpack.c.bf16 %v490, %v488
  %v493 = vpack.c.bf16 %v491, %v489
  %s494 = scalar_lea.vmem %s3, 128
  %v495 = vld [vmem:[%s494] sm:$0xf]
  %v496 = vld [vmem:[%s494 + $0x4] sm:$0xf]
  %v497 = vld [vmem:[%s494 + $0x8] sm:$0xf]
  %v498 = vld [vmem:[%s494 + $0xc] sm:$0xf]
  %v499 = vld [vmem:[%s494 + $0x10] sm:$0xf]
  %v500 = vld [vmem:[%s494 + $0x14] sm:$0xf]
  %v501 = vld [vmem:[%s494 + $0x18] sm:$0xf]
  %v502 = vld [vmem:[%s494 + $0x1c] sm:$0xf]
  %v503 = vld [vmem:[%s494 + $0x20] sm:$0xf]
  %v504 = vld [vmem:[%s494 + $0x24] sm:$0xf]
  %v505 = vld [vmem:[%s494 + $0x28] sm:$0xf]
  %v506 = vld [vmem:[%s494 + $0x2c] sm:$0xf]
  %v507 = vld [vmem:[%s494 + $0x30] sm:$0xf]
  %v508 = vld [vmem:[%s494 + $0x34] sm:$0xf]
  %v509 = vld [vmem:[%s494 + $0x38] sm:$0xf]
  %v510 = vld [vmem:[%s494 + $0x3c] sm:$0xf]
  %v511 = vld [vmem:[%s494 + $0x40] sm:$0xf]
  %v512 = vld [vmem:[%s494 + $0x44] sm:$0xf]
  %v513 = vld [vmem:[%s494 + $0x48] sm:$0xf]
  %v514 = vld [vmem:[%s494 + $0x4c] sm:$0xf]
  %v515 = vld [vmem:[%s494 + $0x50] sm:$0xf]
  %v516 = vld [vmem:[%s494 + $0x54] sm:$0xf]
  %v517 = vld [vmem:[%s494 + $0x58] sm:$0xf]
  %v518 = vld [vmem:[%s494 + $0x5c] sm:$0xf]
  %v519 = vld [vmem:[%s494 + $0x60] sm:$0xf]
  %v520 = vld [vmem:[%s494 + $0x64] sm:$0xf]
  %v521 = vld [vmem:[%s494 + $0x68] sm:$0xf]
  %v522 = vld [vmem:[%s494 + $0x6c] sm:$0xf]
  %v523 = vld [vmem:[%s494 + $0x70] sm:$0xf]
  %v524 = vld [vmem:[%s494 + $0x74] sm:$0xf]
  %v525 = vld [vmem:[%s494 + $0x78] sm:$0xf]
  %v526 = vld [vmem:[%s494 + $0x7c] sm:$0xf]
  %s527 = scalar_lea.vmem %s4, 1
  %v528 = vld [vmem:[%s527] sm:$0x1]
  %v530 = vlaneseq
  %v531 = vshrl.u32 %v530, 7
  %v532 = vsub.s32 0, %v531
  %v533 = vrot.slane %v528, %v532
  %v567 = vunpack.c.l.b16 %v495
  %v568 = vunpack.c.l.b16 %v496
  %v569 = vunpack.c.l.b16 %v497
  %v570 = vunpack.c.l.b16 %v498
  %v571 = vunpack.c.l.b16 %v499
  %v572 = vunpack.c.l.b16 %v500
  %v573 = vunpack.c.l.b16 %v501
  %v574 = vunpack.c.l.b16 %v502
  %v575 = vunpack.c.l.b16 %v503
  %v576 = vunpack.c.l.b16 %v504
  %v577 = vunpack.c.l.b16 %v505
  %v578 = vunpack.c.l.b16 %v506
  %v579 = vunpack.c.l.b16 %v507
  %v580 = vunpack.c.l.b16 %v508
  %v581 = vunpack.c.l.b16 %v509
  %v582 = vunpack.c.l.b16 %v510
  %v583 = vunpack.c.l.b16 %v511
  %v584 = vunpack.c.l.b16 %v512
  %v585 = vunpack.c.l.b16 %v513
  %v586 = vunpack.c.l.b16 %v514
  %v587 = vunpack.c.l.b16 %v515
  %v588 = vunpack.c.l.b16 %v516
  %v589 = vunpack.c.l.b16 %v517
  %v590 = vunpack.c.l.b16 %v518
  %v591 = vunpack.c.l.b16 %v519
  %v592 = vunpack.c.l.b16 %v520
  %v593 = vunpack.c.l.b16 %v521
  %v594 = vunpack.c.l.b16 %v522
  %v595 = vunpack.c.l.b16 %v523
  %v596 = vunpack.c.l.b16 %v524
  %v597 = vunpack.c.l.b16 %v525
  %v598 = vunpack.c.l.b16 %v526
  %v599 = vpack.c.b16 %v568, %v567
  %v600 = vpack.c.b16 %v570, %v569
  %v601 = vpack.c.b16 %v572, %v571
  %v602 = vpack.c.b16 %v574, %v573
  %v603 = vpack.c.b16 %v576, %v575
  %v604 = vpack.c.b16 %v578, %v577
  %v605 = vpack.c.b16 %v580, %v579
  %v606 = vpack.c.b16 %v582, %v581
  %v607 = vpack.c.b16 %v584, %v583
  %v608 = vpack.c.b16 %v586, %v585
  %v609 = vpack.c.b16 %v588, %v587
  %v610 = vpack.c.b16 %v590, %v589
  %v611 = vpack.c.b16 %v592, %v591
  %v612 = vpack.c.b16 %v594, %v593
  %v613 = vpack.c.b16 %v596, %v595
  %v614 = vpack.c.b16 %v598, %v597
  %631 = vmatprep.subr.bf16.mxu0 0
  %632 = vmatpush1.bf16.msra.mxu0 %v606
  %633 = vmatprep.subr.bf16.mxu0 0
  %634 = vmatpush1.bf16.msra.mxu0 %v605
  %635 = vmatprep.subr.bf16.mxu0 0
  %636 = vmatpush1.bf16.msra.mxu0 %v604
  %637 = vmatprep.subr.bf16.mxu0 0
  %638 = vmatpush1.bf16.msra.mxu0 %v603
  %639 = vmatprep.subr.bf16.mxu0 0
  %640 = vmatpush1.bf16.msra.mxu0 %v602
  %641 = vmatprep.subr.bf16.mxu0 0
  %642 = vmatpush1.bf16.msra.mxu0 %v601
  %643 = vmatprep.subr.bf16.mxu0 0
  %644 = vmatpush1.bf16.msra.mxu0 %v600
  %645 = vmatprep.subr.bf16.mxu0 0
  %646 = vmatpush1.bf16.msra.mxu0 %v599
  %647 = vmatprep.subr.bf16.mxu0 0
  %648 = vmatpush2.bf16.msra.mxu0 %v614
  %649 = vmatprep.subr.bf16.mxu0 0
  %650 = vmatpush2.bf16.msra.mxu0 %v613
  %651 = vmatprep.subr.bf16.mxu0 0
  %652 = vmatpush2.bf16.msra.mxu0 %v612
  %653 = vmatprep.subr.bf16.mxu0 0
  %654 = vmatpush2.bf16.msra.mxu0 %v611
  %655 = vmatprep.subr.bf16.mxu0 0
  %656 = vmatpush2.bf16.msra.mxu0 %v610
  %657 = vmatprep.subr.bf16.mxu0 0
  %658 = vmatpush2.bf16.msra.mxu0 %v609
  %659 = vmatprep.subr.bf16.mxu0 0
  %660 = vmatpush2.bf16.msra.mxu0 %v608
  %661 = vmatprep.subr.bf16.mxu0 0
  %662 = vmatpush2.bf16.msra.mxu0 %v607
  %663 = vmatprep.mubr.bf16.mxu0 %v493
  %664 = vmatmul.mubr.bf16.gmra.mxu0 %v492
  %v665 = vpop.f32.mrf.mxu0
  %v666 = vadd.f32 %v533, %v665
  %v667 = vpop.f32.mrf.mxu0
  %v668 = vpop.f32.mrf.mxu0
  %v669 = vadd.f32 %v533, %v668
  %v670 = vpop.f32.mrf.mxu0
  %671 = vdwg.mxu0
  %v672 = vadd.f32 %v666, %v29
  %v673 = vadd.f32 %v669, %v30
  %v674 = vsel %vm96, %v672, 0.0
  %675 = vadd.xlane.f32.xlu0 %v674
  %v676 = vpop.xlane.xlu0 %675
  %v677 = vsel %vm96, %v673, 0.0
  %678 = vadd.xlane.f32.xlu0 %v677
  %v679 = vpop.xlane.xlu0 %678
  %v680 = vmul.f32 %v676, %v333
  %v681 = vmul.f32 %v679, %v333
  %v682 = vsub.f32 %v672, %v680
  %v683 = vsub.f32 %v673, %v681
  %v684 = vmul.f32 %v682, %v682
  %v685 = vmul.f32 %v683, %v683
  %v686 = vsel %vm96, %v684, 0.0
  %687 = vadd.xlane.f32.xlu0 %v686
  %v688 = vpop.xlane.xlu0 %687
  %v689 = vsel %vm96, %v685, 0.0
  %690 = vadd.xlane.f32.xlu0 %v689
  %v691 = vpop.xlane.xlu0 %690
  %v692 = vmul.f32 %v688, %v333
  %v693 = vmul.f32 %v691, %v333
  %v694 = vadd.f32 %v692, 1e-05
  %v695 = vadd.f32 %v693, 1e-05
  %v696 = vrsqrt.pop %v694
  %v697 = vrsqrt.pop %v695
  %v698 = vmul.f32 %v682, %v696
  %v699 = vmul.f32 %v683, %v697
  %s700 = scalar_lea.vmem %s5, 1
  %v701 = vld [vmem:[%s700] sm:$0x1]
  %v703 = vlaneseq
  %v704 = vshrl.u32 %v703, 7
  %v705 = vsub.s32 0, %v704
  %v706 = vrot.slane %v701, %v705
  %v708 = vmul.f32 %v698, %v706
  %v709 = vmul.f32 %v699, %v706
  %s710 = scalar_lea.vmem %s6, 1
  %v711 = vld [vmem:[%s710] sm:$0x1]
  %v713 = vlaneseq
  %v714 = vshrl.u32 %v713, 7
  %v715 = vsub.s32 0, %v714
  %v716 = vrot.slane %v711, %v715
  %v718 = vadd.f32 %v708, %v716
  %v719 = vadd.f32 %v709, %v716
  %v720 = vpack.c.bf16 %v719, %v718
  %v722 = vunpack.c.l.b16 %v720
  %v723 = vunpack.c.h.b16 %v720
  %v724 = vpack.c.b16 %v722, %v722
  %v725 = vpack.c.b16 %v723, %v723
  %s728 = scalar_lea.vmem %s7, 8
  %729 = vst.msk [vmem:[%s728] sm:$0xf] %vm380, %v724
  %730 = vst.msk [vmem:[%s728 + $0x4] sm:$0xf] %vm380, %v725
  // Predicated region
  $region30: #{smodel_forward.12} parent=0 // pred_check
    _
  $region31: #{smodel_forward.12} parent=0 // pred_check_branch
    %732 = sbr.rel (0) target = $region33
  $region32: #{smodel_forward.12} parent=0 // pred_region
    _
  $region33: #{smodel_forward.12} parent=0 // pred_fallthru
    _
  // Predicated region
  $region34: #{smodel_forward.12} parent=0 // pred_check
    _
  $region35: #{smodel_forward.12} parent=0 // pred_check_branch
    %734 = sbr.rel (0) target = $region37
  $region36: #{smodel_forward.12} parent=0 // pred_region
    _
  $region37: #{smodel_forward.12} parent=0 // pred_fallthru
    _

// kernel: smodel_forward.13
$region0: #{smodel_forward.13}
  #allocation0 [shape = 'u32[]', space=smem, size = 0x4, offset = 0x4, fixed_abs, tag = 'smem constant byte address 0x4 - core index']
  #allocation1 [shape = 'u32[144,128]{1,0:T(1,128)}', space=vmem, size = 0x12000, scoped, tag = 'internal scratch']
  %s0 = inlined_call_operand.vmem [shape: bf16[2,8,64], index: 0, kind: input, shape index: {}]
  %s1 = inlined_call_operand.vmem [shape: bf16[2,8,64], index: 1, kind: input, shape index: {}]
  %s2 = inlined_call_operand.vmem [shape: bf16[64,256], index: 2, kind: input, shape index: {}]
  %s3 = inlined_call_operand.vmem [shape: bf16[64,4], index: 3, kind: input, shape index: {}]
  %s4 = inlined_call_operand.vmem [shape: bf16[4,64], index: 4, kind: input, shape index: {}]
  %s5 = inlined_call_operand.vmem [shape: f32[1,4], index: 5, kind: input, shape index: {}]
  %s6 = inlined_call_operand.vmem [shape: f32[2,4,8,8], index: 6, kind: output, shape index: {}]
  %s7 = sld [smem:[#allocation0]]
  $region57: #{smodel_forward.13} parent=0
    _
  %s9 = ssub.s32 1, %s7
  %s10 = scalar_select 0, %s9, %s7
  loop: start=0, step=1, limit=4
  $region2: #{smodel_forward.13} parent=0 // loop_pre_header
    _
  $region3: #{smodel_forward.13} parent=0 // loop_header
    %s12 = sphi 0, %s16
    %p13 = scmp.ge.s32.totalorder %s12, 4
    %s22 = sphi 0, %s24
    %s25 = sphi 0, %s22
    %s26 = sphi 0, %s25
    %s42 = sphi 0, %s26
    %s48 = sphi 0, %s50
    %s51 = sphi 0, %s48
    %s52 = sphi 0, %s51
    %s68 = sphi 0, %s52
    %s72 = sphi 0, %s72
    %s74 = sphi 0, %s72
    %s75 = sphi 0, %s74
    %s89 = sphi 0, %s75
    %s93 = sphi 0, %s93
    %s95 = sphi 0, %s93
    %s96 = sphi 0, %s95
    %s110 = sphi 0, %s96
    %s114 = sphi 0, %s114
    %s116 = sphi 0, %s114
    %s117 = sphi 0, %s116
    %s131 = sphi 0, %s117
    %s135 = sphi 0, %s135
    %s137 = sphi 0, %s135
    %s138 = sphi 0, %s137
    %s152 = sphi 0, %s138
    %s158 = sphi 0, %s160
    %s161 = sphi 0, %s158
    %s162 = sphi 0, %s161
    %s178 = sphi 0, %s162
  $region4: #{smodel_forward.13} parent=0 // loop_header_branch
    %15 = sbr.rel (%p13) target = $region8
  $region5: #{smodel_forward.13} parent=0 // loop_body
    %s17 = ssub.s32 %s12, 1
    %s18 = ssub.s32 %s12, 2
    %s19 = sadd.s32 %s12, 1
    %s20 = ssub.s32 %s12, %s19
    %p21 = scmp.eq.s32.totalorder %s20, 0
    %s23 = sadd.s32 %s22, 1
    %s24 = scalar_select %p21, %s22, %s23
    %p27 = pneg %p21
    %p28 = scmp.eq.s32.totalorder %s12, 1
    %p29 = por %p27, %p28
    %p30 = scmp.ne.s32.totalorder %s22, %s25
    %p31 = scmp.eq.s32.totalorder %s12, 0
    %p32 = por %p30, %p31
    %p33 = scmp.ne.s32.totalorder %s22, %s25
    %p34 = scmp.eq.s32.totalorder %s17, 1
    %p35 = por %p33, %p34
    %p36 = scmp.ne.s32.totalorder %s25, %s26
    %p37 = scmp.eq.s32.totalorder %s17, 0
    %p38 = por %p36, %p37
    %p39 = scmp.ne.s32.totalorder %s25, %s26
    %p40 = scmp.eq.s32.totalorder %s18, 1
    %p41 = por %p39, %p40
    %p43 = scmp.ne.s32.totalorder %s26, %s42
    %p44 = scmp.eq.s32.totalorder %s18, 0
    %p45 = por %p43, %p44
    %s46 = ssub.s32 %s12, %s19
    %p47 = scmp.eq.s32.totalorder %s46, 0
    %s49 = sadd.s32 %s48, 1
    %s50 = scalar_select %p47, %s48, %s49
    %p53 = pneg %p47
    %p54 = scmp.eq.s32.totalorder %s12, 1
    %p55 = por %p53, %p54
    %p56 = scmp.ne.s32.totalorder %s48, %s51
    %p57 = scmp.eq.s32.totalorder %s12, 0
    %p58 = por %p56, %p57
    %p59 = scmp.ne.s32.totalorder %s48, %s51
    %p60 = scmp.eq.s32.totalorder %s17, 1
    %p61 = por %p59, %p60
    %p62 = scmp.ne.s32.totalorder %s51, %s52
    %p63 = scmp.eq.s32.totalorder %s17, 0
    %p64 = por %p62, %p63
    %p65 = scmp.ne.s32.totalorder %s51, %s52
    %p66 = scmp.eq.s32.totalorder %s18, 1
    %p67 = por %p65, %p66
    %p69 = scmp.ne.s32.totalorder %s52, %s68
    %p70 = scmp.eq.s32.totalorder %s18, 0
    %p71 = por %p69, %p70
    %s73 = sadd.s32 %s72, 1
    %p76 = scmp.eq.s32.totalorder %s12, 1
    %p77 = scmp.ne.s32.totalorder %s72, %s74
    %p78 = scmp.eq.s32.totalorder %s12, 0
    %p79 = por %p77, %p78
    %p80 = scmp.ne.s32.totalorder %s72, %s74
    %p81 = scmp.eq.s32.totalorder %s17, 1
    %p82 = por %p80, %p81
    %p83 = scmp.ne.s32.totalorder %s74, %s75
    %p84 = scmp.eq.s32.totalorder %s17, 0
    %p85 = por %p83, %p84
    %p86 = scmp.ne.s32.totalorder %s74, %s75
    %p87 = scmp.eq.s32.totalorder %s18, 1
    %p88 = por %p86, %p87
    %p90 = scmp.ne.s32.totalorder %s75, %s89
    %p91 = scmp.eq.s32.totalorder %s18, 0
    %p92 = por %p90, %p91
    %s94 = sadd.s32 %s93, 1
    %p97 = scmp.eq.s32.totalorder %s12, 1
    %p98 = scmp.ne.s32.totalorder %s93, %s95
    %p99 = scmp.eq.s32.totalorder %s12, 0
    %p100 = por %p98, %p99
    %p101 = scmp.ne.s32.totalorder %s93, %s95
    %p102 = scmp.eq.s32.totalorder %s17, 1
    %p103 = por %p101, %p102
    %p104 = scmp.ne.s32.totalorder %s95, %s96
    %p105 = scmp.eq.s32.totalorder %s17, 0
    %p106 = por %p104, %p105
    %p107 = scmp.ne.s32.totalorder %s95, %s96
    %p108 = scmp.eq.s32.totalorder %s18, 1
    %p109 = por %p107, %p108
    %p111 = scmp.ne.s32.totalorder %s96, %s110
    %p112 = scmp.eq.s32.totalorder %s18, 0
    %p113 = por %p111, %p112
    %s115 = sadd.s32 %s114, 1
    %p118 = scmp.eq.s32.totalorder %s12, 1
    %p119 = scmp.ne.s32.totalorder %s114, %s116
    %p120 = scmp.eq.s32.totalorder %s12, 0
    %p121 = por %p119, %p120
    %p122 = scmp.ne.s32.totalorder %s114, %s116
    %p123 = scmp.eq.s32.totalorder %s17, 1
    %p124 = por %p122, %p123
    %p125 = scmp.ne.s32.totalorder %s116, %s117
    %p126 = scmp.eq.s32.totalorder %s17, 0
    %p127 = por %p125, %p126
    %p128 = scmp.ne.s32.totalorder %s116, %s117
    %p129 = scmp.eq.s32.totalorder %s18, 1
    %p130 = por %p128, %p129
    %p132 = scmp.ne.s32.totalorder %s117, %s131
    %p133 = scmp.eq.s32.totalorder %s18, 0
    %p134 = por %p132, %p133
    %s136 = sadd.s32 %s135, 1
    %p139 = scmp.eq.s32.totalorder %s12, 1
    %p140 = scmp.ne.s32.totalorder %s135, %s137
    %p141 = scmp.eq.s32.totalorder %s12, 0
    %p142 = por %p140, %p141
    %p143 = scmp.ne.s32.totalorder %s135, %s137
    %p144 = scmp.eq.s32.totalorder %s17, 1
    %p145 = por %p143, %p144
    %p146 = scmp.ne.s32.totalorder %s137, %s138
    %p147 = scmp.eq.s32.totalorder %s17, 0
    %p148 = por %p146, %p147
    %p149 = scmp.ne.s32.totalorder %s137, %s138
    %p150 = scmp.eq.s32.totalorder %s18, 1
    %p151 = por %p149, %p150
    %p153 = scmp.ne.s32.totalorder %s138, %s152
    %p154 = scmp.eq.s32.totalorder %s18, 0
    %p155 = por %p153, %p154
    %s156 = ssub.s32 %s12, %s19
    %p157 = scmp.eq.s32.totalorder %s156, 0
    %s159 = sadd.s32 %s158, 1
    %s160 = scalar_select %p157, %s158, %s159
    %p163 = pneg %p157
    %p164 = scmp.eq.s32.totalorder %s12, 1
    %p165 = por %p163, %p164
    %p166 = scmp.ne.s32.totalorder %s158, %s161
    %p167 = scmp.eq.s32.totalorder %s12, 0
    %p168 = por %p166, %p167
    %p169 = scmp.ne.s32.totalorder %s158, %s161
    %p170 = scmp.eq.s32.totalorder %s17, 1
    %p171 = por %p169, %p170
    %p172 = scmp.ne.s32.totalorder %s161, %s162
    %p173 = scmp.eq.s32.totalorder %s17, 0
    %p174 = por %p172, %p173
    %p175 = scmp.ne.s32.totalorder %s161, %s162
    %p176 = scmp.eq.s32.totalorder %s18, 1
    %p177 = por %p175, %p176
    %p179 = scmp.ne.s32.totalorder %s162, %s178
    %p180 = scmp.eq.s32.totalorder %s18, 0
    %p181 = por %p179, %p180
    %p182 = scmp.le.s32.totalorder 1, %s12
    %p183 = scmp.lt.s32.totalorder %s12, 3
    %p184 = pnand %p182, %p183
    %p185 = pneg %p184
    // Predicated region
    $region9: #{smodel_forward.13} parent=5 // pred_check
      _
    $region10: #{smodel_forward.13} parent=5 // pred_check_branch
      %187 = sbr.rel (%p184) target = $region12
    $region11: #{smodel_forward.13} parent=5 // pred_region
      %s188 = ssub.s32 %s12, 1
      // Predicated region
      $region13: #{smodel_forward.13} parent=11 // pred_check
        %p189 = pneg %p85
      $region14: #{smodel_forward.13} parent=11 // pred_check_branch
        %191 = sbr.rel (%p189) target = $region16
      $region15: #{smodel_forward.13} parent=11 // pred_region
        _
      $region16: #{smodel_forward.13} parent=11 // pred_fallthru
        _
      // Predicated region
      $region17: #{smodel_forward.13} parent=11 // pred_check
        %p192 = pneg %p106
      $region18: #{smodel_forward.13} parent=11 // pred_check_branch
        %194 = sbr.rel (%p192) target = $region20
      $region19: #{smodel_forward.13} parent=11 // pred_region
        _
      $region20: #{smodel_forward.13} parent=11 // pred_fallthru
        _
      // Predicated region
      $region21: #{smodel_forward.13} parent=11 // pred_check
        %p195 = pneg %p127
      $region22: #{smodel_forward.13} parent=11 // pred_check_branch
        %197 = sbr.rel (%p195) target = $region24
      $region23: #{smodel_forward.13} parent=11 // pred_region
        _
      $region24: #{smodel_forward.13} parent=11 // pred_fallthru
        _
      // Predicated region
      $region25: #{smodel_forward.13} parent=11 // pred_check
        %p198 = pneg %p148
      $region26: #{smodel_forward.13} parent=11 // pred_check_branch
        %200 = sbr.rel (%p198) target = $region28
      $region27: #{smodel_forward.13} parent=11 // pred_region
        _
      $region28: #{smodel_forward.13} parent=11 // pred_fallthru
        _
    $region12: #{smodel_forward.13} parent=5 // pred_fallthru
      _
    %p201 = scmp.lt.s32.totalorder %s12, 2
    // Predicated region
    $region29: #{smodel_forward.13} parent=5 // pred_check
      %p202 = pneg %p201
    $region30: #{smodel_forward.13} parent=5 // pred_check_branch
      %204 = sbr.rel (%p202) target = $region32
    $region31: #{smodel_forward.13} parent=5 // pred_region
      // Predicated region
      $region33: #{smodel_forward.13} parent=31 // pred_check
        %p205 = pneg %p32
      $region34: #{smodel_forward.13} parent=31 // pred_check_branch
        %207 = sbr.rel (%p205) target = $region36
      $region35: #{smodel_forward.13} parent=31 // pred_region
        %p208 = scmp.lt.s32.totalorder %s12, 1
        %s209 = scalar_select %p208, %s12, 1
        %s210 = smul.addr %s209, 4
        %s211 = scalar_lea.vmem %s0, %s210
      $region36: #{smodel_forward.13} parent=31 // pred_fallthru
        _
      // Predicated region
      $region37: #{smodel_forward.13} parent=31 // pred_check
        %p212 = pneg %p58
      $region38: #{smodel_forward.13} parent=31 // pred_check_branch
        %214 = sbr.rel (%p212) target = $region40
      $region39: #{smodel_forward.13} parent=31 // pred_region
        %p215 = scmp.lt.s32.totalorder %s12, 1
        %s216 = scalar_select %p215, %s12, 1
        %s217 = smul.addr %s216, 4
        %s218 = scalar_lea.vmem %s1, %s217
      $region40: #{smodel_forward.13} parent=31 // pred_fallthru
        _
    $region32: #{smodel_forward.13} parent=5 // pred_fallthru
      _
    %p219 = scmp.le.s32.totalorder 1, %s12
    %p220 = scmp.lt.s32.totalorder %s12, 3
    %p221 = pnand %p219, %p220
    %p222 = pneg %p221
    // Predicated region
    $region41: #{smodel_forward.13} parent=5 // pred_check
      _
    $region42: #{smodel_forward.13} parent=5 // pred_check_branch
      %224 = sbr.rel (%p221) target = $region44
    $region43: #{smodel_forward.13} parent=5 // pred_region
      %s225 = ssub.s32 %s12, 1
      %p226 = scmp.lt.s32.totalorder %s17, 1
      %s227 = scalar_select %p226, %s17, 1
      %s228 = smul.addr %s227, 4
      %s229 = scalar_lea.vmem %s0, %s228
      %p230 = pneg %p38
      %p231 = pneg %p35
      %p232 = scmp.lt.s32.totalorder %s17, 1
      %s233 = scalar_select %p232, %s17, 1
      %s234 = smul.addr %s233, 4
      %s235 = scalar_lea.vmem %s1, %s234
      %p236 = pneg %p64
      %p237 = pneg %p61
      %p238 = pneg %p85
      %p239 = pneg %p82
      %p240 = pneg %p106
      %p241 = pneg %p103
      %p242 = pneg %p127
      %p243 = pneg %p124
      %p244 = pneg %p148
      %p245 = pneg %p145
      %p246 = pneg %p174
      %p247 = pneg %p171
      %p248 = scmp.lt.s32.totalorder %s17, 1
      %s249 = scalar_select %p248, %s17, 1
      %s250 = smul.addr %s249, 4
      %s251 = smul.addr %s250, 8
      %s252 = scalar_lea.vmem %s6, %s251
      %p253 = scmp.lt.s32.totalorder %s17, 1
      %s254 = scalar_select %p253, %s17, 1
      %s255 = smul.addr %s254, 4
      %s256 = scalar_lea.vmem %s0, %s255
      %p257 = scmp.lt.s32.totalorder %s17, 1
      %s258 = scalar_select %p257, %s17, 1
      %s259 = smul.addr %s258, 4
      %s260 = scalar_lea.vmem %s1, %s259
      %p261 = scmp.lt.s32.totalorder %s17, 1
      %s262 = scalar_select %p261, %s17, 1
      %s263 = smul.addr %s262, 4
      %s264 = smul.addr %s263, 8
      %s265 = scalar_lea.vmem %s6, %s264
      %v267 = vld [vmem:[%s256] sm:$0xf]
      %v268 = vld [vmem:[%s260] sm:$0xf]
      %v269 = vld [vmem:[%s3] sm:$0xf]
      %v270 = vld [vmem:[%s3 + $0x4] sm:$0xf]
      %v271 = vld [vmem:[%s3 + $0x8] sm:$0xf]
      %v272 = vld [vmem:[%s3 + $0xc] sm:$0xf]
      %v273 = vld [vmem:[%s3 + $0x10] sm:$0xf]
      %v274 = vld [vmem:[%s3 + $0x14] sm:$0xf]
      %v275 = vld [vmem:[%s3 + $0x18] sm:$0xf]
      %v276 = vld [vmem:[%s3 + $0x1c] sm:$0xf]
      %v277 = vld [vmem:[%s5] sm:$0x1]
      %v279 = vlaneseq
      %v280 = vshrl.u32 %v279, 7
      %v281 = vsub.s32 0, %v280
      %v282 = vrot.slane %v277, %v281
      %v292 = vunpack.c.l.b16 %v269
      %v293 = vunpack.c.l.b16 %v270
      %v294 = vunpack.c.l.b16 %v271
      %v295 = vunpack.c.l.b16 %v272
      %v296 = vunpack.c.l.b16 %v273
      %v297 = vunpack.c.l.b16 %v274
      %v298 = vunpack.c.l.b16 %v275
      %v299 = vunpack.c.l.b16 %v276
      %v300 = vpack.c.b16 %v293, %v292
      %v301 = vpack.c.b16 %v295, %v294
      %v302 = vpack.c.b16 %v297, %v296
      %v303 = vpack.c.b16 %v299, %v298
      %vm308 = vcmask 523264
      %v310 = vsel %vm308, %v267, 0
      %312 = vmatprep.subr.bf16.mxu0 0
      %313 = vmatpush1.bf16.msra.mxu0 0
      %314 = vmatprep.subr.bf16.mxu0 0
      %315 = vmatpush1.bf16.msra.mxu0 0
      %316 = vmatprep.subr.bf16.mxu0 0
      %317 = vmatpush1.bf16.msra.mxu0 0
      %318 = vmatprep.subr.bf16.mxu0 0
      %319 = vmatpush1.bf16.msra.mxu0 0
      %320 = vmatprep.subr.bf16.mxu0 0
      %321 = vmatpush1.bf16.msra.mxu0 %v303
      %322 = vmatprep.subr.bf16.mxu0 0
      %323 = vmatpush1.bf16.msra.mxu0 %v302
      %324 = vmatprep.subr.bf16.mxu0 0
      %325 = vmatpush1.bf16.msra.mxu0 %v301
      %326 = vmatprep.subr.bf16.mxu0 0
      %327 = vmatpush1.bf16.msra.mxu0 %v300
      %328 = vmatprep.subr.bf16.mxu0 0
      %329 = vmatpush2.bf16.msra.mxu0 0
      %330 = vmatprep.subr.bf16.mxu0 0
      %331 = vmatpush2.bf16.msra.mxu0 0
      %332 = vmatprep.subr.bf16.mxu0 0
      %333 = vmatpush2.bf16.msra.mxu0 0
      %334 = vmatprep.subr.bf16.mxu0 0
      %335 = vmatpush2.bf16.msra.mxu0 0
      %336 = vmatprep.subr.bf16.mxu0 0
      %337 = vmatpush2.bf16.msra.mxu0 0
      %338 = vmatprep.subr.bf16.mxu0 0
      %339 = vmatpush2.bf16.msra.mxu0 0
      %340 = vmatprep.subr.bf16.mxu0 0
      %341 = vmatpush2.bf16.msra.mxu0 0
      %342 = vmatprep.subr.bf16.mxu0 0
      %343 = vmatpush2.bf16.msra.mxu0 0
      %344 = vmatprep.mubr.bf16.mxu0 0
      %345 = vmatmul.mubr.bf16.gmra.mxu0 %v310
      %v346 = vpop.f32.mrf.mxu0
      %v347 = vadd.f32 %v282, %v346
      %v348 = vpop.f32.mrf.mxu0
      %v349 = vpop.f32.mrf.mxu0
      %v350 = vpop.f32.mrf.mxu0
      %351 = vdwg.mxu0
      %v352 = vld [vmem:[%s4] sm:$0x3]
      %v354 = vsel %vm308, %v352, 0
      %v357 = vsel %vm308, %v268, 0
      %359 = vmatprep.subr.bf16.mxu0 0
      %360 = vmatpush1.bf16.xpose.msra.mxu0 0
      %361 = vmatprep.subr.bf16.mxu0 0
      %362 = vmatpush1.bf16.xpose.msra.mxu0 0
      %363 = vmatprep.subr.bf16.mxu0 0
      %364 = vmatpush1.bf16.xpose.msra.mxu0 0
      %365 = vmatprep.subr.bf16.mxu0 0
      %366 = vmatpush1.bf16.xpose.msra.mxu0 0
      %367 = vmatprep.subr.bf16.mxu0 0
      %368 = vmatpush1.bf16.xpose.msra.mxu0 0
      %369 = vmatprep.subr.bf16.mxu0 0
      %370 = vmatpush1.bf16.xpose.msra.mxu0 0
      %371 = vmatprep.subr.bf16.mxu0 0
      %372 = vmatpush1.bf16.xpose.msra.mxu0 0
      %373 = vmatprep.subr.bf16.mxu0 0
      %374 = vmatpush1.bf16.xpose.msra.mxu0 %v357
      %375 = vmatprep.subr.bf16.mxu0 0
      %376 = vmatpush2.bf16.xpose.msra.mxu0 0
      %377 = vmatprep.subr.bf16.mxu0 0
      %378 = vmatpush2.bf16.xpose.msra.mxu0 0
      %379 = vmatprep.subr.bf16.mxu0 0
      %380 = vmatpush2.bf16.xpose.msra.mxu0 0
      %381 = vmatprep.subr.bf16.mxu0 0
      %382 = vmatpush2.bf16.xpose.msra.mxu0 0
      %383 = vmatprep.subr.bf16.mxu0 0
      %384 = vmatpush2.bf16.xpose.msra.mxu0 0
      %385 = vmatprep.subr.bf16.mxu0 0
      %386 = vmatpush2.bf16.xpose.msra.mxu0 0
      %387 = vmatprep.subr.bf16.mxu0 0
      %388 = vmatpush2.bf16.xpose.msra.mxu0 0
      %389 = vmatprep.subr.bf16.mxu0 0
      %390 = vmatpush2.bf16.xpose.msra.mxu0 0
      %391 = vmatprep.mubr.bf16.mxu0 0
      %392 = vmatmul.mubr.bf16.gmra.mxu0 %v354
      %v393 = vpop.f32.mrf.mxu0
      %v394 = vadd.f32 0.0, %v393
      %v395 = vpop.f32.mrf.mxu0
      %v396 = vpop.f32.mrf.mxu0
      %v397 = vpop.f32.mrf.mxu0
      %398 = vdwg.mxu0
      %v399 = vld [vmem:[%s2] sm:$0xff]
      %v400 = vld [vmem:[%s2 + $0x8] sm:$0xff]
      %v401 = vld [vmem:[%s2 + $0x10] sm:$0xff]
      %v402 = vld [vmem:[%s2 + $0x18] sm:$0xff]
      %v403 = vld [vmem:[%s2 + $0x20] sm:$0xff]
      %v404 = vld [vmem:[%s2 + $0x28] sm:$0xff]
      %v405 = vld [vmem:[%s2 + $0x30] sm:$0xff]
      %v406 = vld [vmem:[%s2 + $0x38] sm:$0xff]
      %v415 = vunpack.c.l.b16 %v399
      %v416 = vunpack.c.h.b16 %v399
      %v417 = vunpack.c.l.b16 %v400
      %v418 = vunpack.c.h.b16 %v400
      %v419 = vunpack.c.l.b16 %v401
      %v420 = vunpack.c.h.b16 %v401
      %v421 = vunpack.c.l.b16 %v402
      %v422 = vunpack.c.h.b16 %v402
      %v423 = vunpack.c.l.b16 %v403
      %v424 = vunpack.c.h.b16 %v403
      %v425 = vunpack.c.l.b16 %v404
      %v426 = vunpack.c.h.b16 %v404
      %v427 = vunpack.c.l.b16 %v405
      %v428 = vunpack.c.h.b16 %v405
      %v429 = vunpack.c.l.b16 %v406
      %v430 = vunpack.c.h.b16 %v406
      %v431 = vpack.c.b16 %v417, %v415
      %v432 = vpack.c.b16 %v418, %v416
      %v433 = vpack.c.b16 %v421, %v419
      %v434 = vpack.c.b16 %v422, %v420
      %v435 = vpack.c.b16 %v425, %v423
      %v436 = vpack.c.b16 %v426, %v424
      %v437 = vpack.c.b16 %v429, %v427
      %v438 = vpack.c.b16 %v430, %v428
      %447 = vmatprep.subr.bf16.mxu0 0
      %448 = vmatpush1.bf16.msra.mxu0 0
      %449 = vmatprep.subr.bf16.mxu0 0
      %450 = vmatpush1.bf16.msra.mxu0 0
      %451 = vmatprep.subr.bf16.mxu0 0
      %452 = vmatpush1.bf16.msra.mxu0 0
      %453 = vmatprep.subr.bf16.mxu0 0
      %454 = vmatpush1.bf16.msra.mxu0 0
      %455 = vmatprep.subr.bf16.mxu0 %v438
      %456 = vmatpush1.bf16.msra.mxu0 %v437
      %457 = vmatprep.subr.bf16.mxu0 %v436
      %458 = vmatpush1.bf16.msra.mxu0 %v435
      %459 = vmatprep.subr.bf16.mxu0 %v434
      %460 = vmatpush1.bf16.msra.mxu0 %v433
      %461 = vmatprep.subr.bf16.mxu0 %v432
      %462 = vmatpush1.bf16.msra.mxu0 %v431
      %463 = vmatprep.subr.bf16.mxu0 0
      %464 = vmatpush2.bf16.msra.mxu0 0
      %465 = vmatprep.subr.bf16.mxu0 0
      %466 = vmatpush2.bf16.msra.mxu0 0
      %467 = vmatprep.subr.bf16.mxu0 0
      %468 = vmatpush2.bf16.msra.mxu0 0
      %469 = vmatprep.subr.bf16.mxu0 0
      %470 = vmatpush2.bf16.msra.mxu0 0
      %471 = vmatprep.subr.bf16.mxu0 0
      %472 = vmatpush2.bf16.msra.mxu0 0
      %473 = vmatprep.subr.bf16.mxu0 0
      %474 = vmatpush2.bf16.msra.mxu0 0
      %475 = vmatprep.subr.bf16.mxu0 0
      %476 = vmatpush2.bf16.msra.mxu0 0
      %477 = vmatprep.subr.bf16.mxu0 0
      %478 = vmatpush2.bf16.msra.mxu0 0
      %479 = vmatprep.mubr.bf16.mxu0 0
      %480 = vmatmul.mubr.bf16.gmra.mxu0 %v310
      %v481 = vpop.f32.mrf.mxu0
      %v482 = vadd.f32 0.0, %v481
      %v483 = vpop.f32.mrf.mxu0
      %v484 = vadd.f32 0.0, %v483
      %v485 = vpop.f32.mrf.mxu0
      %v486 = vpop.f32.mrf.mxu0
      %487 = vdwg.mxu0
      %v488 = vpack.c.bf16 %v482, %v482
      %490 = vset.pattern.permute.xlu0 0
      %491 = vperm.xlu0 %490, %v347
      %v492 = vpop.permute.xlu0 %491
      %v495 = vsel %vm308, %v488, 0
      %497 = vmatprep.subr.bf16.mxu0 0
      %498 = vmatpush1.bf16.xpose.msra.mxu0 0
      %499 = vmatprep.subr.bf16.mxu0 0
      %500 = vmatpush1.bf16.xpose.msra.mxu0 0
      %501 = vmatprep.subr.bf16.mxu0 0
      %502 = vmatpush1.bf16.xpose.msra.mxu0 0
      %503 = vmatprep.subr.bf16.mxu0 0
      %504 = vmatpush1.bf16.xpose.msra.mxu0 0
      %505 = vmatprep.subr.bf16.mxu0 0
      %506 = vmatpush1.bf16.xpose.msra.mxu0 0
      %507 = vmatprep.subr.bf16.mxu0 0
      %508 = vmatpush1.bf16.xpose.msra.mxu0 0
      %509 = vmatprep.subr.bf16.mxu0 0
      %510 = vmatpush1.bf16.xpose.msra.mxu0 0
      %511 = vmatprep.subr.bf16.mxu0 0
      %512 = vmatpush1.bf16.xpose.msra.mxu0 %v357
      %513 = vmatprep.subr.bf16.mxu0 0
      %514 = vmatpush2.bf16.xpose.msra.mxu0 0
      %515 = vmatprep.subr.bf16.mxu0 0
      %516 = vmatpush2.bf16.xpose.msra.mxu0 0
      %517 = vmatprep.subr.bf16.mxu0 0
      %518 = vmatpush2.bf16.xpose.msra.mxu0 0
      %519 = vmatprep.subr.bf16.mxu0 0
      %520 = vmatpush2.bf16.xpose.msra.mxu0 0
      %521 = vmatprep.subr.bf16.mxu0 0
      %522 = vmatpush2.bf16.xpose.msra.mxu0 0
      %523 = vmatprep.subr.bf16.mxu0 0
      %524 = vmatpush2.bf16.xpose.msra.mxu0 0
      %525 = vmatprep.subr.bf16.mxu0 0
      %526 = vmatpush2.bf16.xpose.msra.mxu0 0
      %527 = vmatprep.subr.bf16.mxu0 0
      %528 = vmatpush2.bf16.xpose.msra.mxu0 0
      %529 = vmatprep.mubr.bf16.mxu0 0
      %530 = vmatmul.mubr.bf16.gmra.mxu0 %v495
      %v531 = vpop.f32.mrf.mxu0
      %v532 = vadd.f32 %v492, %v531
      %v533 = vpop.f32.mrf.mxu0
      %v534 = vpop.f32.mrf.mxu0
      %v535 = vpop.f32.mrf.mxu0
      %536 = vdwg.mxu0
      %v537 = vlaneseq
      %v538 = vshrl.u32 %v537, 7
      %v539 = vsub.s32 0, %v538
      %v540 = vrot.slane %v394, %v539
      %v541 = vadd.f32 %v532, %v540
      %vm542 = vcmask 64512
      %543 = vst.msk [vmem:[%s265] sm:$0xff] %vm542, %v541
      %544 = vset.pattern.permute.xlu0 1
      %545 = vperm.xlu0 %544, %v347
      %v546 = vpop.permute.xlu0 %545
      %549 = vrot.lane.b32.xlu0 %v488, 64
      %v550 = vpop.permute.xlu0 %549
      %v552 = vsel %vm308, %v550, 0
      %554 = vmatprep.subr.bf16.mxu0 0
      %555 = vmatpush1.bf16.xpose.msra.mxu0 0
      %556 = vmatprep.subr.bf16.mxu0 0
      %557 = vmatpush1.bf16.xpose.msra.mxu0 0
      %558 = vmatprep.subr.bf16.mxu0 0
      %559 = vmatpush1.bf16.xpose.msra.mxu0 0
      %560 = vmatprep.subr.bf16.mxu0 0
      %561 = vmatpush1.bf16.xpose.msra.mxu0 0
      %562 = vmatprep.subr.bf16.mxu0 0
      %563 = vmatpush1.bf16.xpose.msra.mxu0 0
      %564 = vmatprep.subr.bf16.mxu0 0
      %565 = vmatpush1.bf16.xpose.msra.mxu0 0
      %566 = vmatprep.subr.bf16.mxu0 0
      %567 = vmatpush1.bf16.xpose.msra.mxu0 0
      %568 = vmatprep.subr.bf16.mxu0 0
      %569 = vmatpush1.bf16.xpose.msra.mxu0 %v357
      %570 = vmatprep.subr.bf16.mxu0 0
      %571 = vmatpush2.bf16.xpose.msra.mxu0 0
      %572 = vmatprep.subr.bf16.mxu0 0
      %573 = vmatpush2.bf16.xpose.msra.mxu0 0
      %574 = vmatprep.subr.bf16.mxu0 0
      %575 = vmatpush2.bf16.xpose.msra.mxu0 0
      %576 = vmatprep.subr.bf16.mxu0 0
      %577 = vmatpush2.bf16.xpose.msra.mxu0 0
      %578 = vmatprep.subr.bf16.mxu0 0
      %579 = vmatpush2.bf16.xpose.msra.mxu0 0
      %580 = vmatprep.subr.bf16.mxu0 0
      %581 = vmatpush2.bf16.xpose.msra.mxu0 0
      %582 = vmatprep.subr.bf16.mxu0 0
      %583 = vmatpush2.bf16.xpose.msra.mxu0 0
      %584 = vmatprep.subr.bf16.mxu0 0
      %585 = vmatpush2.bf16.xpose.msra.mxu0 0
      %586 = vmatprep.mubr.bf16.mxu0 0
      %587 = vmatmul.mubr.bf16.gmra.mxu0 %v552
      %v588 = vpop.f32.mrf.mxu0
      %v589 = vadd.f32 %v546, %v588
      %v590 = vpop.f32.mrf.mxu0
      %v591 = vpop.f32.mrf.mxu0
      %v592 = vpop.f32.mrf.mxu0
      %593 = vdwg.mxu0
      %v594 = vlaneseq
      %v595 = vshrl.u32 %v594, 7
      %v596 = vsub.s32 1, %v595
      %v597 = vrot.slane %v394, %v596
      %v598 = vadd.f32 %v589, %v597
      %s599 = scalar_lea.vmem %s265, 8
      %600 = vst.msk [vmem:[%s599] sm:$0xff] %vm542, %v598
      %v601 = vpack.c.bf16 %v484, %v484
      %602 = vset.pattern.permute.xlu0 2
      %603 = vperm.xlu0 %602, %v347
      %v604 = vpop.permute.xlu0 %603
      %v607 = vsel %vm308, %v601, 0
      %609 = vmatprep.subr.bf16.mxu0 0
      %610 = vmatpush1.bf16.xpose.msra.mxu0 0
      %611 = vmatprep.subr.bf16.mxu0 0
      %612 = vmatpush1.bf16.xpose.msra.mxu0 0
      %613 = vmatprep.subr.bf16.mxu0 0
      %614 = vmatpush1.bf16.xpose.msra.mxu0 0
      %615 = vmatprep.subr.bf16.mxu0 0
      %616 = vmatpush1.bf16.xpose.msra.mxu0 0
      %617 = vmatprep.subr.bf16.mxu0 0
      %618 = vmatpush1.bf16.xpose.msra.mxu0 0
      %619 = vmatprep.subr.bf16.mxu0 0
      %620 = vmatpush1.bf16.xpose.msra.mxu0 0
      %621 = vmatprep.subr.bf16.mxu0 0
      %622 = vmatpush1.bf16.xpose.msra.mxu0 0
      %623 = vmatprep.subr.bf16.mxu0 0
      %624 = vmatpush1.bf16.xpose.msra.mxu0 %v357
      %625 = vmatprep.subr.bf16.mxu0 0
      %626 = vmatpush2.bf16.xpose.msra.mxu0 0
      %627 = vmatprep.subr.bf16.mxu0 0
      %628 = vmatpush2.bf16.xpose.msra.mxu0 0
      %629 = vmatprep.subr.bf16.mxu0 0
      %630 = vmatpush2.bf16.xpose.msra.mxu0 0
      %631 = vmatprep.subr.bf16.mxu0 0
      %632 = vmatpush2.bf16.xpose.msra.mxu0 0
      %633 = vmatprep.subr.bf16.mxu0 0
      %634 = vmatpush2.bf16.xpose.msra.mxu0 0
      %635 = vmatprep.subr.bf16.mxu0 0
      %636 = vmatpush2.bf16.xpose.msra.mxu0 0
      %637 = vmatprep.subr.bf16.mxu0 0
      %638 = vmatpush2.bf16.xpose.msra.mxu0 0
      %639 = vmatprep.subr.bf16.mxu0 0
      %640 = vmatpush2.bf16.xpose.msra.mxu0 0
      %641 = vmatprep.mubr.bf16.mxu0 0
      %642 = vmatmul.mubr.bf16.gmra.mxu0 %v607
      %v643 = vpop.f32.mrf.mxu0
      %v644 = vadd.f32 %v604, %v643
      %v645 = vpop.f32.mrf.mxu0
      %v646 = vpop.f32.mrf.mxu0
      %v647 = vpop.f32.mrf.mxu0
      %648 = vdwg.mxu0
      %v649 = vlaneseq
      %v650 = vshrl.u32 %v649, 7
      %v651 = vsub.s32 2, %v650
      %v652 = vrot.slane %v394, %v651
      %v653 = vadd.f32 %v644, %v652
      %s654 = scalar_lea.vmem %s265, 16
      %655 = vst.msk [vmem:[%s654] sm:$0xff] %vm542, %v653
      %656 = vset.pattern.permute.xlu0 3
      %657 = vperm.xlu0 %656, %v347
      %v658 = vpop.permute.xlu0 %657
      %661 = vrot.lane.b32.xlu0 %v601, 64
      %v662 = vpop.permute.xlu0 %661
      %v664 = vsel %vm308, %v662, 0
      %666 = vmatprep.subr.bf16.mxu0 0
      %667 = vmatpush1.bf16.xpose.msra.mxu0 0
      %668 = vmatprep.subr.bf16.mxu0 0
      %669 = vmatpush1.bf16.xpose.msra.mxu0 0
      %670 = vmatprep.subr.bf16.mxu0 0
      %671 = vmatpush1.bf16.xpose.msra.mxu0 0
      %672 = vmatprep.subr.bf16.mxu0 0
      %673 = vmatpush1.bf16.xpose.msra.mxu0 0
      %674 = vmatprep.subr.bf16.mxu0 0
      %675 = vmatpush1.bf16.xpose.msra.mxu0 0
      %676 = vmatprep.subr.bf16.mxu0 0
      %677 = vmatpush1.bf16.xpose.msra.mxu0 0
      %678 = vmatprep.subr.bf16.mxu0 0
      %679 = vmatpush1.bf16.xpose.msra.mxu0 0
      %680 = vmatprep.subr.bf16.mxu0 0
      %681 = vmatpush1.bf16.xpose.msra.mxu0 %v357
      %682 = vmatprep.subr.bf16.mxu0 0
      %683 = vmatpush2.bf16.xpose.msra.mxu0 0
      %684 = vmatprep.subr.bf16.mxu0 0
      %685 = vmatpush2.bf16.xpose.msra.mxu0 0
      %686 = vmatprep.subr.bf16.mxu0 0
      %687 = vmatpush2.bf16.xpose.msra.mxu0 0
      %688 = vmatprep.subr.bf16.mxu0 0
      %689 = vmatpush2.bf16.xpose.msra.mxu0 0
      %690 = vmatprep.subr.bf16.mxu0 0
      %691 = vmatpush2.bf16.xpose.msra.mxu0 0
      %692 = vmatprep.subr.bf16.mxu0 0
      %693 = vmatpush2.bf16.xpose.msra.mxu0 0
      %694 = vmatprep.subr.bf16.mxu0 0
      %695 = vmatpush2.bf16.xpose.msra.mxu0 0
      %696 = vmatprep.subr.bf16.mxu0 0
      %697 = vmatpush2.bf16.xpose.msra.mxu0 0
      %698 = vmatprep.mubr.bf16.mxu0 0
      %699 = vmatmul.mubr.bf16.gmra.mxu0 %v664
      %v700 = vpop.f32.mrf.mxu0
      %v701 = vadd.f32 %v658, %v700
      %v702 = vpop.f32.mrf.mxu0
      %v703 = vpop.f32.mrf.mxu0
      %v704 = vpop.f32.mrf.mxu0
      %705 = vdwg.mxu0
      %v706 = vlaneseq
      %v707 = vshrl.u32 %v706, 7
      %v708 = vsub.s32 3, %v707
      %v709 = vrot.slane %v394, %v708
      %v710 = vadd.f32 %v701, %v709
      %s711 = scalar_lea.vmem %s265, 24
      %712 = vst.msk [vmem:[%s711] sm:$0xff] %vm542, %v710
      %p713 = scmp.lt.s32.totalorder %s17, 1
      %s714 = scalar_select %p713, %s17, 1
      %s715 = smul.addr %s714, 4
      %s716 = smul.addr %s715, 8
      %s717 = scalar_lea.vmem %s6, %s716
      // Predicated region
      $region45: #{smodel_forward.13} parent=43 // pred_check
        %p718 = pneg %p171
      $region46: #{smodel_forward.13} parent=43 // pred_check_branch
        %720 = sbr.rel (%p718) target = $region48
      $region47: #{smodel_forward.13} parent=43 // pred_region
        _
      $region48: #{smodel_forward.13} parent=43 // pred_fallthru
        _
    $region44: #{smodel_forward.13} parent=5 // pred_fallthru
      _
    %p721 = scmp.le.s32.totalorder 2, %s12
    // Predicated region
    $region49: #{smodel_forward.13} parent=5 // pred_check
      %p722 = pneg %p721
    $region50: #{smodel_forward.13} parent=5 // pred_check_branch
      %724 = sbr.rel (%p722) target = $region52
    $region51: #{smodel_forward.13} parent=5 // pred_region
      %s725 = ssub.s32 %s12, 2
      // Predicated region
      $region53: #{smodel_forward.13} parent=51 // pred_check
        %p726 = pneg %p177
      $region54: #{smodel_forward.13} parent=51 // pred_check_branch
        %728 = sbr.rel (%p726) target = $region56
      $region55: #{smodel_forward.13} parent=51 // pred_region
        %p729 = scmp.lt.s32.totalorder %s18, 1
        %s730 = scalar_select %p729, %s18, 1
        %s731 = smul.addr %s730, 4
        %s732 = smul.addr %s731, 8
        %s733 = scalar_lea.vmem %s6, %s732
      $region56: #{smodel_forward.13} parent=51 // pred_fallthru
        _
    $region52: #{smodel_forward.13} parent=5 // pred_fallthru
      _
  $region6: #{smodel_forward.13} parent=0 // loop_footer
    %s16 = sadd.s32 1, %s12
  $region7: #{smodel_forward.13} parent=0 // loop_footer_branch
    %11 = sbr.rel target = $region3
  $region8: #{smodel_forward.13} parent=0 // loop_exit
    _

// kernel: smodel_forward.9
$region0: #{smodel_forward.9}
  #allocation0 [shape = 'u32[]', space=smem, size = 0x4, offset = 0x4, fixed_abs, tag = 'smem constant byte address 0x4 - core index']
  #allocation1 [shape = 'u32[144,128]{1,0:T(1,128)}', space=vmem, size = 0x12000, scoped, tag = 'internal scratch']
  #allocation2 [shape = 'f32[2,32]{1,0:T(2,128)}', space=vmem, size = 0x400, scoped, tag = 'scratch operand']
  #allocation3 [shape = 'f32[2,32]{1,0:T(2,128)}', space=vmem, size = 0x400, scoped, tag = 'scratch operand']
  #allocation4 [shape = 'f32[2,32]{1,0:T(2,128)}', space=vmem, size = 0x400, scoped, tag = 'scratch operand']
  #allocation5 [shape = 'f32[2,32]{1,0:T(2,128)}', space=vmem, size = 0x400, scoped, tag = 'scratch operand']
  %s0 = inlined_call_operand.vmem [shape: bf16[8,2,256], index: 0, kind: input, shape index: {}, may-alias: {0,1}]
  %s1 = inlined_call_operand.vmem [shape: bf16[8,2,256], index: 1, kind: input, shape index: {}, may-alias: {0,1}]
  %s2 = inlined_call_operand.vmem [shape: bf16[32,128], index: 2, kind: input, shape index: {}]
  %s3 = inlined_call_operand.vmem [shape: bf16[32,128], index: 3, kind: input, shape index: {}]
  %s4 = inlined_call_operand.vmem [shape: bf16[8,2,32], index: 4, kind: output, shape index: {0}]
  %s5 = inlined_call_operand.vmem [shape: bf16[8,2,32], index: 5, kind: output, shape index: {1}]
  %6 = xla_tuple %s4, %s5
  %s7 = sld [smem:[#allocation0]]
  $region120: #{smodel_forward.9} parent=0
    _
  %s9 = ssub.s32 1, %s7
  %s10 = scalar_select 0, %s9, %s7
  $region1: #{smodel_forward.9} parent=0
    #allocation6 [shape = 'u8[4096]{0}', space=vmem, size = 0x1000, scoped, tag = 'input window, operand 0, single buffered']
    #allocation7 [shape = 'u8[4096]{0}', space=vmem, size = 0x1000, scoped, tag = 'input window, operand 1, single buffered']
    // Predicated region
    $region2: #{smodel_forward.9} parent=1 // pred_check
      _
    $region3: #{smodel_forward.9} parent=1 // pred_check_branch
      %12 = sbr.rel (0) target = $region5
    $region4: #{smodel_forward.9} parent=1 // pred_region
      // Predicated region
      $region6: #{smodel_forward.9} parent=4 // pred_check
        _
      $region7: #{smodel_forward.9} parent=4 // pred_check_branch
        %14 = sbr.rel (0) target = $region9
      $region8: #{smodel_forward.9} parent=4 // pred_region
        // Predicated region
        $region10: #{smodel_forward.9} parent=8 // pred_check
          _
        $region11: #{smodel_forward.9} parent=8 // pred_check_branch
          %16 = sbr.rel target = $region13
        $region12: #{smodel_forward.9} parent=8 // pred_region
          // Predicated region
          $region25: #{smodel_forward.9} parent=12 // pred_check
            _
          $region26: #{smodel_forward.9} parent=12 // pred_check_branch
            %46 = sbr.rel (0) target = $region28
          $region27: #{smodel_forward.9} parent=12 // pred_region
            loop: start=0, step=1, limit=1
            $region29: #{smodel_forward.9} parent=27 // loop_pre_header
              _
            $region30: #{smodel_forward.9} parent=27 // loop_header
              %s48 = sphi 0, %s52
              %p49 = scmp.ge.s32.totalorder %s48, 1
              %s53 = sphi %s0, %s0
              %s54 = sphi [#allocation6], [#allocation6]
            $region31: #{smodel_forward.9} parent=27 // loop_header_branch
              %51 = sbr.rel (%p49) target = $region35
            $region32: #{smodel_forward.9} parent=27 // loop_body
              _
            $region33: #{smodel_forward.9} parent=27 // loop_footer
              %s52 = sadd.s32 1, %s48
            $region34: #{smodel_forward.9} parent=27 // loop_footer_branch
              %47 = sbr.rel target = $region30
            $region35: #{smodel_forward.9} parent=27 // loop_exit
              _
            %s56 = ssub.s32 2, 1
            loop: start=0, step=1, limit=1
            $region36: #{smodel_forward.9} parent=27 // loop_pre_header
              _
            $region37: #{smodel_forward.9} parent=27 // loop_header
              %s58 = sphi 0, %s62
              %p59 = scmp.ge.s32.totalorder %s58, 1
              %s63 = sphi %s0, %s0
              %s64 = sphi [#allocation6], [#allocation6]
            $region38: #{smodel_forward.9} parent=27 // loop_header_branch
              %61 = sbr.rel (%p59) target = $region42
            $region39: #{smodel_forward.9} parent=27 // loop_body
              %v65 = vld [vmem:[%s63] sm:%s56]
              %66 = vst [vmem:[%s64] sm:%s56] %v65
              %v67 = vld [vmem:[%s63 + $0x2] sm:%s56]
              %68 = vst [vmem:[%s64 + $0x1] sm:%s56] %v67
              %v69 = vld [vmem:[%s63 + $0x4] sm:%s56]
              %70 = vst [vmem:[%s64 + $0x2] sm:%s56] %v69
              %v71 = vld [vmem:[%s63 + $0x6] sm:%s56]
              %72 = vst [vmem:[%s64 + $0x3] sm:%s56] %v71
              %v73 = vld [vmem:[%s63 + $0x8] sm:%s56]
              %74 = vst [vmem:[%s64 + $0x4] sm:%s56] %v73
              %v75 = vld [vmem:[%s63 + $0xa] sm:%s56]
              %76 = vst [vmem:[%s64 + $0x5] sm:%s56] %v75
              %v77 = vld [vmem:[%s63 + $0xc] sm:%s56]
              %78 = vst [vmem:[%s64 + $0x6] sm:%s56] %v77
              %v79 = vld [vmem:[%s63 + $0xe] sm:%s56]
              %80 = vst [vmem:[%s64 + $0x7] sm:%s56] %v79
            $region40: #{smodel_forward.9} parent=27 // loop_footer
              %s62 = sadd.s32 1, %s58
            $region41: #{smodel_forward.9} parent=27 // loop_footer_branch
              %57 = sbr.rel target = $region37
            $region42: #{smodel_forward.9} parent=27 // loop_exit
              _
          $region28: #{smodel_forward.9} parent=12 // pred_fallthru
            _
        $region13: #{smodel_forward.9} parent=8 // pred_fallthru
          _
        // Predicated region
        $region14: #{smodel_forward.9} parent=8 // pred_check
          _
        $region15: #{smodel_forward.9} parent=8 // pred_check_branch
          %18 = sbr.rel (0) target = $region17
        $region16: #{smodel_forward.9} parent=8 // pred_region
          %s20 = ssub.s32 2, 1
          loop: start=0, step=1, limit=1
          $region18: #{smodel_forward.9} parent=16 // loop_pre_header
            _
          $region19: #{smodel_forward.9} parent=16 // loop_header
            %s22 = sphi 0, %s26
            %p23 = scmp.ge.s32.totalorder %s22, 1
            %s27 = sphi %s0, %s0
            %s28 = sphi [#allocation6], [#allocation6]
          $region20: #{smodel_forward.9} parent=16 // loop_header_branch
            %25 = sbr.rel (%p23) target = $region24
          $region21: #{smodel_forward.9} parent=16 // loop_body
            %v29 = vld [vmem:[%s27] sm:%s20]
            %30 = vst [vmem:[%s28] sm:%s20] %v29
            %v31 = vld [vmem:[%s27 + $0x2] sm:%s20]
            %32 = vst [vmem:[%s28 + $0x1] sm:%s20] %v31
            %v33 = vld [vmem:[%s27 + $0x4] sm:%s20]
            %34 = vst [vmem:[%s28 + $0x2] sm:%s20] %v33
            %v35 = vld [vmem:[%s27 + $0x6] sm:%s20]
            %36 = vst [vmem:[%s28 + $0x3] sm:%s20] %v35
            %v37 = vld [vmem:[%s27 + $0x8] sm:%s20]
            %38 = vst [vmem:[%s28 + $0x4] sm:%s20] %v37
            %v39 = vld [vmem:[%s27 + $0xa] sm:%s20]
            %40 = vst [vmem:[%s28 + $0x5] sm:%s20] %v39
            %v41 = vld [vmem:[%s27 + $0xc] sm:%s20]
            %42 = vst [vmem:[%s28 + $0x6] sm:%s20] %v41
            %v43 = vld [vmem:[%s27 + $0xe] sm:%s20]
            %44 = vst [vmem:[%s28 + $0x7] sm:%s20] %v43
          $region22: #{smodel_forward.9} parent=16 // loop_footer
            %s26 = sadd.s32 1, %s22
          $region23: #{smodel_forward.9} parent=16 // loop_footer_branch
            %21 = sbr.rel target = $region19
          $region24: #{smodel_forward.9} parent=16 // loop_exit
            _
        $region17: #{smodel_forward.9} parent=8 // pred_fallthru
          _
      $region9: #{smodel_forward.9} parent=4 // pred_fallthru
        _
      %81 = vnop
    $region5: #{smodel_forward.9} parent=1 // pred_fallthru
      _
    // Predicated region
    $region43: #{smodel_forward.9} parent=1 // pred_check
      _
    $region44: #{smodel_forward.9} parent=1 // pred_check_branch
      %83 = sbr.rel (0) target = $region46
    $region45: #{smodel_forward.9} parent=1 // pred_region
      %s84 = ssub.s32 0, 0
      %s85 = smul.u32 8, %s84
      %s86 = smul.addr %s85, 2
      %s87 = sadd.s32 1, %s86
      %s88 = scalar_lea.vmem %s1, %s87
      // Predicated region
      $region47: #{smodel_forward.9} parent=45 // pred_check
        _
      $region48: #{smodel_forward.9} parent=45 // pred_check_branch
        %90 = sbr.rel (0) target = $region50
      $region49: #{smodel_forward.9} parent=45 // pred_region
        // Predicated region
        $region51: #{smodel_forward.9} parent=49 // pred_check
          _
        $region52: #{smodel_forward.9} parent=49 // pred_check_branch
          %92 = sbr.rel target = $region54
        $region53: #{smodel_forward.9} parent=49 // pred_region
          // Predicated region
          $region66: #{smodel_forward.9} parent=53 // pred_check
            _
          $region67: #{smodel_forward.9} parent=53 // pred_check_branch
            %122 = sbr.rel (0) target = $region69
          $region68: #{smodel_forward.9} parent=53 // pred_region
            loop: start=0, step=1, limit=1
            $region70: #{smodel_forward.9} parent=68 // loop_pre_header
              _
            $region71: #{smodel_forward.9} parent=68 // loop_header
              %s124 = sphi 0, %s128
              %p125 = scmp.ge.s32.totalorder %s124, 1
              %s129 = sphi %s88, %s88
              %s130 = sphi [#allocation7], [#allocation7]
            $region72: #{smodel_forward.9} parent=68 // loop_header_branch
              %127 = sbr.rel (%p125) target = $region76
            $region73: #{smodel_forward.9} parent=68 // loop_body
              _
            $region74: #{smodel_forward.9} parent=68 // loop_footer
              %s128 = sadd.s32 1, %s124
            $region75: #{smodel_forward.9} parent=68 // loop_footer_branch
              %123 = sbr.rel target = $region71
            $region76: #{smodel_forward.9} parent=68 // loop_exit
              _
            %s132 = ssub.s32 2, 1
            loop: start=0, step=1, limit=1
            $region77: #{smodel_forward.9} parent=68 // loop_pre_header
              _
            $region78: #{smodel_forward.9} parent=68 // loop_header
              %s134 = sphi 0, %s138
              %p135 = scmp.ge.s32.totalorder %s134, 1
              %s139 = sphi %s88, %s88
              %s140 = sphi [#allocation7], [#allocation7]
            $region79: #{smodel_forward.9} parent=68 // loop_header_branch
              %137 = sbr.rel (%p135) target = $region83
            $region80: #{smodel_forward.9} parent=68 // loop_body
              %v141 = vld [vmem:[%s139] sm:%s132]
              %142 = vst [vmem:[%s140] sm:%s132] %v141
              %v143 = vld [vmem:[%s139 + $0x2] sm:%s132]
              %144 = vst [vmem:[%s140 + $0x1] sm:%s132] %v143
              %v145 = vld [vmem:[%s139 + $0x4] sm:%s132]
              %146 = vst [vmem:[%s140 + $0x2] sm:%s132] %v145
              %v147 = vld [vmem:[%s139 + $0x6] sm:%s132]
              %148 = vst [vmem:[%s140 + $0x3] sm:%s132] %v147
              %v149 = vld [vmem:[%s139 + $0x8] sm:%s132]
              %150 = vst [vmem:[%s140 + $0x4] sm:%s132] %v149
              %v151 = vld [vmem:[%s139 + $0xa] sm:%s132]
              %152 = vst [vmem:[%s140 + $0x5] sm:%s132] %v151
              %v153 = vld [vmem:[%s139 + $0xc] sm:%s132]
              %154 = vst [vmem:[%s140 + $0x6] sm:%s132] %v153
              %v155 = vld [vmem:[%s139 + $0xe] sm:%s132]
              %156 = vst [vmem:[%s140 + $0x7] sm:%s132] %v155
            $region81: #{smodel_forward.9} parent=68 // loop_footer
              %s138 = sadd.s32 1, %s134
            $region82: #{smodel_forward.9} parent=68 // loop_footer_branch
              %133 = sbr.rel target = $region78
            $region83: #{smodel_forward.9} parent=68 // loop_exit
              _
          $region69: #{smodel_forward.9} parent=53 // pred_fallthru
            _
        $region54: #{smodel_forward.9} parent=49 // pred_fallthru
          _
        // Predicated region
        $region55: #{smodel_forward.9} parent=49 // pred_check
          _
        $region56: #{smodel_forward.9} parent=49 // pred_check_branch
          %94 = sbr.rel (0) target = $region58
        $region57: #{smodel_forward.9} parent=49 // pred_region
          %s96 = ssub.s32 2, 1
          loop: start=0, step=1, limit=1
          $region59: #{smodel_forward.9} parent=57 // loop_pre_header
            _
          $region60: #{smodel_forward.9} parent=57 // loop_header
            %s98 = sphi 0, %s102
            %p99 = scmp.ge.s32.totalorder %s98, 1
            %s103 = sphi %s88, %s88
            %s104 = sphi [#allocation7], [#allocation7]
          $region61: #{smodel_forward.9} parent=57 // loop_header_branch
            %101 = sbr.rel (%p99) target = $region65
          $region62: #{smodel_forward.9} parent=57 // loop_body
            %v105 = vld [vmem:[%s103] sm:%s96]
            %106 = vst [vmem:[%s104] sm:%s96] %v105
            %v107 = vld [vmem:[%s103 + $0x2] sm:%s96]
            %108 = vst [vmem:[%s104 + $0x1] sm:%s96] %v107
            %v109 = vld [vmem:[%s103 + $0x4] sm:%s96]
            %110 = vst [vmem:[%s104 + $0x2] sm:%s96] %v109
            %v111 = vld [vmem:[%s103 + $0x6] sm:%s96]
            %112 = vst [vmem:[%s104 + $0x3] sm:%s96] %v111
            %v113 = vld [vmem:[%s103 + $0x8] sm:%s96]
            %114 = vst [vmem:[%s104 + $0x4] sm:%s96] %v113
            %v115 = vld [vmem:[%s103 + $0xa] sm:%s96]
            %116 = vst [vmem:[%s104 + $0x5] sm:%s96] %v115
            %v117 = vld [vmem:[%s103 + $0xc] sm:%s96]
            %118 = vst [vmem:[%s104 + $0x6] sm:%s96] %v117
            %v119 = vld [vmem:[%s103 + $0xe] sm:%s96]
            %120 = vst [vmem:[%s104 + $0x7] sm:%s96] %v119
          $region63: #{smodel_forward.9} parent=57 // loop_footer
            %s102 = sadd.s32 1, %s98
          $region64: #{smodel_forward.9} parent=57 // loop_footer_branch
            %97 = sbr.rel target = $region60
          $region65: #{smodel_forward.9} parent=57 // loop_exit
            _
        $region58: #{smodel_forward.9} parent=49 // pred_fallthru
          _
      $region50: #{smodel_forward.9} parent=45 // pred_fallthru
        _
      %157 = vnop
    $region46: #{smodel_forward.9} parent=1 // pred_fallthru
      _
    // Predicated region
    $region84: #{smodel_forward.9} parent=1 // pred_check
      _
    $region85: #{smodel_forward.9} parent=1 // pred_check_branch
      %159 = sbr.rel (0) target = $region87
    $region86: #{smodel_forward.9} parent=1 // pred_region
      _
    $region87: #{smodel_forward.9} parent=1 // pred_fallthru
      _
    // Predicated region
    $region88: #{smodel_forward.9} parent=1 // pred_check
      _
    $region89: #{smodel_forward.9} parent=1 // pred_check_branch
      %161 = sbr.rel (0) target = $region91
    $region90: #{smodel_forward.9} parent=1 // pred_region
      _
    $region91: #{smodel_forward.9} parent=1 // pred_fallthru
      _
    // Predicated region
    $region92: #{smodel_forward.9} parent=1 // pred_check
      _
    $region93: #{smodel_forward.9} parent=1 // pred_check_branch
      %163 = sbr.rel (0) target = $region95
    $region94: #{smodel_forward.9} parent=1 // pred_region
      _
    $region95: #{smodel_forward.9} parent=1 // pred_fallthru
      _
    // Predicated region
    $region96: #{smodel_forward.9} parent=1 // pred_check
      _
    $region97: #{smodel_forward.9} parent=1 // pred_check_branch
      %165 = sbr.rel (0) target = $region99
    $region98: #{smodel_forward.9} parent=1 // pred_region
      _
    $region99: #{smodel_forward.9} parent=1 // pred_fallthru
      _
    %s166 = ssub.s32 0, 0
    %s167 = smul.u32 8, %s166
    %p168 = scmp.lt.s32.totalorder %s167, 7
    %s169 = scalar_select %p168, %s167, 7
    %s170 = scalar_lea.vmem %s5, %s169
    %s171 = ssub.s32 0, 0
    %s172 = smul.u32 8, %s171
    %s173 = ssub.s32 0, 0
    %s174 = smul.u32 8, %s173
    %p175 = scmp.lt.s32.totalorder %s174, 7
    %s176 = scalar_select %p175, %s174, 7
    %s177 = scalar_lea.vmem %s5, %s176
    %s178 = ssub.s32 0, 0
    %s179 = smul.u32 8, %s178
    %p181 = scmp.eq.s32.totalorder 0, 0
    // Predicated region
    $region100: #{smodel_forward.9} parent=1 // pred_check
      %p182 = pneg %p181
    $region101: #{smodel_forward.9} parent=1 // pred_check_branch
      %184 = sbr.rel (%p182) target = $region103
    $region102: #{smodel_forward.9} parent=1 // pred_region
      %vm185 = vcmask 254976
      %186 = vst.msk [vmem:[#allocation2] sm:$0x3] %vm185, 0.0
      %187 = vst.msk [vmem:[#allocation3] sm:$0x3] %vm185, 0.0
      %188 = vst.msk [vmem:[#allocation4] sm:$0x3] %vm185, 0.0
      %189 = vst.msk [vmem:[#allocation5] sm:$0x3] %vm185, 0.0
    $region103: #{smodel_forward.9} parent=1 // pred_fallthru
      _
    %v190 = vld [vmem:[%s2] sm:$0xf]
    %v191 = vld [vmem:[%s2 + $0x4] sm:$0xf]
    %v192 = vld [vmem:[%s2 + $0x8] sm:$0xf]
    %v193 = vld [vmem:[%s2 + $0xc] sm:$0xf]
    %v194 = vld [vmem:[%s3] sm:$0xf]
    %v195 = vld [vmem:[%s3 + $0x4] sm:$0xf]
    %v196 = vld [vmem:[%s3 + $0x8] sm:$0xf]
    %v197 = vld [vmem:[%s3 + $0xc] sm:$0xf]
    %v198 = vld [vmem:[#allocation6] sm:$0x1]
    %s199 = scalar_lea.vmem [#allocation7], 7
    %v200 = vld [vmem:[%s199] sm:$0x1]
    %v201 = vld [vmem:[#allocation2] sm:$0x3]
    %v202 = vld [vmem:[#allocation3] sm:$0x3]
    %v203 = vunpack.c.l.bf16 %v198
    %v204 = vpack.c.bf16 %v201, %v201
    %v209 = vunpack.c.l.b16 %v190
    %v210 = vunpack.c.l.b16 %v191
    %v211 = vunpack.c.l.b16 %v192
    %v212 = vunpack.c.l.b16 %v193
    %v213 = vpack.c.b16 %v210, %v209
    %v214 = vpack.c.b16 %v212, %v211
    %vm217 = vcmask 261120
    %v219 = vsel %vm217, %v204, 0
    %221 = vmatprep.subr.bf16.mxu0 0
    %222 = vmatpush1.bf16.msra.mxu0 0
    %223 = vmatprep.subr.bf16.mxu0 0
    %224 = vmatpush1.bf16.msra.mxu0 0
    %225 = vmatprep.subr.bf16.mxu0 0
    %226 = vmatpush1.bf16.msra.mxu0 0
    %227 = vmatprep.subr.bf16.mxu0 0
    %228 = vmatpush1.bf16.msra.mxu0 0
    %229 = vmatprep.subr.bf16.mxu0 0
    %230 = vmatpush1.bf16.msra.mxu0 0
    %231 = vmatprep.subr.bf16.mxu0 0
    %232 = vmatpush1.bf16.msra.mxu0 0
    %233 = vmatprep.subr.bf16.mxu0 0
    %234 = vmatpush1.bf16.msra.mxu0 %v214
    %235 = vmatprep.subr.bf16.mxu0 0
    %236 = vmatpush1.bf16.msra.mxu0 %v213
    %237 = vmatprep.subr.bf16.mxu0 0
    %238 = vmatpush2.bf16.msra.mxu0 0
    %239 = vmatprep.subr.bf16.mxu0 0
    %240 = vmatpush2.bf16.msra.mxu0 0
    %241 = vmatprep.subr.bf16.mxu0 0
    %242 = vmatpush2.bf16.msra.mxu0 0
    %243 = vmatprep.subr.bf16.mxu0 0
    %244 = vmatpush2.bf16.msra.mxu0 0
    %245 = vmatprep.subr.bf16.mxu0 0
    %246 = vmatpush2.bf16.msra.mxu0 0
    %247 = vmatprep.subr.bf16.mxu0 0
    %248 = vmatpush2.bf16.msra.mxu0 0
    %249 = vmatprep.subr.bf16.mxu0 0
    %250 = vmatpush2.bf16.msra.mxu0 0
    %251 = vmatprep.subr.bf16.mxu0 0
    %252 = vmatpush2.bf16.msra.mxu0 0
    %253 = vmatprep.mubr.bf16.mxu0 0
    %254 = vmatmul.mubr.bf16.gmra.mxu0 %v219
    %v255 = vpop.f32.mrf.mxu0
    %v256 = vadd.f32 0.0, %v255
    %v257 = vpop.f32.mrf.mxu0
    %v258 = vpop.f32.mrf.mxu0
    %v259 = vpop.f32.mrf.mxu0
    %260 = vdwg.mxu0
    %v261 = vadd.f32 %v203, %v256
    %v262 = vxor.u32 %v261, 2147483648
    %v263 = vmul.f32 %v262, 1.442695
    %v264 = vpow.pop %v263
    %v265 = vadd.f32 %v264, 1.0
    %v266 = vrcp.pop %v265
    %v267 = vmul.f32 1.0, %v266
    %v268 = vtanh.pop %v261
    %v271 = vunpack.c.l.s4 1983009808
    %v272 = vunpack.c.0.s8 %v271
    %v273 = vlaneseq
    %v274 = vshrl.u32 %v273, 7
    %v275 = vsub.s32 %v272, %v274
    %v276 = vrot.slane %v202, %v275
    %277 = vrot.lane.b32.xlu0 %v276, 32
    %v278 = vpop.permute.xlu0 %277
    %v280 = vmul.f32 %v267, %v278
    %282 = vrot.lane.b32.xlu0 %v268, 64
    %v283 = vpop.permute.xlu0 %282
    %v285 = vmul.f32 %v267, %v283
    %287 = vrot.lane.b32.xlu0 %v285, 32
    %v288 = vpop.permute.xlu0 %287
    %v290 = vadd.f32 %v280, %v288
    %v291 = vtanh.pop %v290
    %293 = vrot.lane.b32.xlu0 %v291, 64
    %v294 = vpop.permute.xlu0 %293
    %v296 = vmul.f32 %v267, %v294
    %v299 = vunpack.c.l.s4 1983009808
    %v300 = vunpack.c.0.s8 %v299
    %v301 = vlaneseq
    %v302 = vshrl.u32 %v301, 7
    %v303 = vsub.s32 %v300, %v302
    %v304 = vrot.slane %v296, %v303
    %305 = vrot.lane.b32.xlu0 %v304, 32
    %v306 = vpop.permute.xlu0 %305
    %vm308 = vcmask 254976
    %309 = vst.msk [vmem:[#allocation2] sm:$0x3] %vm308, %v306
    %v312 = vunpack.c.l.s4 1983009808
    %v313 = vunpack.c.0.s8 %v312
    %v314 = vlaneseq
    %v315 = vshrl.u32 %v314, 7
    %v316 = vsub.s32 %v313, %v315
    %v317 = vrot.slane %v290, %v316
    %318 = vrot.lane.b32.xlu0 %v317, 96
    %v319 = vpop.permute.xlu0 %318
    %321 = vst.msk [vmem:[#allocation3] sm:$0x3] %vm308, %v319
    %v322 = vpack.c.bf16 %v296, %v296
    %v325 = vunpack.c.l.s4 1966171168
    %v326 = vunpack.c.0.s8 %v325
    %v327 = vlaneseq
    %v328 = vshrl.u32 %v327, 7
    %v329 = vsub.s32 %v326, %v328
    %v330 = vrot.slane %v322, %v329
    %v332 = vunpack.c.l.s4 1966171168
    %v333 = vunpack.c.0.s8 %v332
    %v334 = vlaneseq
    %v335 = vshrl.u32 %v334, 7
    %v336 = vsub.s32 %v333, %v335
    %v337 = vrot.slane %v330, %v336
    %338 = vrot.lane.b32.xlu0 %v337, 32
    %v339 = vpop.permute.xlu0 %338
    %vm341 = vcmask 253952
    %342 = vst.msk [vmem:[%s4] sm:$0x1] %vm341, %v339
    %v343 = vld [vmem:[#allocation4] sm:$0x3]
    %v344 = vld [vmem:[#allocation5] sm:$0x3]
    %v345 = vunpack.c.l.bf16 %v200
    %v346 = vpack.c.bf16 %v343, %v343
    %v351 = vunpack.c.l.b16 %v194
    %v352 = vunpack.c.l.b16 %v195
    %v353 = vunpack.c.l.b16 %v196
    %v354 = vunpack.c.l.b16 %v197
    %v355 = vpack.c.b16 %v352, %v351
    %v356 = vpack.c.b16 %v354, %v353
    %v360 = vsel %vm217, %v346, 0
    %362 = vmatprep.subr.bf16.mxu0 0
    %363 = vmatpush1.bf16.msra.mxu0 0
    %364 = vmatprep.subr.bf16.mxu0 0
    %365 = vmatpush1.bf16.msra.mxu0 0
    %366 = vmatprep.subr.bf16.mxu0 0
    %367 = vmatpush1.bf16.msra.mxu0 0
    %368 = vmatprep.subr.bf16.mxu0 0
    %369 = vmatpush1.bf16.msra.mxu0 0
    %370 = vmatprep.subr.bf16.mxu0 0
    %371 = vmatpush1.bf16.msra.mxu0 0
    %372 = vmatprep.subr.bf16.mxu0 0
    %373 = vmatpush1.bf16.msra.mxu0 0
    %374 = vmatprep.subr.bf16.mxu0 0
    %375 = vmatpush1.bf16.msra.mxu0 %v356
    %376 = vmatprep.subr.bf16.mxu0 0
    %377 = vmatpush1.bf16.msra.mxu0 %v355
    %378 = vmatprep.subr.bf16.mxu0 0
    %379 = vmatpush2.bf16.msra.mxu0 0
    %380 = vmatprep.subr.bf16.mxu0 0
    %381 = vmatpush2.bf16.msra.mxu0 0
    %382 = vmatprep.subr.bf16.mxu0 0
    %383 = vmatpush2.bf16.msra.mxu0 0
    %384 = vmatprep.subr.bf16.mxu0 0
    %385 = vmatpush2.bf16.msra.mxu0 0
    %386 = vmatprep.subr.bf16.mxu0 0
    %387 = vmatpush2.bf16.msra.mxu0 0
    %388 = vmatprep.subr.bf16.mxu0 0
    %389 = vmatpush2.bf16.msra.mxu0 0
    %390 = vmatprep.subr.bf16.mxu0 0
    %391 = vmatpush2.bf16.msra.mxu0 0
    %392 = vmatprep.subr.bf16.mxu0 0
    %393 = vmatpush2.bf16.msra.mxu0 0
    %394 = vmatprep.mubr.bf16.mxu0 0
    %395 = vmatmul.mubr.bf16.gmra.mxu0 %v360
    %v396 = vpop.f32.mrf.mxu0
    %v397 = vadd.f32 0.0, %v396
    %v398 = vpop.f32.mrf.mxu0
    %v399 = vpop.f32.mrf.mxu0
    %v400 = vpop.f32.mrf.mxu0
    %401 = vdwg.mxu0
    %v402 = vadd.f32 %v345, %v397
    %v403 = vxor.u32 %v402, 2147483648
    %v404 = vmul.f32 %v403, 1.442695
    %v405 = vpow.pop %v404
    %v406 = vadd.f32 %v405, 1.0
    %v407 = vrcp.pop %v406
    %v408 = vmul.f32 1.0, %v407
    %v409 = vtanh.pop %v402
    %v412 = vunpack.c.l.s4 1983009808
    %v413 = vunpack.c.0.s8 %v412
    %v414 = vlaneseq
    %v415 = vshrl.u32 %v414, 7
    %v416 = vsub.s32 %v413, %v415
    %v417 = vrot.slane %v344, %v416
    %418 = vrot.lane.b32.xlu0 %v417, 32
    %v419 = vpop.permute.xlu0 %418
    %v421 = vmul.f32 %v408, %v419
    %423 = vrot.lane.b32.xlu0 %v409, 64
    %v424 = vpop.permute.xlu0 %423
    %v426 = vmul.f32 %v408, %v424
    %428 = vrot.lane.b32.xlu0 %v426, 32
    %v429 = vpop.permute.xlu0 %428
    %v431 = vadd.f32 %v421, %v429
    %v432 = vtanh.pop %v431
    %434 = vrot.lane.b32.xlu0 %v432, 64
    %v435 = vpop.permute.xlu0 %434
    %v437 = vmul.f32 %v408, %v435
    %v440 = vunpack.c.l.s4 1983009808
    %v441 = vunpack.c.0.s8 %v440
    %v442 = vlaneseq
    %v443 = vshrl.u32 %v442, 7
    %v444 = vsub.s32 %v441, %v443
    %v445 = vrot.slane %v437, %v444
    %446 = vrot.lane.b32.xlu0 %v445, 32
    %v447 = vpop.permute.xlu0 %446
    %449 = vst.msk [vmem:[#allocation4] sm:$0x3] %vm308, %v447
    %v452 = vunpack.c.l.s4 1983009808
    %v453 = vunpack.c.0.s8 %v452
    %v454 = vlaneseq
    %v455 = vshrl.u32 %v454, 7
    %v456 = vsub.s32 %v453, %v455
    %v457 = vrot.slane %v431, %v456
    %458 = vrot.lane.b32.xlu0 %v457, 96
    %v459 = vpop.permute.xlu0 %458
    %461 = vst.msk [vmem:[#allocation5] sm:$0x3] %vm308, %v459
    %v462 = vpack.c.bf16 %v437, %v437
    %v465 = vunpack.c.l.s4 1966171168
    %v466 = vunpack.c.0.s8 %v465
    %v467 = vlaneseq
    %v468 = vshrl.u32 %v467, 7
    %v469 = vsub.s32 %v466, %v468
    %v470 = vrot.slane %v462, %v469
    %v472 = vunpack.c.l.s4 1966171168
    %v473 = vunpack.c.0.s8 %v472
    %v474 = vlaneseq
    %v475 = vshrl.u32 %v474, 7
    %v476 = vsub.s32 %v473, %v475
    %v477 = vrot.slane %v470, %v476
    %478 = vrot.lane.b32.xlu0 %v477, 32
    %v479 = vpop.permute.xlu0 %478
    %s481 = scalar_lea.vmem %s177, 7
    %482 = vst.msk [vmem:[%s481] sm:$0x1] %vm341, %v479
    %s483 = scalar_lea.vmem [#allocation6], 1
    %v484 = vld [vmem:[%s483] sm:$0x1]
    %s485 = scalar_lea.vmem [#allocation7], 6
    %v486 = vld [vmem:[%s485] sm:$0x1]
    %v487 = vld [vmem:[#allocation2] sm:$0x3]
    %v488 = vld [vmem:[#allocation3] sm:$0x3]
    %v489 = vunpack.c.l.bf16 %v484
    %v490 = vpack.c.bf16 %v487, %v487
    %v492 = vsel %vm217, %v490, 0
    %494 = vmatprep.subr.bf16.mxu0 0
    %495 = vmatpush1.bf16.msra.mxu0 0
    %496 = vmatprep.subr.bf16.mxu0 0
    %497 = vmatpush1.bf16.msra.mxu0 0
    %498 = vmatprep.subr.bf16.mxu0 0
    %499 = vmatpush1.bf16.msra.mxu0 0
    %500 = vmatprep.subr.bf16.mxu0 0
    %501 = vmatpush1.bf16.msra.mxu0 0
    %502 = vmatprep.subr.bf16.mxu0 0
    %503 = vmatpush1.bf16.msra.mxu0 0
    %504 = vmatprep.subr.bf16.mxu0 0
    %505 = vmatpush1.bf16.msra.mxu0 0
    %506 = vmatprep.subr.bf16.mxu0 0
    %507 = vmatpush1.bf16.msra.mxu0 %v214
    %508 = vmatprep.subr.bf16.mxu0 0
    %509 = vmatpush1.bf16.msra.mxu0 %v213
    %510 = vmatprep.subr.bf16.mxu0 0
    %511 = vmatpush2.bf16.msra.mxu0 0
    %512 = vmatprep.subr.bf16.mxu0 0
    %513 = vmatpush2.bf16.msra.mxu0 0
    %514 = vmatprep.subr.bf16.mxu0 0
    %515 = vmatpush2.bf16.msra.mxu0 0
    %516 = vmatprep.subr.bf16.mxu0 0
    %517 = vmatpush2.bf16.msra.mxu0 0
    %518 = vmatprep.subr.bf16.mxu0 0
    %519 = vmatpush2.bf16.msra.mxu0 0
    %520 = vmatprep.subr.bf16.mxu0 0
    %521 = vmatpush2.bf16.msra.mxu0 0
    %522 = vmatprep.subr.bf16.mxu0 0
    %523 = vmatpush2.bf16.msra.mxu0 0
    %524 = vmatprep.subr.bf16.mxu0 0
    %525 = vmatpush2.bf16.msra.mxu0 0
    %526 = vmatprep.mubr.bf16.mxu0 0
    %527 = vmatmul.mubr.bf16.gmra.mxu0 %v492
    %v528 = vpop.f32.mrf.mxu0
    %v529 = vadd.f32 0.0, %v528
    %v530 = vpop.f32.mrf.mxu0
    %v531 = vpop.f32.mrf.mxu0
    %v532 = vpop.f32.mrf.mxu0
    %533 = vdwg.mxu0
    %v534 = vadd.f32 %v489, %v529
    %v535 = vxor.u32 %v534, 2147483648
    %v536 = vmul.f32 %v535, 1.442695
    %v537 = vpow.pop %v536
    %v538 = vadd.f32 %v537, 1.0
    %v539 = vrcp.pop %v538
    %v540 = vmul.f32 1.0, %v539
    %v541 = vtanh.pop %v534
    %v544 = vunpack.c.l.s4 1983009808
    %v545 = vunpack.c.0.s8 %v544
    %v546 = vlaneseq
    %v547 = vshrl.u32 %v546, 7
    %v548 = vsub.s32 %v545, %v547
    %v549 = vrot.slane %v488, %v548
    %550 = vrot.lane.b32.xlu0 %v549, 32
    %v551 = vpop.permute.xlu0 %550
    %v553 = vmul.f32 %v540, %v551
    %555 = vrot.lane.b32.xlu0 %v541, 64
    %v556 = vpop.permute.xlu0 %555
    %v558 = vmul.f32 %v540, %v556
    %560 = vrot.lane.b32.xlu0 %v558, 32
    %v561 = vpop.permute.xlu0 %560
    %v563 = vadd.f32 %v553, %v561
    %v564 = vtanh.pop %v563
    %566 = vrot.lane.b32.xlu0 %v564, 64
    %v567 = vpop.permute.xlu0 %566
    %v569 = vmul.f32 %v540, %v567
    %v572 = vunpack.c.l.s4 1983009808
    %v573 = vunpack.c.0.s8 %v572
    %v574 = vlaneseq
    %v575 = vshrl.u32 %v574, 7
    %v576 = vsub.s32 %v573, %v575
    %v577 = vrot.slane %v569, %v576
    %578 = vrot.lane.b32.xlu0 %v577, 32
    %v579 = vpop.permute.xlu0 %578
    %581 = vst.msk [vmem:[#allocation2] sm:$0x3] %vm308, %v579
    %v584 = vunpack.c.l.s4 1983009808
    %v585 = vunpack.c.0.s8 %v584
    %v586 = vlaneseq
    %v587 = vshrl.u32 %v586, 7
    %v588 = vsub.s32 %v585, %v587
    %v589 = vrot.slane %v563, %v588
    %590 = vrot.lane.b32.xlu0 %v589, 96
    %v591 = vpop.permute.xlu0 %590
    %593 = vst.msk [vmem:[#allocation3] sm:$0x3] %vm308, %v591
    %v594 = vpack.c.bf16 %v569, %v569
    %v597 = vunpack.c.l.s4 1966171168
    %v598 = vunpack.c.0.s8 %v597
    %v599 = vlaneseq
    %v600 = vshrl.u32 %v599, 7
    %v601 = vsub.s32 %v598, %v600
    %v602 = vrot.slane %v594, %v601
    %v604 = vunpack.c.l.s4 1966171168
    %v605 = vunpack.c.0.s8 %v604
    %v606 = vlaneseq
    %v607 = vshrl.u32 %v606, 7
    %v608 = vsub.s32 %v605, %v607
    %v609 = vrot.slane %v602, %v608
    %610 = vrot.lane.b32.xlu0 %v609, 32
    %v611 = vpop.permute.xlu0 %610
    %s613 = scalar_lea.vmem %s4, 1
    %614 = vst.msk [vmem:[%s613] sm:$0x1] %vm341, %v611
    %v615 = vld [vmem:[#allocation4] sm:$0x3]
    %v616 = vld [vmem:[#allocation5] sm:$0x3]
    %v617 = vunpack.c.l.bf16 %v486
    %v618 = vpack.c.bf16 %v615, %v615
    %v620 = vsel %vm217, %v618, 0
    %622 = vmatprep.subr.bf16.mxu0 0
    %623 = vmatpush1.bf16.msra.mxu0 0
    %624 = vmatprep.subr.bf16.mxu0 0
    %625 = vmatpush1.bf16.msra.mxu0 0
    %626 = vmatprep.subr.bf16.mxu0 0
    %627 = vmatpush1.bf16.msra.mxu0 0
    %628 = vmatprep.subr.bf16.mxu0 0
    %629 = vmatpush1.bf16.msra.mxu0 0
    %630 = vmatprep.subr.bf16.mxu0 0
    %631 = vmatpush1.bf16.msra.mxu0 0
    %632 = vmatprep.subr.bf16.mxu0 0
    %633 = vmatpush1.bf16.msra.mxu0 0
    %634 = vmatprep.subr.bf16.mxu0 0
    %635 = vmatpush1.bf16.msra.mxu0 %v356
    %636 = vmatprep.subr.bf16.mxu0 0
    %637 = vmatpush1.bf16.msra.mxu0 %v355
    %638 = vmatprep.subr.bf16.mxu0 0
    %639 = vmatpush2.bf16.msra.mxu0 0
    %640 = vmatprep.subr.bf16.mxu0 0
    %641 = vmatpush2.bf16.msra.mxu0 0
    %642 = vmatprep.subr.bf16.mxu0 0
    %643 = vmatpush2.bf16.msra.mxu0 0
    %644 = vmatprep.subr.bf16.mxu0 0
    %645 = vmatpush2.bf16.msra.mxu0 0
    %646 = vmatprep.subr.bf16.mxu0 0
    %647 = vmatpush2.bf16.msra.mxu0 0
    %648 = vmatprep.subr.bf16.mxu0 0
    %649 = vmatpush2.bf16.msra.mxu0 0
    %650 = vmatprep.subr.bf16.mxu0 0
    %651 = vmatpush2.bf16.msra.mxu0 0
    %652 = vmatprep.subr.bf16.mxu0 0
    %653 = vmatpush2.bf16.msra.mxu0 0
    %654 = vmatprep.mubr.bf16.mxu0 0
    %655 = vmatmul.mubr.bf16.gmra.mxu0 %v620
    %v656 = vpop.f32.mrf.mxu0
    %v657 = vadd.f32 0.0, %v656
    %v658 = vpop.f32.mrf.mxu0
    %v659 = vpop.f32.mrf.mxu0
    %v660 = vpop.f32.mrf.mxu0
    %661 = vdwg.mxu0
    %v662 = vadd.f32 %v617, %v657
    %v663 = vxor.u32 %v662, 2147483648
    %v664 = vmul.f32 %v663, 1.442695
    %v665 = vpow.pop %v664
    %v666 = vadd.f32 %v665, 1.0
    %v667 = vrcp.pop %v666
    %v668 = vmul.f32 1.0, %v667
    %v669 = vtanh.pop %v662
    %v672 = vunpack.c.l.s4 1983009808
    %v673 = vunpack.c.0.s8 %v672
    %v674 = vlaneseq
    %v675 = vshrl.u32 %v674, 7
    %v676 = vsub.s32 %v673, %v675
    %v677 = vrot.slane %v616, %v676
    %678 = vrot.lane.b32.xlu0 %v677, 32
    %v679 = vpop.permute.xlu0 %678
    %v681 = vmul.f32 %v668, %v679
    %683 = vrot.lane.b32.xlu0 %v669, 64
    %v684 = vpop.permute.xlu0 %683
    %v686 = vmul.f32 %v668, %v684
    %688 = vrot.lane.b32.xlu0 %v686, 32
    %v689 = vpop.permute.xlu0 %688
    %v691 = vadd.f32 %v681, %v689
    %v692 = vtanh.pop %v691
    %694 = vrot.lane.b32.xlu0 %v692, 64
    %v695 = vpop.permute.xlu0 %694
    %v697 = vmul.f32 %v668, %v695
    %v700 = vunpack.c.l.s4 1983009808
    %v701 = vunpack.c.0.s8 %v700
    %v702 = vlaneseq
    %v703 = vshrl.u32 %v702, 7
    %v704 = vsub.s32 %v701, %v703
    %v705 = vrot.slane %v697, %v704
    %706 = vrot.lane.b32.xlu0 %v705, 32
    %v707 = vpop.permute.xlu0 %706
    %709 = vst.msk [vmem:[#allocation4] sm:$0x3] %vm308, %v707
    %v712 = vunpack.c.l.s4 1983009808
    %v713 = vunpack.c.0.s8 %v712
    %v714 = vlaneseq
    %v715 = vshrl.u32 %v714, 7
    %v716 = vsub.s32 %v713, %v715
    %v717 = vrot.slane %v691, %v716
    %718 = vrot.lane.b32.xlu0 %v717, 96
    %v719 = vpop.permute.xlu0 %718
    %721 = vst.msk [vmem:[#allocation5] sm:$0x3] %vm308, %v719
    %v722 = vpack.c.bf16 %v697, %v697
    %v725 = vunpack.c.l.s4 1966171168
    %v726 = vunpack.c.0.s8 %v725
    %v727 = vlaneseq
    %v728 = vshrl.u32 %v727, 7
    %v729 = vsub.s32 %v726, %v728
    %v730 = vrot.slane %v722, %v729
    %v732 = vunpack.c.l.s4 1966171168
    %v733 = vunpack.c.0.s8 %v732
    %v734 = vlaneseq
    %v735 = vshrl.u32 %v734, 7
    %v736 = vsub.s32 %v733, %v735
    %v737 = vrot.slane %v730, %v736
    %738 = vrot.lane.b32.xlu0 %v737, 32
    %v739 = vpop.permute.xlu0 %738
    %s741 = scalar_lea.vmem %s177, 6
    %742 = vst.msk [vmem:[%s741] sm:$0x1] %vm341, %v739
    %s743 = scalar_lea.vmem [#allocation6], 2
    %v744 = vld [vmem:[%s743] sm:$0x1]
    %s745 = scalar_lea.vmem [#allocation7], 5
    %v746 = vld [vmem:[%s745] sm:$0x1]
    %v747 = vld [vmem:[#allocation2] sm:$0x3]
    %v748 = vld [vmem:[#allocation3] sm:$0x3]
    %v749 = vunpack.c.l.bf16 %v744
    %v750 = vpack.c.bf16 %v747, %v747
    %v752 = vsel %vm217, %v750, 0
    %754 = vmatprep.subr.bf16.mxu0 0
    %755 = vmatpush1.bf16.msra.mxu0 0
    %756 = vmatprep.subr.bf16.mxu0 0
    %757 = vmatpush1.bf16.msra.mxu0 0
    %758 = vmatprep.subr.bf16.mxu0 0
    %759 = vmatpush1.bf16.msra.mxu0 0
    %760 = vmatprep.subr.bf16.mxu0 0
    %761 = vmatpush1.bf16.msra.mxu0 0
    %762 = vmatprep.subr.bf16.mxu0 0
    %763 = vmatpush1.bf16.msra.mxu0 0
    %764 = vmatprep.subr.bf16.mxu0 0
    %765 = vmatpush1.bf16.msra.mxu0 0
    %766 = vmatprep.subr.bf16.mxu0 0
    %767 = vmatpush1.bf16.msra.mxu0 %v214
    %768 = vmatprep.subr.bf16.mxu0 0
    %769 = vmatpush1.bf16.msra.mxu0 %v213
    %770 = vmatprep.subr.bf16.mxu0 0
    %771 = vmatpush2.bf16.msra.mxu0 0
    %772 = vmatprep.subr.bf16.mxu0 0
    %773 = vmatpush2.bf16.msra.mxu0 0
    %774 = vmatprep.subr.bf16.mxu0 0
    %775 = vmatpush2.bf16.msra.mxu0 0
    %776 = vmatprep.subr.bf16.mxu0 0
    %777 = vmatpush2.bf16.msra.mxu0 0
    %778 = vmatprep.subr.bf16.mxu0 0
    %779 = vmatpush2.bf16.msra.mxu0 0
    %780 = vmatprep.subr.bf16.mxu0 0
    %781 = vmatpush2.bf16.msra.mxu0 0
    %782 = vmatprep.subr.bf16.mxu0 0
    %783 = vmatpush2.bf16.msra.mxu0 0
    %784 = vmatprep.subr.bf16.mxu0 0
    %785 = vmatpush2.bf16.msra.mxu0 0
    %786 = vmatprep.mubr.bf16.mxu0 0
    %787 = vmatmul.mubr.bf16.gmra.mxu0 %v752
    %v788 = vpop.f32.mrf.mxu0
    %v789 = vadd.f32 0.0, %v788
    %v790 = vpop.f32.mrf.mxu0
    %v791 = vpop.f32.mrf.mxu0
    %v792 = vpop.f32.mrf.mxu0
    %793 = vdwg.mxu0
    %v794 = vadd.f32 %v749, %v789
    %v795 = vxor.u32 %v794, 2147483648
    %v796 = vmul.f32 %v795, 1.442695
    %v797 = vpow.pop %v796
    %v798 = vadd.f32 %v797, 1.0
    %v799 = vrcp.pop %v798
    %v800 = vmul.f32 1.0, %v799
    %v801 = vtanh.pop %v794
    %v804 = vunpack.c.l.s4 1983009808
    %v805 = vunpack.c.0.s8 %v804
    %v806 = vlaneseq
    %v807 = vshrl.u32 %v806, 7
    %v808 = vsub.s32 %v805, %v807
    %v809 = vrot.slane %v748, %v808
    %810 = vrot.lane.b32.xlu0 %v809, 32
    %v811 = vpop.permute.xlu0 %810
    %v813 = vmul.f32 %v800, %v811
    %815 = vrot.lane.b32.xlu0 %v801, 64
    %v816 = vpop.permute.xlu0 %815
    %v818 = vmul.f32 %v800, %v816
    %820 = vrot.lane.b32.xlu0 %v818, 32
    %v821 = vpop.permute.xlu0 %820
    %v823 = vadd.f32 %v813, %v821
    %v824 = vtanh.pop %v823
    %826 = vrot.lane.b32.xlu0 %v824, 64
    %v827 = vpop.permute.xlu0 %826
    %v829 = vmul.f32 %v800, %v827
    %v832 = vunpack.c.l.s4 1983009808
    %v833 = vunpack.c.0.s8 %v832
    %v834 = vlaneseq
    %v835 = vshrl.u32 %v834, 7
    %v836 = vsub.s32 %v833, %v835
    %v837 = vrot.slane %v829, %v836
    %838 = vrot.lane.b32.xlu0 %v837, 32
    %v839 = vpop.permute.xlu0 %838
    %841 = vst.msk [vmem:[#allocation2] sm:$0x3] %vm308, %v839
    %v844 = vunpack.c.l.s4 1983009808
    %v845 = vunpack.c.0.s8 %v844
    %v846 = vlaneseq
    %v847 = vshrl.u32 %v846, 7
    %v848 = vsub.s32 %v845, %v847
    %v849 = vrot.slane %v823, %v848
    %850 = vrot.lane.b32.xlu0 %v849, 96
    %v851 = vpop.permute.xlu0 %850
    %853 = vst.msk [vmem:[#allocation3] sm:$0x3] %vm308, %v851
    %v854 = vpack.c.bf16 %v829, %v829
    %v857 = vunpack.c.l.s4 1966171168
    %v858 = vunpack.c.0.s8 %v857
    %v859 = vlaneseq
    %v860 = vshrl.u32 %v859, 7
    %v861 = vsub.s32 %v858, %v860
    %v862 = vrot.slane %v854, %v861
    %v864 = vunpack.c.l.s4 1966171168
    %v865 = vunpack.c.0.s8 %v864
    %v866 = vlaneseq
    %v867 = vshrl.u32 %v866, 7
    %v868 = vsub.s32 %v865, %v867
    %v869 = vrot.slane %v862, %v868
    %870 = vrot.lane.b32.xlu0 %v869, 32
    %v871 = vpop.permute.xlu0 %870
    %s873 = scalar_lea.vmem %s4, 2
    %874 = vst.msk [vmem:[%s873] sm:$0x1] %vm341, %v871
    %v875 = vld [vmem:[#allocation4] sm:$0x3]
    %v876 = vld [vmem:[#allocation5] sm:$0x3]
    %v877 = vunpack.c.l.bf16 %v746
    %v878 = vpack.c.bf16 %v875, %v875
    %v880 = vsel %vm217, %v878, 0
    %882 = vmatprep.subr.bf16.mxu0 0
    %883 = vmatpush1.bf16.msra.mxu0 0
    %884 = vmatprep.subr.bf16.mxu0 0
    %885 = vmatpush1.bf16.msra.mxu0 0
    %886 = vmatprep.subr.bf16.mxu0 0
    %887 = vmatpush1.bf16.msra.mxu0 0
    %888 = vmatprep.subr.bf16.mxu0 0
    %889 = vmatpush1.bf16.msra.mxu0 0
    %890 = vmatprep.subr.bf16.mxu0 0
    %891 = vmatpush1.bf16.msra.mxu0 0
    %892 = vmatprep.subr.bf16.mxu0 0
    %893 = vmatpush1.bf16.msra.mxu0 0
    %894 = vmatprep.subr.bf16.mxu0 0
    %895 = vmatpush1.bf16.msra.mxu0 %v356
    %896 = vmatprep.subr.bf16.mxu0 0
    %897 = vmatpush1.bf16.msra.mxu0 %v355
    %898 = vmatprep.subr.bf16.mxu0 0
    %899 = vmatpush2.bf16.msra.mxu0 0
    %900 = vmatprep.subr.bf16.mxu0 0
    %901 = vmatpush2.bf16.msra.mxu0 0
    %902 = vmatprep.subr.bf16.mxu0 0
    %903 = vmatpush2.bf16.msra.mxu0 0
    %904 = vmatprep.subr.bf16.mxu0 0
    %905 = vmatpush2.bf16.msra.mxu0 0
    %906 = vmatprep.subr.bf16.mxu0 0
    %907 = vmatpush2.bf16.msra.mxu0 0
    %908 = vmatprep.subr.bf16.mxu0 0
    %909 = vmatpush2.bf16.msra.mxu0 0
    %910 = vmatprep.subr.bf16.mxu0 0
    %911 = vmatpush2.bf16.msra.mxu0 0
    %912 = vmatprep.subr.bf16.mxu0 0
    %913 = vmatpush2.bf16.msra.mxu0 0
    %914 = vmatprep.mubr.bf16.mxu0 0
    %915 = vmatmul.mubr.bf16.gmra.mxu0 %v880
    %v916 = vpop.f32.mrf.mxu0
    %v917 = vadd.f32 0.0, %v916
    %v918 = vpop.f32.mrf.mxu0
    %v919 = vpop.f32.mrf.mxu0
    %v920 = vpop.f32.mrf.mxu0
    %921 = vdwg.mxu0
    %v922 = vadd.f32 %v877, %v917
    %v923 = vxor.u32 %v922, 2147483648
    %v924 = vmul.f32 %v923, 1.442695
    %v925 = vpow.pop %v924
    %v926 = vadd.f32 %v925, 1.0
    %v927 = vrcp.pop %v926
    %v928 = vmul.f32 1.0, %v927
    %v929 = vtanh.pop %v922
    %v932 = vunpack.c.l.s4 1983009808
    %v933 = vunpack.c.0.s8 %v932
    %v934 = vlaneseq
    %v935 = vshrl.u32 %v934, 7
    %v936 = vsub.s32 %v933, %v935
    %v937 = vrot.slane %v876, %v936
    %938 = vrot.lane.b32.xlu0 %v937, 32
    %v939 = vpop.permute.xlu0 %938
    %v941 = vmul.f32 %v928, %v939
    %943 = vrot.lane.b32.xlu0 %v929, 64
    %v944 = vpop.permute.xlu0 %943
    %v946 = vmul.f32 %v928, %v944
    %948 = vrot.lane.b32.xlu0 %v946, 32
    %v949 = vpop.permute.xlu0 %948
    %v951 = vadd.f32 %v941, %v949
    %v952 = vtanh.pop %v951
    %954 = vrot.lane.b32.xlu0 %v952, 64
    %v955 = vpop.permute.xlu0 %954
    %v957 = vmul.f32 %v928, %v955
    %v960 = vunpack.c.l.s4 1983009808
    %v961 = vunpack.c.0.s8 %v960
    %v962 = vlaneseq
    %v963 = vshrl.u32 %v962, 7
    %v964 = vsub.s32 %v961, %v963
    %v965 = vrot.slane %v957, %v964
    %966 = vrot.lane.b32.xlu0 %v965, 32
    %v967 = vpop.permute.xlu0 %966
    %969 = vst.msk [vmem:[#allocation4] sm:$0x3] %vm308, %v967
    %v972 = vunpack.c.l.s4 1983009808
    %v973 = vunpack.c.0.s8 %v972
    %v974 = vlaneseq
    %v975 = vshrl.u32 %v974, 7
    %v976 = vsub.s32 %v973, %v975
    %v977 = vrot.slane %v951, %v976
    %978 = vrot.lane.b32.xlu0 %v977, 96
    %v979 = vpop.permute.xlu0 %978
    %981 = vst.msk [vmem:[#allocation5] sm:$0x3] %vm308, %v979
    %v982 = vpack.c.bf16 %v957, %v957
    %v985 = vunpack.c.l.s4 1966171168
    %v986 = vunpack.c.0.s8 %v985
    %v987 = vlaneseq
    %v988 = vshrl.u32 %v987, 7
    %v989 = vsub.s32 %v986, %v988
    %v990 = vrot.slane %v982, %v989
    %v992 = vunpack.c.l.s4 1966171168
    %v993 = vunpack.c.0.s8 %v992
    %v994 = vlaneseq
    %v995 = vshrl.u32 %v994, 7
    %v996 = vsub.s32 %v993, %v995
    %v997 = vrot.slane %v990, %v996
    %998 = vrot.lane.b32.xlu0 %v997, 32
    %v999 = vpop.permute.xlu0 %998
    %s1001 = scalar_lea.vmem %s177, 5
    %1002 = vst.msk [vmem:[%s1001] sm:$0x1] %vm341, %v999
    %s1003 = scalar_lea.vmem [#allocation6], 3
    %v1004 = vld [vmem:[%s1003] sm:$0x1]
    %s1005 = scalar_lea.vmem [#allocation7], 4
    %v1006 = vld [vmem:[%s1005] sm:$0x1]
    %v1007 = vld [vmem:[#allocation2] sm:$0x3]
    %v1008 = vld [vmem:[#allocation3] sm:$0x3]
    %v1009 = vunpack.c.l.bf16 %v1004
    %v1010 = vpack.c.bf16 %v1007, %v1007
    %v1012 = vsel %vm217, %v1010, 0
    %1014 = vmatprep.subr.bf16.mxu0 0
    %1015 = vmatpush1.bf16.msra.mxu0 0
    %1016 = vmatprep.subr.bf16.mxu0 0
    %1017 = vmatpush1.bf16.msra.mxu0 0
    %1018 = vmatprep.subr.bf16.mxu0 0
    %1019 = vmatpush1.bf16.msra.mxu0 0
    %1020 = vmatprep.subr.bf16.mxu0 0
    %1021 = vmatpush1.bf16.msra.mxu0 0
    %1022 = vmatprep.subr.bf16.mxu0 0
    %1023 = vmatpush1.bf16.msra.mxu0 0
    %1024 = vmatprep.subr.bf16.mxu0 0
    %1025 = vmatpush1.bf16.msra.mxu0 0
    %1026 = vmatprep.subr.bf16.mxu0 0
    %1027 = vmatpush1.bf16.msra.mxu0 %v214
    %1028 = vmatprep.subr.bf16.mxu0 0
    %1029 = vmatpush1.bf16.msra.mxu0 %v213
    %1030 = vmatprep.subr.bf16.mxu0 0
    %1031 = vmatpush2.bf16.msra.mxu0 0
    %1032 = vmatprep.subr.bf16.mxu0 0
    %1033 = vmatpush2.bf16.msra.mxu0 0
    %1034 = vmatprep.subr.bf16.mxu0 0
    %1035 = vmatpush2.bf16.msra.mxu0 0
    %1036 = vmatprep.subr.bf16.mxu0 0
    %1037 = vmatpush2.bf16.msra.mxu0 0
    %1038 = vmatprep.subr.bf16.mxu0 0
    %1039 = vmatpush2.bf16.msra.mxu0 0
    %1040 = vmatprep.subr.bf16.mxu0 0
    %1041 = vmatpush2.bf16.msra.mxu0 0
    %1042 = vmatprep.subr.bf16.mxu0 0
    %1043 = vmatpush2.bf16.msra.mxu0 0
    %1044 = vmatprep.subr.bf16.mxu0 0
    %1045 = vmatpush2.bf16.msra.mxu0 0
    %1046 = vmatprep.mubr.bf16.mxu0 0
    %1047 = vmatmul.mubr.bf16.gmra.mxu0 %v1012
    %v1048 = vpop.f32.mrf.mxu0
    %v1049 = vadd.f32 0.0, %v1048
    %v1050 = vpop.f32.mrf.mxu0
    %v1051 = vpop.f32.mrf.mxu0
    %v1052 = vpop.f32.mrf.mxu0
    %1053 = vdwg.mxu0
    %v1054 = vadd.f32 %v1009, %v1049
    %v1055 = vxor.u32 %v1054, 2147483648
    %v1056 = vmul.f32 %v1055, 1.442695
    %v1057 = vpow.pop %v1056
    %v1058 = vadd.f32 %v1057, 1.0
    %v1059 = vrcp.pop %v1058
    %v1060 = vmul.f32 1.0, %v1059
    %v1061 = vtanh.pop %v1054
    %v1064 = vunpack.c.l.s4 1983009808
    %v1065 = vunpack.c.0.s8 %v1064
    %v1066 = vlaneseq
    %v1067 = vshrl.u32 %v1066, 7
    %v1068 = vsub.s32 %v1065, %v1067
    %v1069 = vrot.slane %v1008, %v1068
    %1070 = vrot.lane.b32.xlu0 %v1069, 32
    %v1071 = vpop.permute.xlu0 %1070
    %v1073 = vmul.f32 %v1060, %v1071
    %1075 = vrot.lane.b32.xlu0 %v1061, 64
    %v1076 = vpop.permute.xlu0 %1075
    %v1078 = vmul.f32 %v1060, %v1076
    %1080 = vrot.lane.b32.xlu0 %v1078, 32
    %v1081 = vpop.permute.xlu0 %1080
    %v1083 = vadd.f32 %v1073, %v1081
    %v1084 = vtanh.pop %v1083
    %1086 = vrot.lane.b32.xlu0 %v1084, 64
    %v1087 = vpop.permute.xlu0 %1086
    %v1089 = vmul.f32 %v1060, %v1087
    %v1092 = vunpack.c.l.s4 1983009808
    %v1093 = vunpack.c.0.s8 %v1092
    %v1094 = vlaneseq
    %v1095 = vshrl.u32 %v1094, 7
    %v1096 = vsub.s32 %v1093, %v1095
    %v1097 = vrot.slane %v1089, %v1096
    %1098 = vrot.lane.b32.xlu0 %v1097, 32
    %v1099 = vpop.permute.xlu0 %1098
    %1101 = vst.msk [vmem:[#allocation2] sm:$0x3] %vm308, %v1099
    %v1104 = vunpack.c.l.s4 1983009808
    %v1105 = vunpack.c.0.s8 %v1104
    %v1106 = vlaneseq
    %v1107 = vshrl.u32 %v1106, 7
    %v1108 = vsub.s32 %v1105, %v1107
    %v1109 = vrot.slane %v1083, %v1108
    %1110 = vrot.lane.b32.xlu0 %v1109, 96
    %v1111 = vpop.permute.xlu0 %1110
    %1113 = vst.msk [vmem:[#allocation3] sm:$0x3] %vm308, %v1111
    %v1114 = vpack.c.bf16 %v1089, %v1089
    %v1117 = vunpack.c.l.s4 1966171168
    %v1118 = vunpack.c.0.s8 %v1117
    %v1119 = vlaneseq
    %v1120 = vshrl.u32 %v1119, 7
    %v1121 = vsub.s32 %v1118, %v1120
    %v1122 = vrot.slane %v1114, %v1121
    %v1124 = vunpack.c.l.s4 1966171168
    %v1125 = vunpack.c.0.s8 %v1124
    %v1126 = vlaneseq
    %v1127 = vshrl.u32 %v1126, 7
    %v1128 = vsub.s32 %v1125, %v1127
    %v1129 = vrot.slane %v1122, %v1128
    %1130 = vrot.lane.b32.xlu0 %v1129, 32
    %v1131 = vpop.permute.xlu0 %1130
    %s1133 = scalar_lea.vmem %s4, 3
    %1134 = vst.msk [vmem:[%s1133] sm:$0x1] %vm341, %v1131
    %v1135 = vld [vmem:[#allocation4] sm:$0x3]
    %v1136 = vld [vmem:[#allocation5] sm:$0x3]
    %v1137 = vunpack.c.l.bf16 %v1006
    %v1138 = vpack.c.bf16 %v1135, %v1135
    %v1140 = vsel %vm217, %v1138, 0
    %1142 = vmatprep.subr.bf16.mxu0 0
    %1143 = vmatpush1.bf16.msra.mxu0 0
    %1144 = vmatprep.subr.bf16.mxu0 0
    %1145 = vmatpush1.bf16.msra.mxu0 0
    %1146 = vmatprep.subr.bf16.mxu0 0
    %1147 = vmatpush1.bf16.msra.mxu0 0
    %1148 = vmatprep.subr.bf16.mxu0 0
    %1149 = vmatpush1.bf16.msra.mxu0 0
    %1150 = vmatprep.subr.bf16.mxu0 0
    %1151 = vmatpush1.bf16.msra.mxu0 0
    %1152 = vmatprep.subr.bf16.mxu0 0
    %1153 = vmatpush1.bf16.msra.mxu0 0
    %1154 = vmatprep.subr.bf16.mxu0 0
    %1155 = vmatpush1.bf16.msra.mxu0 %v356
    %1156 = vmatprep.subr.bf16.mxu0 0
    %1157 = vmatpush1.bf16.msra.mxu0 %v355
    %1158 = vmatprep.subr.bf16.mxu0 0
    %1159 = vmatpush2.bf16.msra.mxu0 0
    %1160 = vmatprep.subr.bf16.mxu0 0
    %1161 = vmatpush2.bf16.msra.mxu0 0
    %1162 = vmatprep.subr.bf16.mxu0 0
    %1163 = vmatpush2.bf16.msra.mxu0 0
    %1164 = vmatprep.subr.bf16.mxu0 0
    %1165 = vmatpush2.bf16.msra.mxu0 0
    %1166 = vmatprep.subr.bf16.mxu0 0
    %1167 = vmatpush2.bf16.msra.mxu0 0
    %1168 = vmatprep.subr.bf16.mxu0 0
    %1169 = vmatpush2.bf16.msra.mxu0 0
    %1170 = vmatprep.subr.bf16.mxu0 0
    %1171 = vmatpush2.bf16.msra.mxu0 0
    %1172 = vmatprep.subr.bf16.mxu0 0
    %1173 = vmatpush2.bf16.msra.mxu0 0
    %1174 = vmatprep.mubr.bf16.mxu0 0
    %1175 = vmatmul.mubr.bf16.gmra.mxu0 %v1140
    %v1176 = vpop.f32.mrf.mxu0
    %v1177 = vadd.f32 0.0, %v1176
    %v1178 = vpop.f32.mrf.mxu0
    %v1179 = vpop.f32.mrf.mxu0
    %v1180 = vpop.f32.mrf.mxu0
    %1181 = vdwg.mxu0
    %v1182 = vadd.f32 %v1137, %v1177
    %v1183 = vxor.u32 %v1182, 2147483648
    %v1184 = vmul.f32 %v1183, 1.442695
    %v1185 = vpow.pop %v1184
    %v1186 = vadd.f32 %v1185, 1.0
    %v1187 = vrcp.pop %v1186
    %v1188 = vmul.f32 1.0, %v1187
    %v1189 = vtanh.pop %v1182
    %v1192 = vunpack.c.l.s4 1983009808
    %v1193 = vunpack.c.0.s8 %v1192
    %v1194 = vlaneseq
    %v1195 = vshrl.u32 %v1194, 7
    %v1196 = vsub.s32 %v1193, %v1195
    %v1197 = vrot.slane %v1136, %v1196
    %1198 = vrot.lane.b32.xlu0 %v1197, 32
    %v1199 = vpop.permute.xlu0 %1198
    %v1201 = vmul.f32 %v1188, %v1199
    %1203 = vrot.lane.b32.xlu0 %v1189, 64
    %v1204 = vpop.permute.xlu0 %1203
    %v1206 = vmul.f32 %v1188, %v1204
    %1208 = vrot.lane.b32.xlu0 %v1206, 32
    %v1209 = vpop.permute.xlu0 %1208
    %v1211 = vadd.f32 %v1201, %v1209
    %v1212 = vtanh.pop %v1211
    %1214 = vrot.lane.b32.xlu0 %v1212, 64
    %v1215 = vpop.permute.xlu0 %1214
    %v1217 = vmul.f32 %v1188, %v1215
    %v1220 = vunpack.c.l.s4 1983009808
    %v1221 = vunpack.c.0.s8 %v1220
    %v1222 = vlaneseq
    %v1223 = vshrl.u32 %v1222, 7
    %v1224 = vsub.s32 %v1221, %v1223
    %v1225 = vrot.slane %v1217, %v1224
    %1226 = vrot.lane.b32.xlu0 %v1225, 32
    %v1227 = vpop.permute.xlu0 %1226
    %1229 = vst.msk [vmem:[#allocation4] sm:$0x3] %vm308, %v1227
    %v1232 = vunpack.c.l.s4 1983009808
    %v1233 = vunpack.c.0.s8 %v1232
    %v1234 = vlaneseq
    %v1235 = vshrl.u32 %v1234, 7
    %v1236 = vsub.s32 %v1233, %v1235
    %v1237 = vrot.slane %v1211, %v1236
    %1238 = vrot.lane.b32.xlu0 %v1237, 96
    %v1239 = vpop.permute.xlu0 %1238
    %1241 = vst.msk [vmem:[#allocation5] sm:$0x3] %vm308, %v1239
    %v1242 = vpack.c.bf16 %v1217, %v1217
    %v1245 = vunpack.c.l.s4 1966171168
    %v1246 = vunpack.c.0.s8 %v1245
    %v1247 = vlaneseq
    %v1248 = vshrl.u32 %v1247, 7
    %v1249 = vsub.s32 %v1246, %v1248
    %v1250 = vrot.slane %v1242, %v1249
    %v1252 = vunpack.c.l.s4 1966171168
    %v1253 = vunpack.c.0.s8 %v1252
    %v1254 = vlaneseq
    %v1255 = vshrl.u32 %v1254, 7
    %v1256 = vsub.s32 %v1253, %v1255
    %v1257 = vrot.slane %v1250, %v1256
    %1258 = vrot.lane.b32.xlu0 %v1257, 32
    %v1259 = vpop.permute.xlu0 %1258
    %s1261 = scalar_lea.vmem %s177, 4
    %1262 = vst.msk [vmem:[%s1261] sm:$0x1] %vm341, %v1259
    %s1263 = scalar_lea.vmem [#allocation6], 4
    %v1264 = vld [vmem:[%s1263] sm:$0x1]
    %s1265 = scalar_lea.vmem [#allocation7], 3
    %v1266 = vld [vmem:[%s1265] sm:$0x1]
    %v1267 = vld [vmem:[#allocation2] sm:$0x3]
    %v1268 = vld [vmem:[#allocation3] sm:$0x3]
    %v1269 = vunpack.c.l.bf16 %v1264
    %v1270 = vpack.c.bf16 %v1267, %v1267
    %v1272 = vsel %vm217, %v1270, 0
    %1274 = vmatprep.subr.bf16.mxu0 0
    %1275 = vmatpush1.bf16.msra.mxu0 0
    %1276 = vmatprep.subr.bf16.mxu0 0
    %1277 = vmatpush1.bf16.msra.mxu0 0
    %1278 = vmatprep.subr.bf16.mxu0 0
    %1279 = vmatpush1.bf16.msra.mxu0 0
    %1280 = vmatprep.subr.bf16.mxu0 0
    %1281 = vmatpush1.bf16.msra.mxu0 0
    %1282 = vmatprep.subr.bf16.mxu0 0
    %1283 = vmatpush1.bf16.msra.mxu0 0
    %1284 = vmatprep.subr.bf16.mxu0 0
    %1285 = vmatpush1.bf16.msra.mxu0 0
    %1286 = vmatprep.subr.bf16.mxu0 0
    %1287 = vmatpush1.bf16.msra.mxu0 %v214
    %1288 = vmatprep.subr.bf16.mxu0 0
    %1289 = vmatpush1.bf16.msra.mxu0 %v213
    %1290 = vmatprep.subr.bf16.mxu0 0
    %1291 = vmatpush2.bf16.msra.mxu0 0
    %1292 = vmatprep.subr.bf16.mxu0 0
    %1293 = vmatpush2.bf16.msra.mxu0 0
    %1294 = vmatprep.subr.bf16.mxu0 0
    %1295 = vmatpush2.bf16.msra.mxu0 0
    %1296 = vmatprep.subr.bf16.mxu0 0
    %1297 = vmatpush2.bf16.msra.mxu0 0
    %1298 = vmatprep.subr.bf16.mxu0 0
    %1299 = vmatpush2.bf16.msra.mxu0 0
    %1300 = vmatprep.subr.bf16.mxu0 0
    %1301 = vmatpush2.bf16.msra.mxu0 0
    %1302 = vmatprep.subr.bf16.mxu0 0
    %1303 = vmatpush2.bf16.msra.mxu0 0
    %1304 = vmatprep.subr.bf16.mxu0 0
    %1305 = vmatpush2.bf16.msra.mxu0 0
    %1306 = vmatprep.mubr.bf16.mxu0 0
    %1307 = vmatmul.mubr.bf16.gmra.mxu0 %v1272
    %v1308 = vpop.f32.mrf.mxu0
    %v1309 = vadd.f32 0.0, %v1308
    %v1310 = vpop.f32.mrf.mxu0
    %v1311 = vpop.f32.mrf.mxu0
    %v1312 = vpop.f32.mrf.mxu0
    %1313 = vdwg.mxu0
    %v1314 = vadd.f32 %v1269, %v1309
    %v1315 = vxor.u32 %v1314, 2147483648
    %v1316 = vmul.f32 %v1315, 1.442695
    %v1317 = vpow.pop %v1316
    %v1318 = vadd.f32 %v1317, 1.0
    %v1319 = vrcp.pop %v1318
    %v1320 = vmul.f32 1.0, %v1319
    %v1321 = vtanh.pop %v1314
    %v1324 = vunpack.c.l.s4 1983009808
    %v1325 = vunpack.c.0.s8 %v1324
    %v1326 = vlaneseq
    %v1327 = vshrl.u32 %v1326, 7
    %v1328 = vsub.s32 %v1325, %v1327
    %v1329 = vrot.slane %v1268, %v1328
    %1330 = vrot.lane.b32.xlu0 %v1329, 32
    %v1331 = vpop.permute.xlu0 %1330
    %v1333 = vmul.f32 %v1320, %v1331
    %1335 = vrot.lane.b32.xlu0 %v1321, 64
    %v1336 = vpop.permute.xlu0 %1335
    %v1338 = vmul.f32 %v1320, %v1336
    %1340 = vrot.lane.b32.xlu0 %v1338, 32
    %v1341 = vpop.permute.xlu0 %1340
    %v1343 = vadd.f32 %v1333, %v1341
    %v1344 = vtanh.pop %v1343
    %1346 = vrot.lane.b32.xlu0 %v1344, 64
    %v1347 = vpop.permute.xlu0 %1346
    %v1349 = vmul.f32 %v1320, %v1347
    %v1352 = vunpack.c.l.s4 1983009808
    %v1353 = vunpack.c.0.s8 %v1352
    %v1354 = vlaneseq
    %v1355 = vshrl.u32 %v1354, 7
    %v1356 = vsub.s32 %v1353, %v1355
    %v1357 = vrot.slane %v1349, %v1356
    %1358 = vrot.lane.b32.xlu0 %v1357, 32
    %v1359 = vpop.permute.xlu0 %1358
    %1361 = vst.msk [vmem:[#allocation2] sm:$0x3] %vm308, %v1359
    %v1364 = vunpack.c.l.s4 1983009808
    %v1365 = vunpack.c.0.s8 %v1364
    %v1366 = vlaneseq
    %v1367 = vshrl.u32 %v1366, 7
    %v1368 = vsub.s32 %v1365, %v1367
    %v1369 = vrot.slane %v1343, %v1368
    %1370 = vrot.lane.b32.xlu0 %v1369, 96
    %v1371 = vpop.permute.xlu0 %1370
    %1373 = vst.msk [vmem:[#allocation3] sm:$0x3] %vm308, %v1371
    %v1374 = vpack.c.bf16 %v1349, %v1349
    %v1377 = vunpack.c.l.s4 1966171168
    %v1378 = vunpack.c.0.s8 %v1377
    %v1379 = vlaneseq
    %v1380 = vshrl.u32 %v1379, 7
    %v1381 = vsub.s32 %v1378, %v1380
    %v1382 = vrot.slane %v1374, %v1381
    %v1384 = vunpack.c.l.s4 1966171168
    %v1385 = vunpack.c.0.s8 %v1384
    %v1386 = vlaneseq
    %v1387 = vshrl.u32 %v1386, 7
    %v1388 = vsub.s32 %v1385, %v1387
    %v1389 = vrot.slane %v1382, %v1388
    %1390 = vrot.lane.b32.xlu0 %v1389, 32
    %v1391 = vpop.permute.xlu0 %1390
    %s1393 = scalar_lea.vmem %s4, 4
    %1394 = vst.msk [vmem:[%s1393] sm:$0x1] %vm341, %v1391
    %v1395 = vld [vmem:[#allocation4] sm:$0x3]
    %v1396 = vld [vmem:[#allocation5] sm:$0x3]
    %v1397 = vunpack.c.l.bf16 %v1266
    %v1398 = vpack.c.bf16 %v1395, %v1395
    %v1400 = vsel %vm217, %v1398, 0
    %1402 = vmatprep.subr.bf16.mxu0 0
    %1403 = vmatpush1.bf16.msra.mxu0 0
    %1404 = vmatprep.subr.bf16.mxu0 0
    %1405 = vmatpush1.bf16.msra.mxu0 0
    %1406 = vmatprep.subr.bf16.mxu0 0
    %1407 = vmatpush1.bf16.msra.mxu0 0
    %1408 = vmatprep.subr.bf16.mxu0 0
    %1409 = vmatpush1.bf16.msra.mxu0 0
    %1410 = vmatprep.subr.bf16.mxu0 0
    %1411 = vmatpush1.bf16.msra.mxu0 0
    %1412 = vmatprep.subr.bf16.mxu0 0
    %1413 = vmatpush1.bf16.msra.mxu0 0
    %1414 = vmatprep.subr.bf16.mxu0 0
    %1415 = vmatpush1.bf16.msra.mxu0 %v356
    %1416 = vmatprep.subr.bf16.mxu0 0
    %1417 = vmatpush1.bf16.msra.mxu0 %v355
    %1418 = vmatprep.subr.bf16.mxu0 0
    %1419 = vmatpush2.bf16.msra.mxu0 0
    %1420 = vmatprep.subr.bf16.mxu0 0
    %1421 = vmatpush2.bf16.msra.mxu0 0
    %1422 = vmatprep.subr.bf16.mxu0 0
    %1423 = vmatpush2.bf16.msra.mxu0 0
    %1424 = vmatprep.subr.bf16.mxu0 0
    %1425 = vmatpush2.bf16.msra.mxu0 0
    %1426 = vmatprep.subr.bf16.mxu0 0
    %1427 = vmatpush2.bf16.msra.mxu0 0
    %1428 = vmatprep.subr.bf16.mxu0 0
    %1429 = vmatpush2.bf16.msra.mxu0 0
    %1430 = vmatprep.subr.bf16.mxu0 0
    %1431 = vmatpush2.bf16.msra.mxu0 0
    %1432 = vmatprep.subr.bf16.mxu0 0
    %1433 = vmatpush2.bf16.msra.mxu0 0
    %1434 = vmatprep.mubr.bf16.mxu0 0
    %1435 = vmatmul.mubr.bf16.gmra.mxu0 %v1400
    %v1436 = vpop.f32.mrf.mxu0
    %v1437 = vadd.f32 0.0, %v1436
    %v1438 = vpop.f32.mrf.mxu0
    %v1439 = vpop.f32.mrf.mxu0
    %v1440 = vpop.f32.mrf.mxu0
    %1441 = vdwg.mxu0
    %v1442 = vadd.f32 %v1397, %v1437
    %v1443 = vxor.u32 %v1442, 2147483648
    %v1444 = vmul.f32 %v1443, 1.442695
    %v1445 = vpow.pop %v1444
    %v1446 = vadd.f32 %v1445, 1.0
    %v1447 = vrcp.pop %v1446
    %v1448 = vmul.f32 1.0, %v1447
    %v1449 = vtanh.pop %v1442
    %v1452 = vunpack.c.l.s4 1983009808
    %v1453 = vunpack.c.0.s8 %v1452
    %v1454 = vlaneseq
    %v1455 = vshrl.u32 %v1454, 7
    %v1456 = vsub.s32 %v1453, %v1455
    %v1457 = vrot.slane %v1396, %v1456
    %1458 = vrot.lane.b32.xlu0 %v1457, 32
    %v1459 = vpop.permute.xlu0 %1458
    %v1461 = vmul.f32 %v1448, %v1459
    %1463 = vrot.lane.b32.xlu0 %v1449, 64
    %v1464 = vpop.permute.xlu0 %1463
    %v1466 = vmul.f32 %v1448, %v1464
    %1468 = vrot.lane.b32.xlu0 %v1466, 32
    %v1469 = vpop.permute.xlu0 %1468
    %v1471 = vadd.f32 %v1461, %v1469
    %v1472 = vtanh.pop %v1471
    %1474 = vrot.lane.b32.xlu0 %v1472, 64
    %v1475 = vpop.permute.xlu0 %1474
    %v1477 = vmul.f32 %v1448, %v1475
    %v1480 = vunpack.c.l.s4 1983009808
    %v1481 = vunpack.c.0.s8 %v1480
    %v1482 = vlaneseq
    %v1483 = vshrl.u32 %v1482, 7
    %v1484 = vsub.s32 %v1481, %v1483
    %v1485 = vrot.slane %v1477, %v1484
    %1486 = vrot.lane.b32.xlu0 %v1485, 32
    %v1487 = vpop.permute.xlu0 %1486
    %1489 = vst.msk [vmem:[#allocation4] sm:$0x3] %vm308, %v1487
    %v1492 = vunpack.c.l.s4 1983009808
    %v1493 = vunpack.c.0.s8 %v1492
    %v1494 = vlaneseq
    %v1495 = vshrl.u32 %v1494, 7
    %v1496 = vsub.s32 %v1493, %v1495
    %v1497 = vrot.slane %v1471, %v1496
    %1498 = vrot.lane.b32.xlu0 %v1497, 96
    %v1499 = vpop.permute.xlu0 %1498
    %1501 = vst.msk [vmem:[#allocation5] sm:$0x3] %vm308, %v1499
    %v1502 = vpack.c.bf16 %v1477, %v1477
    %v1505 = vunpack.c.l.s4 1966171168
    %v1506 = vunpack.c.0.s8 %v1505
    %v1507 = vlaneseq
    %v1508 = vshrl.u32 %v1507, 7
    %v1509 = vsub.s32 %v1506, %v1508
    %v1510 = vrot.slane %v1502, %v1509
    %v1512 = vunpack.c.l.s4 1966171168
    %v1513 = vunpack.c.0.s8 %v1512
    %v1514 = vlaneseq
    %v1515 = vshrl.u32 %v1514, 7
    %v1516 = vsub.s32 %v1513, %v1515
    %v1517 = vrot.slane %v1510, %v1516
    %1518 = vrot.lane.b32.xlu0 %v1517, 32
    %v1519 = vpop.permute.xlu0 %1518
    %s1521 = scalar_lea.vmem %s177, 3
    %1522 = vst.msk [vmem:[%s1521] sm:$0x1] %vm341, %v1519
    %s1523 = scalar_lea.vmem [#allocation6], 5
    %v1524 = vld [vmem:[%s1523] sm:$0x1]
    %s1525 = scalar_lea.vmem [#allocation7], 2
    %v1526 = vld [vmem:[%s1525] sm:$0x1]
    %v1527 = vld [vmem:[#allocation2] sm:$0x3]
    %v1528 = vld [vmem:[#allocation3] sm:$0x3]
    %v1529 = vunpack.c.l.bf16 %v1524
    %v1530 = vpack.c.bf16 %v1527, %v1527
    %v1532 = vsel %vm217, %v1530, 0
    %1534 = vmatprep.subr.bf16.mxu0 0
    %1535 = vmatpush1.bf16.msra.mxu0 0
    %1536 = vmatprep.subr.bf16.mxu0 0
    %1537 = vmatpush1.bf16.msra.mxu0 0
    %1538 = vmatprep.subr.bf16.mxu0 0
    %1539 = vmatpush1.bf16.msra.mxu0 0
    %1540 = vmatprep.subr.bf16.mxu0 0
    %1541 = vmatpush1.bf16.msra.mxu0 0
    %1542 = vmatprep.subr.bf16.mxu0 0
    %1543 = vmatpush1.bf16.msra.mxu0 0
    %1544 = vmatprep.subr.bf16.mxu0 0
    %1545 = vmatpush1.bf16.msra.mxu0 0
    %1546 = vmatprep.subr.bf16.mxu0 0
    %1547 = vmatpush1.bf16.msra.mxu0 %v214
    %1548 = vmatprep.subr.bf16.mxu0 0
    %1549 = vmatpush1.bf16.msra.mxu0 %v213
    %1550 = vmatprep.subr.bf16.mxu0 0
    %1551 = vmatpush2.bf16.msra.mxu0 0
    %1552 = vmatprep.subr.bf16.mxu0 0
    %1553 = vmatpush2.bf16.msra.mxu0 0
    %1554 = vmatprep.subr.bf16.mxu0 0
    %1555 = vmatpush2.bf16.msra.mxu0 0
    %1556 = vmatprep.subr.bf16.mxu0 0
    %1557 = vmatpush2.bf16.msra.mxu0 0
    %1558 = vmatprep.subr.bf16.mxu0 0
    %1559 = vmatpush2.bf16.msra.mxu0 0
    %1560 = vmatprep.subr.bf16.mxu0 0
    %1561 = vmatpush2.bf16.msra.mxu0 0
    %1562 = vmatprep.subr.bf16.mxu0 0
    %1563 = vmatpush2.bf16.msra.mxu0 0
    %1564 = vmatprep.subr.bf16.mxu0 0
    %1565 = vmatpush2.bf16.msra.mxu0 0
    %1566 = vmatprep.mubr.bf16.mxu0 0
    %1567 = vmatmul.mubr.bf16.gmra.mxu0 %v1532
    %v1568 = vpop.f32.mrf.mxu0
    %v1569 = vadd.f32 0.0, %v1568
    %v1570 = vpop.f32.mrf.mxu0
    %v1571 = vpop.f32.mrf.mxu0
    %v1572 = vpop.f32.mrf.mxu0
    %1573 = vdwg.mxu0
    %v1574 = vadd.f32 %v1529, %v1569
    %v1575 = vxor.u32 %v1574, 2147483648
    %v1576 = vmul.f32 %v1575, 1.442695
    %v1577 = vpow.pop %v1576
    %v1578 = vadd.f32 %v1577, 1.0
    %v1579 = vrcp.pop %v1578
    %v1580 = vmul.f32 1.0, %v1579
    %v1581 = vtanh.pop %v1574
    %v1584 = vunpack.c.l.s4 1983009808
    %v1585 = vunpack.c.0.s8 %v1584
    %v1586 = vlaneseq
    %v1587 = vshrl.u32 %v1586, 7
    %v1588 = vsub.s32 %v1585, %v1587
    %v1589 = vrot.slane %v1528, %v1588
    %1590 = vrot.lane.b32.xlu0 %v1589, 32
    %v1591 = vpop.permute.xlu0 %1590
    %v1593 = vmul.f32 %v1580, %v1591
    %1595 = vrot.lane.b32.xlu0 %v1581, 64
    %v1596 = vpop.permute.xlu0 %1595
    %v1598 = vmul.f32 %v1580, %v1596
    %1600 = vrot.lane.b32.xlu0 %v1598, 32
    %v1601 = vpop.permute.xlu0 %1600
    %v1603 = vadd.f32 %v1593, %v1601
    %v1604 = vtanh.pop %v1603
    %1606 = vrot.lane.b32.xlu0 %v1604, 64
    %v1607 = vpop.permute.xlu0 %1606
    %v1609 = vmul.f32 %v1580, %v1607
    %v1612 = vunpack.c.l.s4 1983009808
    %v1613 = vunpack.c.0.s8 %v1612
    %v1614 = vlaneseq
    %v1615 = vshrl.u32 %v1614, 7
    %v1616 = vsub.s32 %v1613, %v1615
    %v1617 = vrot.slane %v1609, %v1616
    %1618 = vrot.lane.b32.xlu0 %v1617, 32
    %v1619 = vpop.permute.xlu0 %1618
    %1621 = vst.msk [vmem:[#allocation2] sm:$0x3] %vm308, %v1619
    %v1624 = vunpack.c.l.s4 1983009808
    %v1625 = vunpack.c.0.s8 %v1624
    %v1626 = vlaneseq
    %v1627 = vshrl.u32 %v1626, 7
    %v1628 = vsub.s32 %v1625, %v1627
    %v1629 = vrot.slane %v1603, %v1628
    %1630 = vrot.lane.b32.xlu0 %v1629, 96
    %v1631 = vpop.permute.xlu0 %1630
    %1633 = vst.msk [vmem:[#allocation3] sm:$0x3] %vm308, %v1631
    %v1634 = vpack.c.bf16 %v1609, %v1609
    %v1637 = vunpack.c.l.s4 1966171168
    %v1638 = vunpack.c.0.s8 %v1637
    %v1639 = vlaneseq
    %v1640 = vshrl.u32 %v1639, 7
    %v1641 = vsub.s32 %v1638, %v1640
    %v1642 = vrot.slane %v1634, %v1641
    %v1644 = vunpack.c.l.s4 1966171168
    %v1645 = vunpack.c.0.s8 %v1644
    %v1646 = vlaneseq
    %v1647 = vshrl.u32 %v1646, 7
    %v1648 = vsub.s32 %v1645, %v1647
    %v1649 = vrot.slane %v1642, %v1648
    %1650 = vrot.lane.b32.xlu0 %v1649, 32
    %v1651 = vpop.permute.xlu0 %1650
    %s1653 = scalar_lea.vmem %s4, 5
    %1654 = vst.msk [vmem:[%s1653] sm:$0x1] %vm341, %v1651
    %v1655 = vld [vmem:[#allocation4] sm:$0x3]
    %v1656 = vld [vmem:[#allocation5] sm:$0x3]
    %v1657 = vunpack.c.l.bf16 %v1526
    %v1658 = vpack.c.bf16 %v1655, %v1655
    %v1660 = vsel %vm217, %v1658, 0
    %1662 = vmatprep.subr.bf16.mxu0 0
    %1663 = vmatpush1.bf16.msra.mxu0 0
    %1664 = vmatprep.subr.bf16.mxu0 0
    %1665 = vmatpush1.bf16.msra.mxu0 0
    %1666 = vmatprep.subr.bf16.mxu0 0
    %1667 = vmatpush1.bf16.msra.mxu0 0
    %1668 = vmatprep.subr.bf16.mxu0 0
    %1669 = vmatpush1.bf16.msra.mxu0 0
    %1670 = vmatprep.subr.bf16.mxu0 0
    %1671 = vmatpush1.bf16.msra.mxu0 0
    %1672 = vmatprep.subr.bf16.mxu0 0
    %1673 = vmatpush1.bf16.msra.mxu0 0
    %1674 = vmatprep.subr.bf16.mxu0 0
    %1675 = vmatpush1.bf16.msra.mxu0 %v356
    %1676 = vmatprep.subr.bf16.mxu0 0
    %1677 = vmatpush1.bf16.msra.mxu0 %v355
    %1678 = vmatprep.subr.bf16.mxu0 0
    %1679 = vmatpush2.bf16.msra.mxu0 0
    %1680 = vmatprep.subr.bf16.mxu0 0
    %1681 = vmatpush2.bf16.msra.mxu0 0
    %1682 = vmatprep.subr.bf16.mxu0 0
    %1683 = vmatpush2.bf16.msra.mxu0 0
    %1684 = vmatprep.subr.bf16.mxu0 0
    %1685 = vmatpush2.bf16.msra.mxu0 0
    %1686 = vmatprep.subr.bf16.mxu0 0
    %1687 = vmatpush2.bf16.msra.mxu0 0
    %1688 = vmatprep.subr.bf16.mxu0 0
    %1689 = vmatpush2.bf16.msra.mxu0 0
    %1690 = vmatprep.subr.bf16.mxu0 0
    %1691 = vmatpush2.bf16.msra.mxu0 0
    %1692 = vmatprep.subr.bf16.mxu0 0
    %1693 = vmatpush2.bf16.msra.mxu0 0
    %1694 = vmatprep.mubr.bf16.mxu0 0
    %1695 = vmatmul.mubr.bf16.gmra.mxu0 %v1660
    %v1696 = vpop.f32.mrf.mxu0
    %v1697 = vadd.f32 0.0, %v1696
    %v1698 = vpop.f32.mrf.mxu0
    %v1699 = vpop.f32.mrf.mxu0
    %v1700 = vpop.f32.mrf.mxu0
    %1701 = vdwg.mxu0
    %v1702 = vadd.f32 %v1657, %v1697
    %v1703 = vxor.u32 %v1702, 2147483648
    %v1704 = vmul.f32 %v1703, 1.442695
    %v1705 = vpow.pop %v1704
    %v1706 = vadd.f32 %v1705, 1.0
    %v1707 = vrcp.pop %v1706
    %v1708 = vmul.f32 1.0, %v1707
    %v1709 = vtanh.pop %v1702
    %v1712 = vunpack.c.l.s4 1983009808
    %v1713 = vunpack.c.0.s8 %v1712
    %v1714 = vlaneseq
    %v1715 = vshrl.u32 %v1714, 7
    %v1716 = vsub.s32 %v1713, %v1715
    %v1717 = vrot.slane %v1656, %v1716
    %1718 = vrot.lane.b32.xlu0 %v1717, 32
    %v1719 = vpop.permute.xlu0 %1718
    %v1721 = vmul.f32 %v1708, %v1719
    %1723 = vrot.lane.b32.xlu0 %v1709, 64
    %v1724 = vpop.permute.xlu0 %1723
    %v1726 = vmul.f32 %v1708, %v1724
    %1728 = vrot.lane.b32.xlu0 %v1726, 32
    %v1729 = vpop.permute.xlu0 %1728
    %v1731 = vadd.f32 %v1721, %v1729
    %v1732 = vtanh.pop %v1731
    %1734 = vrot.lane.b32.xlu0 %v1732, 64
    %v1735 = vpop.permute.xlu0 %1734
    %v1737 = vmul.f32 %v1708, %v1735
    %v1740 = vunpack.c.l.s4 1983009808
    %v1741 = vunpack.c.0.s8 %v1740
    %v1742 = vlaneseq
    %v1743 = vshrl.u32 %v1742, 7
    %v1744 = vsub.s32 %v1741, %v1743
    %v1745 = vrot.slane %v1737, %v1744
    %1746 = vrot.lane.b32.xlu0 %v1745, 32
    %v1747 = vpop.permute.xlu0 %1746
    %1749 = vst.msk [vmem:[#allocation4] sm:$0x3] %vm308, %v1747
    %v1752 = vunpack.c.l.s4 1983009808
    %v1753 = vunpack.c.0.s8 %v1752
    %v1754 = vlaneseq
    %v1755 = vshrl.u32 %v1754, 7
    %v1756 = vsub.s32 %v1753, %v1755
    %v1757 = vrot.slane %v1731, %v1756
    %1758 = vrot.lane.b32.xlu0 %v1757, 96
    %v1759 = vpop.permute.xlu0 %1758
    %1761 = vst.msk [vmem:[#allocation5] sm:$0x3] %vm308, %v1759
    %v1762 = vpack.c.bf16 %v1737, %v1737
    %v1765 = vunpack.c.l.s4 1966171168
    %v1766 = vunpack.c.0.s8 %v1765
    %v1767 = vlaneseq
    %v1768 = vshrl.u32 %v1767, 7
    %v1769 = vsub.s32 %v1766, %v1768
    %v1770 = vrot.slane %v1762, %v1769
    %v1772 = vunpack.c.l.s4 1966171168
    %v1773 = vunpack.c.0.s8 %v1772
    %v1774 = vlaneseq
    %v1775 = vshrl.u32 %v1774, 7
    %v1776 = vsub.s32 %v1773, %v1775
    %v1777 = vrot.slane %v1770, %v1776
    %1778 = vrot.lane.b32.xlu0 %v1777, 32
    %v1779 = vpop.permute.xlu0 %1778
    %s1781 = scalar_lea.vmem %s177, 2
    %1782 = vst.msk [vmem:[%s1781] sm:$0x1] %vm341, %v1779
    %s1783 = scalar_lea.vmem [#allocation6], 6
    %v1784 = vld [vmem:[%s1783] sm:$0x1]
    %s1785 = scalar_lea.vmem [#allocation7], 1
    %v1786 = vld [vmem:[%s1785] sm:$0x1]
    %v1787 = vld [vmem:[#allocation2] sm:$0x3]
    %v1788 = vld [vmem:[#allocation3] sm:$0x3]
    %v1789 = vunpack.c.l.bf16 %v1784
    %v1790 = vpack.c.bf16 %v1787, %v1787
    %v1792 = vsel %vm217, %v1790, 0
    %1794 = vmatprep.subr.bf16.mxu0 0
    %1795 = vmatpush1.bf16.msra.mxu0 0
    %1796 = vmatprep.subr.bf16.mxu0 0
    %1797 = vmatpush1.bf16.msra.mxu0 0
    %1798 = vmatprep.subr.bf16.mxu0 0
    %1799 = vmatpush1.bf16.msra.mxu0 0
    %1800 = vmatprep.subr.bf16.mxu0 0
    %1801 = vmatpush1.bf16.msra.mxu0 0
    %1802 = vmatprep.subr.bf16.mxu0 0
    %1803 = vmatpush1.bf16.msra.mxu0 0
    %1804 = vmatprep.subr.bf16.mxu0 0
    %1805 = vmatpush1.bf16.msra.mxu0 0
    %1806 = vmatprep.subr.bf16.mxu0 0
    %1807 = vmatpush1.bf16.msra.mxu0 %v214
    %1808 = vmatprep.subr.bf16.mxu0 0
    %1809 = vmatpush1.bf16.msra.mxu0 %v213
    %1810 = vmatprep.subr.bf16.mxu0 0
    %1811 = vmatpush2.bf16.msra.mxu0 0
    %1812 = vmatprep.subr.bf16.mxu0 0
    %1813 = vmatpush2.bf16.msra.mxu0 0
    %1814 = vmatprep.subr.bf16.mxu0 0
    %1815 = vmatpush2.bf16.msra.mxu0 0
    %1816 = vmatprep.subr.bf16.mxu0 0
    %1817 = vmatpush2.bf16.msra.mxu0 0
    %1818 = vmatprep.subr.bf16.mxu0 0
    %1819 = vmatpush2.bf16.msra.mxu0 0
    %1820 = vmatprep.subr.bf16.mxu0 0
    %1821 = vmatpush2.bf16.msra.mxu0 0
    %1822 = vmatprep.subr.bf16.mxu0 0
    %1823 = vmatpush2.bf16.msra.mxu0 0
    %1824 = vmatprep.subr.bf16.mxu0 0
    %1825 = vmatpush2.bf16.msra.mxu0 0
    %1826 = vmatprep.mubr.bf16.mxu0 0
    %1827 = vmatmul.mubr.bf16.gmra.mxu0 %v1792
    %v1828 = vpop.f32.mrf.mxu0
    %v1829 = vadd.f32 0.0, %v1828
    %v1830 = vpop.f32.mrf.mxu0
    %v1831 = vpop.f32.mrf.mxu0
    %v1832 = vpop.f32.mrf.mxu0
    %1833 = vdwg.mxu0
    %v1834 = vadd.f32 %v1789, %v1829
    %v1835 = vxor.u32 %v1834, 2147483648
    %v1836 = vmul.f32 %v1835, 1.442695
    %v1837 = vpow.pop %v1836
    %v1838 = vadd.f32 %v1837, 1.0
    %v1839 = vrcp.pop %v1838
    %v1840 = vmul.f32 1.0, %v1839
    %v1841 = vtanh.pop %v1834
    %v1844 = vunpack.c.l.s4 1983009808
    %v1845 = vunpack.c.0.s8 %v1844
    %v1846 = vlaneseq
    %v1847 = vshrl.u32 %v1846, 7
    %v1848 = vsub.s32 %v1845, %v1847
    %v1849 = vrot.slane %v1788, %v1848
    %1850 = vrot.lane.b32.xlu0 %v1849, 32
    %v1851 = vpop.permute.xlu0 %1850
    %v1853 = vmul.f32 %v1840, %v1851
    %1855 = vrot.lane.b32.xlu0 %v1841, 64
    %v1856 = vpop.permute.xlu0 %1855
    %v1858 = vmul.f32 %v1840, %v1856
    %1860 = vrot.lane.b32.xlu0 %v1858, 32
    %v1861 = vpop.permute.xlu0 %1860
    %v1863 = vadd.f32 %v1853, %v1861
    %v1864 = vtanh.pop %v1863
    %1866 = vrot.lane.b32.xlu0 %v1864, 64
    %v1867 = vpop.permute.xlu0 %1866
    %v1869 = vmul.f32 %v1840, %v1867
    %v1872 = vunpack.c.l.s4 1983009808
    %v1873 = vunpack.c.0.s8 %v1872
    %v1874 = vlaneseq
    %v1875 = vshrl.u32 %v1874, 7
    %v1876 = vsub.s32 %v1873, %v1875
    %v1877 = vrot.slane %v1869, %v1876
    %1878 = vrot.lane.b32.xlu0 %v1877, 32
    %v1879 = vpop.permute.xlu0 %1878
    %1881 = vst.msk [vmem:[#allocation2] sm:$0x3] %vm308, %v1879
    %v1884 = vunpack.c.l.s4 1983009808
    %v1885 = vunpack.c.0.s8 %v1884
    %v1886 = vlaneseq
    %v1887 = vshrl.u32 %v1886, 7
    %v1888 = vsub.s32 %v1885, %v1887
    %v1889 = vrot.slane %v1863, %v1888
    %1890 = vrot.lane.b32.xlu0 %v1889, 96
    %v1891 = vpop.permute.xlu0 %1890
    %1893 = vst.msk [vmem:[#allocation3] sm:$0x3] %vm308, %v1891
    %v1894 = vpack.c.bf16 %v1869, %v1869
    %v1897 = vunpack.c.l.s4 1966171168
    %v1898 = vunpack.c.0.s8 %v1897
    %v1899 = vlaneseq
    %v1900 = vshrl.u32 %v1899, 7
    %v1901 = vsub.s32 %v1898, %v1900
    %v1902 = vrot.slane %v1894, %v1901
    %v1904 = vunpack.c.l.s4 1966171168
    %v1905 = vunpack.c.0.s8 %v1904
    %v1906 = vlaneseq
    %v1907 = vshrl.u32 %v1906, 7
    %v1908 = vsub.s32 %v1905, %v1907
    %v1909 = vrot.slane %v1902, %v1908
    %1910 = vrot.lane.b32.xlu0 %v1909, 32
    %v1911 = vpop.permute.xlu0 %1910
    %s1913 = scalar_lea.vmem %s4, 6
    %1914 = vst.msk [vmem:[%s1913] sm:$0x1] %vm341, %v1911
    %v1915 = vld [vmem:[#allocation4] sm:$0x3]
    %v1916 = vld [vmem:[#allocation5] sm:$0x3]
    %v1917 = vunpack.c.l.bf16 %v1786
    %v1918 = vpack.c.bf16 %v1915, %v1915
    %v1920 = vsel %vm217, %v1918, 0
    %1922 = vmatprep.subr.bf16.mxu0 0
    %1923 = vmatpush1.bf16.msra.mxu0 0
    %1924 = vmatprep.subr.bf16.mxu0 0
    %1925 = vmatpush1.bf16.msra.mxu0 0
    %1926 = vmatprep.subr.bf16.mxu0 0
    %1927 = vmatpush1.bf16.msra.mxu0 0
    %1928 = vmatprep.subr.bf16.mxu0 0
    %1929 = vmatpush1.bf16.msra.mxu0 0
    %1930 = vmatprep.subr.bf16.mxu0 0
    %1931 = vmatpush1.bf16.msra.mxu0 0
    %1932 = vmatprep.subr.bf16.mxu0 0
    %1933 = vmatpush1.bf16.msra.mxu0 0
    %1934 = vmatprep.subr.bf16.mxu0 0
    %1935 = vmatpush1.bf16.msra.mxu0 %v356
    %1936 = vmatprep.subr.bf16.mxu0 0
    %1937 = vmatpush1.bf16.msra.mxu0 %v355
    %1938 = vmatprep.subr.bf16.mxu0 0
    %1939 = vmatpush2.bf16.msra.mxu0 0
    %1940 = vmatprep.subr.bf16.mxu0 0
    %1941 = vmatpush2.bf16.msra.mxu0 0
    %1942 = vmatprep.subr.bf16.mxu0 0
    %1943 = vmatpush2.bf16.msra.mxu0 0
    %1944 = vmatprep.subr.bf16.mxu0 0
    %1945 = vmatpush2.bf16.msra.mxu0 0
    %1946 = vmatprep.subr.bf16.mxu0 0
    %1947 = vmatpush2.bf16.msra.mxu0 0
    %1948 = vmatprep.subr.bf16.mxu0 0
    %1949 = vmatpush2.bf16.msra.mxu0 0
    %1950 = vmatprep.subr.bf16.mxu0 0
    %1951 = vmatpush2.bf16.msra.mxu0 0
    %1952 = vmatprep.subr.bf16.mxu0 0
    %1953 = vmatpush2.bf16.msra.mxu0 0
    %1954 = vmatprep.mubr.bf16.mxu0 0
    %1955 = vmatmul.mubr.bf16.gmra.mxu0 %v1920
    %v1956 = vpop.f32.mrf.mxu0
    %v1957 = vadd.f32 0.0, %v1956
    %v1958 = vpop.f32.mrf.mxu0
    %v1959 = vpop.f32.mrf.mxu0
    %v1960 = vpop.f32.mrf.mxu0
    %1961 = vdwg.mxu0
    %v1962 = vadd.f32 %v1917, %v1957
    %v1963 = vxor.u32 %v1962, 2147483648
    %v1964 = vmul.f32 %v1963, 1.442695
    %v1965 = vpow.pop %v1964
    %v1966 = vadd.f32 %v1965, 1.0
    %v1967 = vrcp.pop %v1966
    %v1968 = vmul.f32 1.0, %v1967
    %v1969 = vtanh.pop %v1962
    %v1972 = vunpack.c.l.s4 1983009808
    %v1973 = vunpack.c.0.s8 %v1972
    %v1974 = vlaneseq
    %v1975 = vshrl.u32 %v1974, 7
    %v1976 = vsub.s32 %v1973, %v1975
    %v1977 = vrot.slane %v1916, %v1976
    %1978 = vrot.lane.b32.xlu0 %v1977, 32
    %v1979 = vpop.permute.xlu0 %1978
    %v1981 = vmul.f32 %v1968, %v1979
    %1983 = vrot.lane.b32.xlu0 %v1969, 64
    %v1984 = vpop.permute.xlu0 %1983
    %v1986 = vmul.f32 %v1968, %v1984
    %1988 = vrot.lane.b32.xlu0 %v1986, 32
    %v1989 = vpop.permute.xlu0 %1988
    %v1991 = vadd.f32 %v1981, %v1989
    %v1992 = vtanh.pop %v1991
    %1994 = vrot.lane.b32.xlu0 %v1992, 64
    %v1995 = vpop.permute.xlu0 %1994
    %v1997 = vmul.f32 %v1968, %v1995
    %v2000 = vunpack.c.l.s4 1983009808
    %v2001 = vunpack.c.0.s8 %v2000
    %v2002 = vlaneseq
    %v2003 = vshrl.u32 %v2002, 7
    %v2004 = vsub.s32 %v2001, %v2003
    %v2005 = vrot.slane %v1997, %v2004
    %2006 = vrot.lane.b32.xlu0 %v2005, 32
    %v2007 = vpop.permute.xlu0 %2006
    %2009 = vst.msk [vmem:[#allocation4] sm:$0x3] %vm308, %v2007
    %v2012 = vunpack.c.l.s4 1983009808
    %v2013 = vunpack.c.0.s8 %v2012
    %v2014 = vlaneseq
    %v2015 = vshrl.u32 %v2014, 7
    %v2016 = vsub.s32 %v2013, %v2015
    %v2017 = vrot.slane %v1991, %v2016
    %2018 = vrot.lane.b32.xlu0 %v2017, 96
    %v2019 = vpop.permute.xlu0 %2018
    %2021 = vst.msk [vmem:[#allocation5] sm:$0x3] %vm308, %v2019
    %v2022 = vpack.c.bf16 %v1997, %v1997
    %v2025 = vunpack.c.l.s4 1966171168
    %v2026 = vunpack.c.0.s8 %v2025
    %v2027 = vlaneseq
    %v2028 = vshrl.u32 %v2027, 7
    %v2029 = vsub.s32 %v2026, %v2028
    %v2030 = vrot.slane %v2022, %v2029
    %v2032 = vunpack.c.l.s4 1966171168
    %v2033 = vunpack.c.0.s8 %v2032
    %v2034 = vlaneseq
    %v2035 = vshrl.u32 %v2034, 7
    %v2036 = vsub.s32 %v2033, %v2035
    %v2037 = vrot.slane %v2030, %v2036
    %2038 = vrot.lane.b32.xlu0 %v2037, 32
    %v2039 = vpop.permute.xlu0 %2038
    %s2041 = scalar_lea.vmem %s177, 1
    %2042 = vst.msk [vmem:[%s2041] sm:$0x1] %vm341, %v2039
    %s2043 = scalar_lea.vmem [#allocation6], 7
    %v2044 = vld [vmem:[%s2043] sm:$0x1]
    %v2045 = vld [vmem:[#allocation7] sm:$0x1]
    %v2046 = vld [vmem:[#allocation2] sm:$0x3]
    %v2047 = vld [vmem:[#allocation3] sm:$0x3]
    %v2048 = vunpack.c.l.bf16 %v2044
    %v2049 = vpack.c.bf16 %v2046, %v2046
    %v2051 = vsel %vm217, %v2049, 0
    %2053 = vmatprep.subr.bf16.mxu0 0
    %2054 = vmatpush1.bf16.msra.mxu0 0
    %2055 = vmatprep.subr.bf16.mxu0 0
    %2056 = vmatpush1.bf16.msra.mxu0 0
    %2057 = vmatprep.subr.bf16.mxu0 0
    %2058 = vmatpush1.bf16.msra.mxu0 0
    %2059 = vmatprep.subr.bf16.mxu0 0
    %2060 = vmatpush1.bf16.msra.mxu0 0
    %2061 = vmatprep.subr.bf16.mxu0 0
    %2062 = vmatpush1.bf16.msra.mxu0 0
    %2063 = vmatprep.subr.bf16.mxu0 0
    %2064 = vmatpush1.bf16.msra.mxu0 0
    %2065 = vmatprep.subr.bf16.mxu0 0
    %2066 = vmatpush1.bf16.msra.mxu0 %v214
    %2067 = vmatprep.subr.bf16.mxu0 0
    %2068 = vmatpush1.bf16.msra.mxu0 %v213
    %2069 = vmatprep.subr.bf16.mxu0 0
    %2070 = vmatpush2.bf16.msra.mxu0 0
    %2071 = vmatprep.subr.bf16.mxu0 0
    %2072 = vmatpush2.bf16.msra.mxu0 0
    %2073 = vmatprep.subr.bf16.mxu0 0
    %2074 = vmatpush2.bf16.msra.mxu0 0
    %2075 = vmatprep.subr.bf16.mxu0 0
    %2076 = vmatpush2.bf16.msra.mxu0 0
    %2077 = vmatprep.subr.bf16.mxu0 0
    %2078 = vmatpush2.bf16.msra.mxu0 0
    %2079 = vmatprep.subr.bf16.mxu0 0
    %2080 = vmatpush2.bf16.msra.mxu0 0
    %2081 = vmatprep.subr.bf16.mxu0 0
    %2082 = vmatpush2.bf16.msra.mxu0 0
    %2083 = vmatprep.subr.bf16.mxu0 0
    %2084 = vmatpush2.bf16.msra.mxu0 0
    %2085 = vmatprep.mubr.bf16.mxu0 0
    %2086 = vmatmul.mubr.bf16.gmra.mxu0 %v2051
    %v2087 = vpop.f32.mrf.mxu0
    %v2088 = vadd.f32 0.0, %v2087
    %v2089 = vpop.f32.mrf.mxu0
    %v2090 = vpop.f32.mrf.mxu0
    %v2091 = vpop.f32.mrf.mxu0
    %2092 = vdwg.mxu0
    %v2093 = vadd.f32 %v2048, %v2088
    %v2094 = vxor.u32 %v2093, 2147483648
    %v2095 = vmul.f32 %v2094, 1.442695
    %v2096 = vpow.pop %v2095
    %v2097 = vadd.f32 %v2096, 1.0
    %v2098 = vrcp.pop %v2097
    %v2099 = vmul.f32 1.0, %v2098
    %v2100 = vtanh.pop %v2093
    %v2103 = vunpack.c.l.s4 1983009808
    %v2104 = vunpack.c.0.s8 %v2103
    %v2105 = vlaneseq
    %v2106 = vshrl.u32 %v2105, 7
    %v2107 = vsub.s32 %v2104, %v2106
    %v2108 = vrot.slane %v2047, %v2107
    %2109 = vrot.lane.b32.xlu0 %v2108, 32
    %v2110 = vpop.permute.xlu0 %2109
    %v2112 = vmul.f32 %v2099, %v2110
    %2114 = vrot.lane.b32.xlu0 %v2100, 64
    %v2115 = vpop.permute.xlu0 %2114
    %v2117 = vmul.f32 %v2099, %v2115
    %2119 = vrot.lane.b32.xlu0 %v2117, 32
    %v2120 = vpop.permute.xlu0 %2119
    %v2122 = vadd.f32 %v2112, %v2120
    %v2123 = vtanh.pop %v2122
    %2125 = vrot.lane.b32.xlu0 %v2123, 64
    %v2126 = vpop.permute.xlu0 %2125
    %v2128 = vmul.f32 %v2099, %v2126
    %v2131 = vunpack.c.l.s4 1983009808
    %v2132 = vunpack.c.0.s8 %v2131
    %v2133 = vlaneseq
    %v2134 = vshrl.u32 %v2133, 7
    %v2135 = vsub.s32 %v2132, %v2134
    %v2136 = vrot.slane %v2128, %v2135
    %2137 = vrot.lane.b32.xlu0 %v2136, 32
    %v2138 = vpop.permute.xlu0 %2137
    %2140 = vst.msk [vmem:[#allocation2] sm:$0x3] %vm308, %v2138
    %v2143 = vunpack.c.l.s4 1983009808
    %v2144 = vunpack.c.0.s8 %v2143
    %v2145 = vlaneseq
    %v2146 = vshrl.u32 %v2145, 7
    %v2147 = vsub.s32 %v2144, %v2146
    %v2148 = vrot.slane %v2122, %v2147
    %2149 = vrot.lane.b32.xlu0 %v2148, 96
    %v2150 = vpop.permute.xlu0 %2149
    %2152 = vst.msk [vmem:[#allocation3] sm:$0x3] %vm308, %v2150
    %v2153 = vpack.c.bf16 %v2128, %v2128
    %v2156 = vunpack.c.l.s4 1966171168
    %v2157 = vunpack.c.0.s8 %v2156
    %v2158 = vlaneseq
    %v2159 = vshrl.u32 %v2158, 7
    %v2160 = vsub.s32 %v2157, %v2159
    %v2161 = vrot.slane %v2153, %v2160
    %v2163 = vunpack.c.l.s4 1966171168
    %v2164 = vunpack.c.0.s8 %v2163
    %v2165 = vlaneseq
    %v2166 = vshrl.u32 %v2165, 7
    %v2167 = vsub.s32 %v2164, %v2166
    %v2168 = vrot.slane %v2161, %v2167
    %2169 = vrot.lane.b32.xlu0 %v2168, 32
    %v2170 = vpop.permute.xlu0 %2169
    %s2172 = scalar_lea.vmem %s4, 7
    %2173 = vst.msk [vmem:[%s2172] sm:$0x1] %vm341, %v2170
    %v2174 = vld [vmem:[#allocation4] sm:$0x3]
    %v2175 = vld [vmem:[#allocation5] sm:$0x3]
    %v2176 = vunpack.c.l.bf16 %v2045
    %v2177 = vpack.c.bf16 %v2174, %v2174
    %v2179 = vsel %vm217, %v2177, 0
    %2181 = vmatprep.subr.bf16.mxu0 0
    %2182 = vmatpush1.bf16.msra.mxu0 0
    %2183 = vmatprep.subr.bf16.mxu0 0
    %2184 = vmatpush1.bf16.msra.mxu0 0
    %2185 = vmatprep.subr.bf16.mxu0 0
    %2186 = vmatpush1.bf16.msra.mxu0 0
    %2187 = vmatprep.subr.bf16.mxu0 0
    %2188 = vmatpush1.bf16.msra.mxu0 0
    %2189 = vmatprep.subr.bf16.mxu0 0
    %2190 = vmatpush1.bf16.msra.mxu0 0
    %2191 = vmatprep.subr.bf16.mxu0 0
    %2192 = vmatpush1.bf16.msra.mxu0 0
    %2193 = vmatprep.subr.bf16.mxu0 0
    %2194 = vmatpush1.bf16.msra.mxu0 %v356
    %2195 = vmatprep.subr.bf16.mxu0 0
    %2196 = vmatpush1.bf16.msra.mxu0 %v355
    %2197 = vmatprep.subr.bf16.mxu0 0
    %2198 = vmatpush2.bf16.msra.mxu0 0
    %2199 = vmatprep.subr.bf16.mxu0 0
    %2200 = vmatpush2.bf16.msra.mxu0 0
    %2201 = vmatprep.subr.bf16.mxu0 0
    %2202 = vmatpush2.bf16.msra.mxu0 0
    %2203 = vmatprep.subr.bf16.mxu0 0
    %2204 = vmatpush2.bf16.msra.mxu0 0
    %2205 = vmatprep.subr.bf16.mxu0 0
    %2206 = vmatpush2.bf16.msra.mxu0 0
    %2207 = vmatprep.subr.bf16.mxu0 0
    %2208 = vmatpush2.bf16.msra.mxu0 0
    %2209 = vmatprep.subr.bf16.mxu0 0
    %2210 = vmatpush2.bf16.msra.mxu0 0
    %2211 = vmatprep.subr.bf16.mxu0 0
    %2212 = vmatpush2.bf16.msra.mxu0 0
    %2213 = vmatprep.mubr.bf16.mxu0 0
    %2214 = vmatmul.mubr.bf16.gmra.mxu0 %v2179
    %v2215 = vpop.f32.mrf.mxu0
    %v2216 = vadd.f32 0.0, %v2215
    %v2217 = vpop.f32.mrf.mxu0
    %v2218 = vpop.f32.mrf.mxu0
    %v2219 = vpop.f32.mrf.mxu0
    %2220 = vdwg.mxu0
    %v2221 = vadd.f32 %v2176, %v2216
    %v2222 = vxor.u32 %v2221, 2147483648
    %v2223 = vmul.f32 %v2222, 1.442695
    %v2224 = vpow.pop %v2223
    %v2225 = vadd.f32 %v2224, 1.0
    %v2226 = vrcp.pop %v2225
    %v2227 = vmul.f32 1.0, %v2226
    %v2228 = vtanh.pop %v2221
    %v2231 = vunpack.c.l.s4 1983009808
    %v2232 = vunpack.c.0.s8 %v2231
    %v2233 = vlaneseq
    %v2234 = vshrl.u32 %v2233, 7
    %v2235 = vsub.s32 %v2232, %v2234
    %v2236 = vrot.slane %v2175, %v2235
    %2237 = vrot.lane.b32.xlu0 %v2236, 32
    %v2238 = vpop.permute.xlu0 %2237
    %v2240 = vmul.f32 %v2227, %v2238
    %2242 = vrot.lane.b32.xlu0 %v2228, 64
    %v2243 = vpop.permute.xlu0 %2242
    %v2245 = vmul.f32 %v2227, %v2243
    %2247 = vrot.lane.b32.xlu0 %v2245, 32
    %v2248 = vpop.permute.xlu0 %2247
    %v2250 = vadd.f32 %v2240, %v2248
    %v2251 = vtanh.pop %v2250
    %2253 = vrot.lane.b32.xlu0 %v2251, 64
    %v2254 = vpop.permute.xlu0 %2253
    %v2256 = vmul.f32 %v2227, %v2254
    %v2259 = vunpack.c.l.s4 1983009808
    %v2260 = vunpack.c.0.s8 %v2259
    %v2261 = vlaneseq
    %v2262 = vshrl.u32 %v2261, 7
    %v2263 = vsub.s32 %v2260, %v2262
    %v2264 = vrot.slane %v2256, %v2263
    %2265 = vrot.lane.b32.xlu0 %v2264, 32
    %v2266 = vpop.permute.xlu0 %2265
    %2268 = vst.msk [vmem:[#allocation4] sm:$0x3] %vm308, %v2266
    %v2271 = vunpack.c.l.s4 1983009808
    %v2272 = vunpack.c.0.s8 %v2271
    %v2273 = vlaneseq
    %v2274 = vshrl.u32 %v2273, 7
    %v2275 = vsub.s32 %v2272, %v2274
    %v2276 = vrot.slane %v2250, %v2275
    %2277 = vrot.lane.b32.xlu0 %v2276, 96
    %v2278 = vpop.permute.xlu0 %2277
    %2280 = vst.msk [vmem:[#allocation5] sm:$0x3] %vm308, %v2278
    %v2281 = vpack.c.bf16 %v2256, %v2256
    %v2284 = vunpack.c.l.s4 1966171168
    %v2285 = vunpack.c.0.s8 %v2284
    %v2286 = vlaneseq
    %v2287 = vshrl.u32 %v2286, 7
    %v2288 = vsub.s32 %v2285, %v2287
    %v2289 = vrot.slane %v2281, %v2288
    %v2291 = vunpack.c.l.s4 1966171168
    %v2292 = vunpack.c.0.s8 %v2291
    %v2293 = vlaneseq
    %v2294 = vshrl.u32 %v2293, 7
    %v2295 = vsub.s32 %v2292, %v2294
    %v2296 = vrot.slane %v2289, %v2295
    %2297 = vrot.lane.b32.xlu0 %v2296, 32
    %v2298 = vpop.permute.xlu0 %2297
    %2300 = vst.msk [vmem:[%s177] sm:$0x1] %vm341, %v2298
    %s2301 = ssub.s32 0, 0
    %s2302 = smul.u32 8, %s2301
    %p2303 = scmp.lt.s32.totalorder %s2302, 7
    %s2304 = scalar_select %p2303, %s2302, 7
    %s2305 = scalar_lea.vmem %s5, %s2304
    // Predicated region
    $region104: #{smodel_forward.9} parent=1 // pred_check
      _
    $region105: #{smodel_forward.9} parent=1 // pred_check_branch
      %2307 = sbr.rel (0) target = $region107
    $region106: #{smodel_forward.9} parent=1 // pred_region
      _
    $region107: #{smodel_forward.9} parent=1 // pred_fallthru
      _
    // Predicated region
    $region108: #{smodel_forward.9} parent=1 // pred_check
      _
    $region109: #{smodel_forward.9} parent=1 // pred_check_branch
      %2309 = sbr.rel (0) target = $region111
    $region110: #{smodel_forward.9} parent=1 // pred_region
      %s2310 = ssub.s32 0, 0
      %s2311 = smul.u32 8, %s2310
    $region111: #{smodel_forward.9} parent=1 // pred_fallthru
      _
    // Predicated region
    $region112: #{smodel_forward.9} parent=1 // pred_check
      _
    $region113: #{smodel_forward.9} parent=1 // pred_check_branch
      %2313 = sbr.rel (0) target = $region115
    $region114: #{smodel_forward.9} parent=1 // pred_region
      _
    $region115: #{smodel_forward.9} parent=1 // pred_fallthru
      _
    // Predicated region
    $region116: #{smodel_forward.9} parent=1 // pred_check
      _
    $region117: #{smodel_forward.9} parent=1 // pred_check_branch
      %2315 = sbr.rel (0) target = $region119
    $region118: #{smodel_forward.9} parent=1 // pred_region
      %s2316 = ssub.s32 0, 0
      %s2317 = smul.u32 8, %s2316
      %p2318 = scmp.lt.s32.totalorder %s2317, 7
      %s2319 = scalar_select %p2318, %s2317, 7
      %s2320 = scalar_lea.vmem %s5, %s2319
    $region119: #{smodel_forward.9} parent=1 // pred_fallthru
      _

</llo_original>
